<compile_context>
chip_gen: v7x
topology: tpu7x:2x2x1
jax: 0.10.0
libtpu: 0.0.40
codegen_flags: <defaults>
</compile_context>

<pallas_src>
import functools
import math

import jax
import jax.numpy as jnp
from jax.experimental import pallas as pl
from jax.experimental.pallas import tpu as pltpu


# ----------------------------------------------------------------------------
# BlockSpec helpers (grid is (B // Bblk,))
# ----------------------------------------------------------------------------
def _const_spec(shape):
    # grid-invariant weights/biases: full-array block, same block every step
    return pl.BlockSpec(shape, lambda b: (0,) * len(shape))


def _choose_bblk(B, T, target_rows=256):
    """Batch elements per grid step: fill MXU M-rows but keep >=2 'parallel'
    grid steps when possible (v7x megacore)."""
    if B <= 1:
        return max(B, 1)
    bblk = max(1, min(B // 2, max(1, target_rows // max(T, 1))))
    while B % bblk:
        bblk -= 1
    return bblk


# ----------------------------------------------------------------------------
# Fused forward kernel
# ----------------------------------------------------------------------------
def _add_layernorm(x, y, g, b, eps=1e-5):
    """layernorm(x + y) over the last dim, all fp32."""
    z = x + y
    mu = jnp.mean(z, axis=-1, keepdims=True)
    zc = z - mu
    var = jnp.mean(zc * zc, axis=-1, keepdims=True)
    return zc * jax.lax.rsqrt(var + eps) * g + b


def _fused_kernel(a_ref, v_ref,
                  audio_w_ref, audio_b_ref, wj_a_ref, wj_v_ref, joint_b_ref,
                  wqkv_ref, bqkv_ref, wo_ref, bo_ref, g1_ref, be1_ref,
                  w1_ref, b1_ref, w2_ref, b2_ref, g2_ref, be2_ref,
                  out_w_ref, out_b_ref, o_ref, *, num_layers, num_heads):
    bblk, T, _ = a_ref.shape
    d = v_ref.shape[-1]
    hd = d // num_heads
    rows = bblk * T

    # ---- front end: audioConv (k=4,s=4 as grouped matmul) + jointConv (split) ----
    a = a_ref[...].reshape(rows, -1).astype(jnp.bfloat16)      # (rows, 4*321) bf16 in VMEM
    v = v_ref[...].reshape(rows, d).astype(jnp.bfloat16)
    af = jnp.dot(a, audio_w_ref[...],
                 preferred_element_type=jnp.float32) + audio_b_ref[...]
    x = (jnp.dot(af.astype(jnp.bfloat16), wj_a_ref[...],
                 preferred_element_type=jnp.float32)
         + jnp.dot(v, wj_v_ref[...], preferred_element_type=jnp.float32)
         + joint_b_ref[...])                                   # (rows, d) fp32 residual

    # TODO(synk): PositionalEncoding is constructed in __init__ but never applied in
    # the reference forward(), so it is intentionally omitted. Dropout = identity (eval).

    # ---- transformer encoder layers (post-LN, relu FFN), statically unrolled ----
    for l in range(num_layers):
        # softmax scale is pre-folded into wqkv/bqkv (prep time)
        qkv = jnp.dot(x.astype(jnp.bfloat16), wqkv_ref[l],
                      preferred_element_type=jnp.float32) + bqkv_ref[l]
        qkv_b = qkv.astype(jnp.bfloat16).reshape(bblk, T, 3 * d)   # single cast
        wo_l = wo_ref[l]                                           # (H, hd, d) bf16

        attn = None
        for h in range(num_heads):          # heads are contiguous lane slices of qkv
            qh = qkv_b[:, :, h * hd:(h + 1) * hd]
            kh = qkv_b[:, :, d + h * hd:d + (h + 1) * hd]
            vh = qkv_b[:, :, 2 * d + h * hd:2 * d + (h + 1) * hd]
            s = jnp.einsum("bqd,bkd->bqk", qh, kh,
                           preferred_element_type=jnp.float32)     # (bblk, T, T)
            m = jnp.max(s, axis=-1, keepdims=True)
            p = jnp.exp(s - m)                                     # fp32 softmax
            p = p * pl.reciprocal(jnp.sum(p, axis=-1, keepdims=True), approx=True)
            pv = jnp.einsum("bqk,bkd->bqd", p.astype(jnp.bfloat16), vh,
                            preferred_element_type=jnp.float32)    # (bblk, T, hd)
            # concat-free head merge: fold directly into the output projection
            oh = jnp.dot(pv.reshape(rows, hd).astype(jnp.bfloat16), wo_l[h],
                         preferred_element_type=jnp.float32)       # (rows, d)
            attn = oh if attn is None else attn + oh
        attn = attn + bo_ref[l]
        x = _add_layernorm(x, attn, g1_ref[l], be1_ref[l])

        h1 = jnp.dot(x.astype(jnp.bfloat16), w1_ref[l],
                     preferred_element_type=jnp.float32) + b1_ref[l]
        h1 = jnp.maximum(h1, 0.0)
        y = jnp.dot(h1.astype(jnp.bfloat16), w2_ref[l],
                    preferred_element_type=jnp.float32) + b2_ref[l]
        x = _add_layernorm(x, y, g2_ref[l], be2_ref[l])

    # ---- output head: outputConv (k=1) + exact log_softmax (128-lane classes) ----
    logits = jnp.dot(x.astype(jnp.bfloat16), out_w_ref[...],
                     preferred_element_type=jnp.float32) + out_b_ref[...]
    m = jnp.max(logits, axis=-1, keepdims=True)
    z = logits - m
    lse = jnp.log(jnp.sum(jnp.exp(z), axis=-1, keepdims=True))
    o_ref[...] = (z - lse).reshape(bblk, T, -1).astype(o_ref.dtype)


_WEIGHT_NAMES = ["audio_w", "audio_b", "wj_a", "wj_v", "joint_b",
                 "wqkv", "bqkv", "wo", "bo", "ln1_g", "ln1_b",
                 "w1", "b1", "w2", "b2", "ln2_g", "ln2_b",
                 "out_w", "out_b"]


def fused_forward(a, v, p, num_heads):
    """a: (B, T, 4*321) fp32 grouped audio frames; v: (B, T, d) fp32 video features."""
    B, T, K = a.shape
    d = v.shape[-1]
    L = p["wqkv"].shape[0]
    Cpad = p["out_w"].shape[-1]
    bblk = _choose_bblk(B, T)
    grid = (B // bblk,)

    weights = [p[n] for n in _WEIGHT_NAMES]
    kernel = functools.partial(_fused_kernel, num_layers=L, num_heads=num_heads)

    return pl.pallas_call(
        kernel,
        out_shape=jax.ShapeDtypeStruct((B, T, Cpad), jnp.float32),
        grid=grid,
        in_specs=[pl.BlockSpec((bblk, T, K), lambda i: (i, 0, 0)),
                  pl.BlockSpec((bblk, T, d), lambda i: (i, 0, 0))]
                 + [_const_spec(w.shape) for w in weights],
        out_specs=pl.BlockSpec((bblk, T, Cpad), lambda i: (i, 0, 0)),
        compiler_params=pltpu.CompilerParams(
            dimension_semantics=("parallel",),
            vmem_limit_bytes=32 * 1024 * 1024),
    )(a, v, *weights)


# ----------------------------------------------------------------------------
# One-time weight prep: transpose / split / pad / bf16-cast / stack / fold scale
# ----------------------------------------------------------------------------
def prepare_params(params, num_heads):
    d = params["audio_b"].shape[0]
    Fa = params["audio_w"].shape[1]              # 321
    C = params["out_b"].shape[0]
    K = 4 * Fa
    Cpad = ((C + 127) // 128) * 128              # 40 -> 128 (lane-dense output)
    hd = d // num_heads
    scale = 1.0 / math.sqrt(hd)

    # audioConv weight (d, 321, 4) -> (4, 321, d) -> (4*321, d); matches k-major frame grouping
    w_a = jnp.transpose(params["audio_w"], (2, 1, 0)).reshape(K, d)
    # jointConv weight (d, 2d, 1): split into the audio-half and video-half of the input
    wj = params["joint_w"][:, :, 0]              # (d, 2d)
    # outputConv weight (C, d, 1) -> (d, C), zero-pad classes; padded bias -> -1e30
    w_o = jnp.pad(params["out_w"][:, :, 0].T, ((0, 0), (0, Cpad - C)))
    b_o = jnp.pad(params["out_b"], (0, Cpad - C), constant_values=-1e30)

    # fold softmax scale into the q rows of the in-projection
    qscale = jnp.concatenate(
        [jnp.full((d,), scale, jnp.float32), jnp.ones((2 * d,), jnp.float32)])

    layers = params["layers"]

    def stack(fn):
        return jnp.stack([fn(lyr) for lyr in layers], axis=0)

    prepped = {
        "audio_w": w_a.astype(jnp.bfloat16),                              # (4*321, d)
        "audio_b": params["audio_b"].reshape(1, d),
        "wj_a": wj[:, :d].T.astype(jnp.bfloat16),                         # (d, d)
        "wj_v": wj[:, d:].T.astype(jnp.bfloat16),                         # (d, d)
        "joint_b": params["joint_b"].reshape(1, d),
        "wqkv": stack(lambda l: (l["in_proj_w"] * qscale[:, None]).T
                      ).astype(jnp.bfloat16),                             # (L, d, 3d)
        "bqkv": stack(lambda l: (l["in_proj_b"] * qscale).reshape(1, 3 * d)),
        "wo": stack(lambda l: l["out_w"].T.reshape(num_heads, hd, d)
                    ).astype(jnp.bfloat16),                               # (L, H, hd, d)
        "bo": stack(lambda l: l["out_b"].reshape(1, d)),
        "ln1_g": stack(lambda l: l["ln1_g"].reshape(1, d)),
        "ln1_b": stack(lambda l: l["ln1_b"].reshape(1, d)),
        "w1": stack(lambda l: l["ff1_w"].T).astype(jnp.bfloat16),         # (L, d, hidden)
        "b1": stack(lambda l: l["ff1_b"].reshape(1, -1)),
        "w2": stack(lambda l: l["ff2_w"].T).astype(jnp.bfloat16),         # (L, hidden, d)
        "b2": stack(lambda l: l["ff2_b"].reshape(1, d)),
        "ln2_g": stack(lambda l: l["ln2_g"].reshape(1, d)),
        "ln2_b": stack(lambda l: l["ln2_b"].reshape(1, d)),
        "out_w": w_o.astype(jnp.bfloat16),                                # (d, Cpad)
        "out_b": b_o.reshape(1, Cpad),
    }
    return prepped


# ----------------------------------------------------------------------------
# Forward (only transposes/reshapes on the boundary; hot path is ONE Pallas call)
# ----------------------------------------------------------------------------
def cnn_transformer_forward(audio, video, prepped, num_heads, num_classes):
    # audio: (Ta, B, 321), video: (T, B, d) with Ta = 4*T (seq-first layout)
    Ta, B, Fa = audio.shape
    T = Ta // 4
    # group 4 consecutive audio frames per output step, batch-first (raw fp32; cast in-kernel)
    a = jnp.transpose(audio, (1, 0, 2)).reshape(B, T, 4 * Fa)
    v = jnp.transpose(video, (1, 0, 2))                               # (B, T, d) fp32

    logp = fused_forward(a, v, prepped, num_heads)                    # (B, T, Cpad)
    return jnp.transpose(logp[..., :num_classes], (1, 0, 2))          # (T, B, C) seq-first


# ----------------------------------------------------------------------------
# Deterministic parameter init (PyTorch-layout shapes, as in the module __init__)
# ----------------------------------------------------------------------------
def init_params(key, d_model, num_heads, hidden_dim, num_layers, num_classes):
    def w(k, shape, s=0.05):
        return jax.random.normal(k, shape, jnp.float32) * s

    keys = jax.random.split(key, 6 + num_layers)
    params = {
        "audio_w": w(keys[0], (d_model, 321, 4)),
        "audio_b": w(keys[1], (d_model,)),
        "joint_w": w(keys[2], (d_model, 2 * d_model, 1)),
        "joint_b": w(keys[3], (d_model,)),
        "out_w": w(keys[4], (num_classes, d_model, 1)),
        "out_b": w(keys[5], (num_classes,)),
        "layers": [],
    }
    for i in range(num_layers):
        lk = jax.random.split(keys[6 + i], 8)
        params["layers"].append({
            "in_proj_w": w(lk[0], (3 * d_model, d_model)),
            "in_proj_b": w(lk[1], (3 * d_model,)),
            "out_w": w(lk[2], (d_model, d_model)),
            "out_b": w(lk[3], (d_model,)),
            "ln1_g": jnp.ones((d_model,), jnp.float32),
            "ln1_b": jnp.zeros((d_model,), jnp.float32),
            "ff1_w": w(lk[4], (hidden_dim, d_model)),
            "ff1_b": w(lk[5], (hidden_dim,)),
            "ff2_w": w(lk[6], (d_model, hidden_dim)),
            "ff2_b": w(lk[7], (d_model,)),
            "ln2_g": jnp.ones((d_model,), jnp.float32),
            "ln2_b": jnp.zeros((d_model,), jnp.float32),
        })
    return params


if __name__ == "__main__":
    # small config consistent with the module
    d_model, num_heads, hidden_dim, num_layers = 32, 4, 64, 2
    num_classes = 40          # 26 + 10 + ' ' + "'" + blank + <EOS>
    T, B = 8, 2               # 25 Hz frames; audio is 4x (100 Hz STFT vectors)

    key = jax.random.PRNGKey(0)
    kp, ka, kv = jax.random.split(key, 3)
    raw_params = init_params(kp, d_model, num_heads, hidden_dim, num_layers, num_classes)
    params = prepare_params(raw_params, num_heads)   # pre-transposed / split / bf16 / stacked

    audio = jax.random.normal(ka, (4 * T, B, 321), jnp.float32)   # (Ta, B, 321)
    video = jax.random.normal(kv, (T, B, d_model), jnp.float32)   # (T, B, d)

    forward = jax.jit(cnn_transformer_forward, static_argnums=(3, 4))
    out = forward(audio, video, params, num_heads, num_classes)
    out = jax.block_until_ready(out)

    assert out.shape == (T, B, num_classes)
    assert bool(jnp.all(jnp.isfinite(out)))
    # log_softmax rows should sum to ~1 after exp
    assert bool(jnp.allclose(jnp.sum(jnp.exp(out), axis=-1), 1.0, atol=1e-4))
    print("KERNEL_OK")
</pallas_src>

<mosaic_0001>
module attributes {stable_mosaic.version = 11 : i64} {
  func.func @_fused_kernel(%arg0: i32, %arg1: memref<1x8x1284xf32, #tpu.memory_space<vmem>>, %arg2: memref<1x8x32xf32, #tpu.memory_space<vmem>>, %arg3: memref<1284x32xbf16, #tpu.memory_space<vmem>>, %arg4: memref<1x32xf32, #tpu.memory_space<vmem>>, %arg5: memref<32x32xbf16, #tpu.memory_space<vmem>>, %arg6: memref<32x32xbf16, #tpu.memory_space<vmem>>, %arg7: memref<1x32xf32, #tpu.memory_space<vmem>>, %arg8: memref<2x32x96xbf16, #tpu.memory_space<vmem>>, %arg9: memref<2x1x96xf32, #tpu.memory_space<vmem>>, %arg10: memref<2x4x8x32xbf16, #tpu.memory_space<vmem>>, %arg11: memref<2x1x32xf32, #tpu.memory_space<vmem>>, %arg12: memref<2x1x32xf32, #tpu.memory_space<vmem>>, %arg13: memref<2x1x32xf32, #tpu.memory_space<vmem>>, %arg14: memref<2x32x64xbf16, #tpu.memory_space<vmem>>, %arg15: memref<2x1x64xf32, #tpu.memory_space<vmem>>, %arg16: memref<2x64x32xbf16, #tpu.memory_space<vmem>>, %arg17: memref<2x1x32xf32, #tpu.memory_space<vmem>>, %arg18: memref<2x1x32xf32, #tpu.memory_space<vmem>>, %arg19: memref<2x1x32xf32, #tpu.memory_space<vmem>>, %arg20: memref<32x128xbf16, #tpu.memory_space<vmem>>, %arg21: memref<1x128xf32, #tpu.memory_space<vmem>>, %arg22: memref<1x8x128xf32, #tpu.memory_space<vmem>>) attributes {dimension_semantics = [#tpu.dimension_semantics<parallel>], iteration_bounds = array<i64: 2>, scalar_prefetch = 0 : i64, scratch_operands = 0 : i64, tpu.core_type = #tpu.core_type<tc>, window_params = [{transform_indices = @transform_0, window_bounds = array<i64: 1, 8, 1284>}, {transform_indices = @transform_1, window_bounds = array<i64: 1, 8, 32>}, {pipeline_mode = #tpu.pipeline_mode<synchronous>, transform_indices = @transform_2, window_bounds = array<i64: 1284, 32>}, {pipeline_mode = #tpu.pipeline_mode<synchronous>, transform_indices = @transform_3, window_bounds = array<i64: 1, 32>}, {pipeline_mode = #tpu.pipeline_mode<synchronous>, transform_indices = @transform_4, window_bounds = array<i64: 32, 32>}, {pipeline_mode = #tpu.pipeline_mode<synchronous>, transform_indices = @transform_5, window_bounds = array<i64: 32, 32>}, {pipeline_mode = #tpu.pipeline_mode<synchronous>, transform_indices = @transform_6, window_bounds = array<i64: 1, 32>}, {pipeline_mode = #tpu.pipeline_mode<synchronous>, transform_indices = @transform_7, window_bounds = array<i64: 2, 32, 96>}, {pipeline_mode = #tpu.pipeline_mode<synchronous>, transform_indices = @transform_8, window_bounds = array<i64: 2, 1, 96>}, {pipeline_mode = #tpu.pipeline_mode<synchronous>, transform_indices = @transform_9, window_bounds = array<i64: 2, 4, 8, 32>}, {pipeline_mode = #tpu.pipeline_mode<synchronous>, transform_indices = @transform_10, window_bounds = array<i64: 2, 1, 32>}, {pipeline_mode = #tpu.pipeline_mode<synchronous>, transform_indices = @transform_11, window_bounds = array<i64: 2, 1, 32>}, {pipeline_mode = #tpu.pipeline_mode<synchronous>, transform_indices = @transform_12, window_bounds = array<i64: 2, 1, 32>}, {pipeline_mode = #tpu.pipeline_mode<synchronous>, transform_indices = @transform_13, window_bounds = array<i64: 2, 32, 64>}, {pipeline_mode = #tpu.pipeline_mode<synchronous>, transform_indices = @transform_14, window_bounds = array<i64: 2, 1, 64>}, {pipeline_mode = #tpu.pipeline_mode<synchronous>, transform_indices = @transform_15, window_bounds = array<i64: 2, 64, 32>}, {pipeline_mode = #tpu.pipeline_mode<synchronous>, transform_indices = @transform_16, window_bounds = array<i64: 2, 1, 32>}, {pipeline_mode = #tpu.pipeline_mode<synchronous>, transform_indices = @transform_17, window_bounds = array<i64: 2, 1, 32>}, {pipeline_mode = #tpu.pipeline_mode<synchronous>, transform_indices = @transform_18, window_bounds = array<i64: 2, 1, 32>}, {pipeline_mode = #tpu.pipeline_mode<synchronous>, transform_indices = @transform_19, window_bounds = array<i64: 32, 128>}, {pipeline_mode = #tpu.pipeline_mode<synchronous>, transform_indices = @transform_20, window_bounds = array<i64: 1, 128>}, {transform_indices = @transform_21, window_bounds = array<i64: 1, 8, 128>}]} {
    %c0 = arith.constant 0 : index
    %c0_0 = arith.constant 0 : index
    %c0_1 = arith.constant 0 : index
    %0 = vector.load %arg1[%c0, %c0_0, %c0_1] : memref<1x8x1284xf32, #tpu.memory_space<vmem>>, vector<1x8x1284xf32>
    %1 = vector.shape_cast %0 : vector<1x8x1284xf32> to vector<8x1284xf32>
    %2 = arith.truncf %1 : vector<8x1284xf32> to vector<8x1284xbf16>
    %c0_2 = arith.constant 0 : index
    %c0_3 = arith.constant 0 : index
    %c0_4 = arith.constant 0 : index
    %3 = vector.load %arg2[%c0_2, %c0_3, %c0_4] : memref<1x8x32xf32, #tpu.memory_space<vmem>>, vector<1x8x32xf32>
    %4 = vector.shape_cast %3 : vector<1x8x32xf32> to vector<8x32xf32>
    %5 = arith.truncf %4 : vector<8x32xf32> to vector<8x32xbf16>
    %c0_5 = arith.constant 0 : index
    %c0_6 = arith.constant 0 : index
    %6 = vector.load %arg3[%c0_5, %c0_6] : memref<1284x32xbf16, #tpu.memory_space<vmem>>, vector<1284x32xbf16>
    %cst = arith.constant dense<0.000000e+00> : vector<8x32xf32>
    %7 = tpu.matmul %2, %6, %cst {dimension_numbers = #tpu.dot_dimension_numbers<[1], [0], [0], [1], [0, 0, 1, 1], [], []>} : vector<8x1284xbf16>, vector<1284x32xbf16>, vector<8x32xf32> -> vector<8x32xf32>
    %c0_7 = arith.constant 0 : index
    %c0_8 = arith.constant 0 : index
    %8 = vector.load %arg4[%c0_7, %c0_8] : memref<1x32xf32, #tpu.memory_space<vmem>>, vector<1x32xf32>
    %9 = vector.broadcast %8 : vector<1x32xf32> to vector<8x32xf32>
    %10 = arith.addf %7, %9 : vector<8x32xf32>
    %11 = arith.truncf %10 : vector<8x32xf32> to vector<8x32xbf16>
    %c0_9 = arith.constant 0 : index
    %c0_10 = arith.constant 0 : index
    %12 = vector.load %arg5[%c0_9, %c0_10] : memref<32x32xbf16, #tpu.memory_space<vmem>>, vector<32x32xbf16>
    %cst_11 = arith.constant dense<0.000000e+00> : vector<8x32xf32>
    %13 = tpu.matmul %11, %12, %cst_11 {dimension_numbers = #tpu.dot_dimension_numbers<[1], [0], [0], [1], [0, 0, 1, 1], [], []>} : vector<8x32xbf16>, vector<32x32xbf16>, vector<8x32xf32> -> vector<8x32xf32>
    %c0_12 = arith.constant 0 : index
    %c0_13 = arith.constant 0 : index
    %14 = vector.load %arg6[%c0_12, %c0_13] : memref<32x32xbf16, #tpu.memory_space<vmem>>, vector<32x32xbf16>
    %cst_14 = arith.constant dense<0.000000e+00> : vector<8x32xf32>
    %15 = tpu.matmul %5, %14, %cst_14 {dimension_numbers = #tpu.dot_dimension_numbers<[1], [0], [0], [1], [0, 0, 1, 1], [], []>} : vector<8x32xbf16>, vector<32x32xbf16>, vector<8x32xf32> -> vector<8x32xf32>
    %16 = arith.addf %13, %15 : vector<8x32xf32>
    %c0_15 = arith.constant 0 : index
    %c0_16 = arith.constant 0 : index
    %17 = vector.load %arg7[%c0_15, %c0_16] : memref<1x32xf32, #tpu.memory_space<vmem>>, vector<1x32xf32>
    %18 = vector.broadcast %17 : vector<1x32xf32> to vector<8x32xf32>
    %19 = arith.addf %16, %18 : vector<8x32xf32>
    %20 = arith.truncf %19 : vector<8x32xf32> to vector<8x32xbf16>
    %c0_17 = arith.constant 0 : index
    %c0_18 = arith.constant 0 : index
    %c0_19 = arith.constant 0 : index
    %21 = vector.load %arg8[%c0_17, %c0_18, %c0_19] : memref<2x32x96xbf16, #tpu.memory_space<vmem>>, vector<1x32x96xbf16>
    %22 = vector.shape_cast %21 : vector<1x32x96xbf16> to vector<32x96xbf16>
    %cst_20 = arith.constant dense<0.000000e+00> : vector<8x96xf32>
    %23 = tpu.matmul %20, %22, %cst_20 {dimension_numbers = #tpu.dot_dimension_numbers<[1], [0], [0], [1], [0, 0, 1, 1], [], []>} : vector<8x32xbf16>, vector<32x96xbf16>, vector<8x96xf32> -> vector<8x96xf32>
    %c0_21 = arith.constant 0 : index
    %c0_22 = arith.constant 0 : index
    %c0_23 = arith.constant 0 : index
    %24 = vector.load %arg9[%c0_21, %c0_22, %c0_23] : memref<2x1x96xf32, #tpu.memory_space<vmem>>, vector<1x1x96xf32>
    %25 = vector.shape_cast %24 : vector<1x1x96xf32> to vector<1x96xf32>
    %26 = vector.broadcast %25 : vector<1x96xf32> to vector<8x96xf32>
    %27 = arith.addf %23, %26 : vector<8x96xf32>
    %28 = arith.truncf %27 : vector<8x96xf32> to vector<8x96xbf16>
    %29 = vector.shape_cast %28 : vector<8x96xbf16> to vector<1x8x96xbf16>
    %c0_24 = arith.constant 0 : index
    %c0_25 = arith.constant 0 : index
    %c0_26 = arith.constant 0 : index
    %c0_27 = arith.constant 0 : index
    %30 = vector.load %arg10[%c0_24, %c0_25, %c0_26, %c0_27] : memref<2x4x8x32xbf16, #tpu.memory_space<vmem>>, vector<1x4x8x32xbf16>
    %31 = vector.shape_cast %30 : vector<1x4x8x32xbf16> to vector<4x8x32xbf16>
    %32 = vector.extract_strided_slice %29 {offsets = [0, 0, 0], sizes = [1, 8, 8], strides = [1, 1, 1]} : vector<1x8x96xbf16> to vector<1x8x8xbf16>
    %33 = vector.extract_strided_slice %29 {offsets = [0, 0, 32], sizes = [1, 8, 8], strides = [1, 1, 1]} : vector<1x8x96xbf16> to vector<1x8x8xbf16>
    %34 = vector.extract_strided_slice %29 {offsets = [0, 0, 64], sizes = [1, 8, 8], strides = [1, 1, 1]} : vector<1x8x96xbf16> to vector<1x8x8xbf16>
    "tpu.trace_start"() <{level = 10 : i32, message = "bqd,bkd->bqk"}> : () -> ()
    %cst_28 = arith.constant dense<0.000000e+00> : vector<1x8x8xf32>
    %35 = tpu.matmul %32, %33, %cst_28 {dimension_numbers = #tpu.dot_dimension_numbers<[2], [2], [1], [1], [0, 0, 0, 1, 1, 1], [0], [0]>} : vector<1x8x8xbf16>, vector<1x8x8xbf16>, vector<1x8x8xf32> -> vector<1x8x8xf32>
    "tpu.trace_stop"() : () -> ()
    %cst_29 = arith.constant dense<0xFF800000> : vector<1x8xf32>
    %36 = vector.multi_reduction <maximumf>, %35, %cst_29 [2] : vector<1x8x8xf32> to vector<1x8xf32>
    %37 = vector.shape_cast %36 : vector<1x8xf32> to vector<1x8x1xf32>
    %38 = vector.broadcast %37 : vector<1x8x1xf32> to vector<1x8x8xf32>
    %39 = arith.subf %35, %38 : vector<1x8x8xf32>
    %40 = math.exp %39 : vector<1x8x8xf32>
    %cst_30 = arith.constant dense<0.000000e+00> : vector<1x8xf32>
    %41 = vector.multi_reduction <add>, %40, %cst_30 [2] : vector<1x8x8xf32> to vector<1x8xf32>
    %42 = vector.shape_cast %41 : vector<1x8xf32> to vector<1x8x1xf32>
    %43 = tpu.reciprocal %42 {approx = true} : vector<1x8x1xf32> -> vector<1x8x1xf32>
    %44 = vector.broadcast %43 : vector<1x8x1xf32> to vector<1x8x8xf32>
    %45 = arith.mulf %40, %44 : vector<1x8x8xf32>
    %46 = arith.truncf %45 : vector<1x8x8xf32> to vector<1x8x8xbf16>
    "tpu.trace_start"() <{level = 10 : i32, message = "bqk,bkd->bqd"}> : () -> ()
    %cst_31 = arith.constant dense<0.000000e+00> : vector<1x8x8xf32>
    %47 = tpu.matmul %46, %34, %cst_31 {dimension_numbers = #tpu.dot_dimension_numbers<[2], [1], [1], [2], [0, 0, 0, 1, 1, 2], [0], [0]>} : vector<1x8x8xbf16>, vector<1x8x8xbf16>, vector<1x8x8xf32> -> vector<1x8x8xf32>
    "tpu.trace_stop"() : () -> ()
    %48 = vector.shape_cast %47 : vector<1x8x8xf32> to vector<8x8xf32>
    %49 = arith.truncf %48 : vector<8x8xf32> to vector<8x8xbf16>
    %50 = vector.extract_strided_slice %31 {offsets = [0, 0, 0], sizes = [1, 8, 32], strides = [1, 1, 1]} : vector<4x8x32xbf16> to vector<1x8x32xbf16>
    %51 = vector.shape_cast %50 : vector<1x8x32xbf16> to vector<8x32xbf16>
    %cst_32 = arith.constant dense<0.000000e+00> : vector<8x32xf32>
    %52 = tpu.matmul %49, %51, %cst_32 {dimension_numbers = #tpu.dot_dimension_numbers<[1], [0], [0], [1], [0, 0, 1, 1], [], []>} : vector<8x8xbf16>, vector<8x32xbf16>, vector<8x32xf32> -> vector<8x32xf32>
    %53 = vector.extract_strided_slice %29 {offsets = [0, 0, 8], sizes = [1, 8, 8], strides = [1, 1, 1]} : vector<1x8x96xbf16> to vector<1x8x8xbf16>
    %54 = vector.extract_strided_slice %29 {offsets = [0, 0, 40], sizes = [1, 8, 8], strides = [1, 1, 1]} : vector<1x8x96xbf16> to vector<1x8x8xbf16>
    %55 = vector.extract_strided_slice %29 {offsets = [0, 0, 72], sizes = [1, 8, 8], strides = [1, 1, 1]} : vector<1x8x96xbf16> to vector<1x8x8xbf16>
    "tpu.trace_start"() <{level = 10 : i32, message = "bqd,bkd->bqk"}> : () -> ()
    %cst_33 = arith.constant dense<0.000000e+00> : vector<1x8x8xf32>
    %56 = tpu.matmul %53, %54, %cst_33 {dimension_numbers = #tpu.dot_dimension_numbers<[2], [2], [1], [1], [0, 0, 0, 1, 1, 1], [0], [0]>} : vector<1x8x8xbf16>, vector<1x8x8xbf16>, vector<1x8x8xf32> -> vector<1x8x8xf32>
    "tpu.trace_stop"() : () -> ()
    %cst_34 = arith.constant dense<0xFF800000> : vector<1x8xf32>
    %57 = vector.multi_reduction <maximumf>, %56, %cst_34 [2] : vector<1x8x8xf32> to vector<1x8xf32>
    %58 = vector.shape_cast %57 : vector<1x8xf32> to vector<1x8x1xf32>
    %59 = vector.broadcast %58 : vector<1x8x1xf32> to vector<1x8x8xf32>
    %60 = arith.subf %56, %59 : vector<1x8x8xf32>
    %61 = math.exp %60 : vector<1x8x8xf32>
    %cst_35 = arith.constant dense<0.000000e+00> : vector<1x8xf32>
    %62 = vector.multi_reduction <add>, %61, %cst_35 [2] : vector<1x8x8xf32> to vector<1x8xf32>
    %63 = vector.shape_cast %62 : vector<1x8xf32> to vector<1x8x1xf32>
    %64 = tpu.reciprocal %63 {approx = true} : vector<1x8x1xf32> -> vector<1x8x1xf32>
    %65 = vector.broadcast %64 : vector<1x8x1xf32> to vector<1x8x8xf32>
    %66 = arith.mulf %61, %65 : vector<1x8x8xf32>
    %67 = arith.truncf %66 : vector<1x8x8xf32> to vector<1x8x8xbf16>
    "tpu.trace_start"() <{level = 10 : i32, message = "bqk,bkd->bqd"}> : () -> ()
    %cst_36 = arith.constant dense<0.000000e+00> : vector<1x8x8xf32>
    %68 = tpu.matmul %67, %55, %cst_36 {dimension_numbers = #tpu.dot_dimension_numbers<[2], [1], [1], [2], [0, 0, 0, 1, 1, 2], [0], [0]>} : vector<1x8x8xbf16>, vector<1x8x8xbf16>, vector<1x8x8xf32> -> vector<1x8x8xf32>
    "tpu.trace_stop"() : () -> ()
    %69 = vector.shape_cast %68 : vector<1x8x8xf32> to vector<8x8xf32>
    %70 = arith.truncf %69 : vector<8x8xf32> to vector<8x8xbf16>
    %71 = vector.extract_strided_slice %31 {offsets = [1, 0, 0], sizes = [1, 8, 32], strides = [1, 1, 1]} : vector<4x8x32xbf16> to vector<1x8x32xbf16>
    %72 = vector.shape_cast %71 : vector<1x8x32xbf16> to vector<8x32xbf16>
    %cst_37 = arith.constant dense<0.000000e+00> : vector<8x32xf32>
    %73 = tpu.matmul %70, %72, %cst_37 {dimension_numbers = #tpu.dot_dimension_numbers<[1], [0], [0], [1], [0, 0, 1, 1], [], []>} : vector<8x8xbf16>, vector<8x32xbf16>, vector<8x32xf32> -> vector<8x32xf32>
    %74 = arith.addf %52, %73 : vector<8x32xf32>
    %75 = vector.extract_strided_slice %29 {offsets = [0, 0, 16], sizes = [1, 8, 8], strides = [1, 1, 1]} : vector<1x8x96xbf16> to vector<1x8x8xbf16>
    %76 = vector.extract_strided_slice %29 {offsets = [0, 0, 48], sizes = [1, 8, 8], strides = [1, 1, 1]} : vector<1x8x96xbf16> to vector<1x8x8xbf16>
    %77 = vector.extract_strided_slice %29 {offsets = [0, 0, 80], sizes = [1, 8, 8], strides = [1, 1, 1]} : vector<1x8x96xbf16> to vector<1x8x8xbf16>
    "tpu.trace_start"() <{level = 10 : i32, message = "bqd,bkd->bqk"}> : () -> ()
    %cst_38 = arith.constant dense<0.000000e+00> : vector<1x8x8xf32>
    %78 = tpu.matmul %75, %76, %cst_38 {dimension_numbers = #tpu.dot_dimension_numbers<[2], [2], [1], [1], [0, 0, 0, 1, 1, 1], [0], [0]>} : vector<1x8x8xbf16>, vector<1x8x8xbf16>, vector<1x8x8xf32> -> vector<1x8x8xf32>
    "tpu.trace_stop"() : () -> ()
    %cst_39 = arith.constant dense<0xFF800000> : vector<1x8xf32>
    %79 = vector.multi_reduction <maximumf>, %78, %cst_39 [2] : vector<1x8x8xf32> to vector<1x8xf32>
    %80 = vector.shape_cast %79 : vector<1x8xf32> to vector<1x8x1xf32>
    %81 = vector.broadcast %80 : vector<1x8x1xf32> to vector<1x8x8xf32>
    %82 = arith.subf %78, %81 : vector<1x8x8xf32>
    %83 = math.exp %82 : vector<1x8x8xf32>
    %cst_40 = arith.constant dense<0.000000e+00> : vector<1x8xf32>
    %84 = vector.multi_reduction <add>, %83, %cst_40 [2] : vector<1x8x8xf32> to vector<1x8xf32>
    %85 = vector.shape_cast %84 : vector<1x8xf32> to vector<1x8x1xf32>
    %86 = tpu.reciprocal %85 {approx = true} : vector<1x8x1xf32> -> vector<1x8x1xf32>
    %87 = vector.broadcast %86 : vector<1x8x1xf32> to vector<1x8x8xf32>
    %88 = arith.mulf %83, %87 : vector<1x8x8xf32>
    %89 = arith.truncf %88 : vector<1x8x8xf32> to vector<1x8x8xbf16>
    "tpu.trace_start"() <{level = 10 : i32, message = "bqk,bkd->bqd"}> : () -> ()
    %cst_41 = arith.constant dense<0.000000e+00> : vector<1x8x8xf32>
    %90 = tpu.matmul %89, %77, %cst_41 {dimension_numbers = #tpu.dot_dimension_numbers<[2], [1], [1], [2], [0, 0, 0, 1, 1, 2], [0], [0]>} : vector<1x8x8xbf16>, vector<1x8x8xbf16>, vector<1x8x8xf32> -> vector<1x8x8xf32>
    "tpu.trace_stop"() : () -> ()
    %91 = vector.shape_cast %90 : vector<1x8x8xf32> to vector<8x8xf32>
    %92 = arith.truncf %91 : vector<8x8xf32> to vector<8x8xbf16>
    %93 = vector.extract_strided_slice %31 {offsets = [2, 0, 0], sizes = [1, 8, 32], strides = [1, 1, 1]} : vector<4x8x32xbf16> to vector<1x8x32xbf16>
    %94 = vector.shape_cast %93 : vector<1x8x32xbf16> to vector<8x32xbf16>
    %cst_42 = arith.constant dense<0.000000e+00> : vector<8x32xf32>
    %95 = tpu.matmul %92, %94, %cst_42 {dimension_numbers = #tpu.dot_dimension_numbers<[1], [0], [0], [1], [0, 0, 1, 1], [], []>} : vector<8x8xbf16>, vector<8x32xbf16>, vector<8x32xf32> -> vector<8x32xf32>
    %96 = arith.addf %74, %95 : vector<8x32xf32>
    %97 = vector.extract_strided_slice %29 {offsets = [0, 0, 24], sizes = [1, 8, 8], strides = [1, 1, 1]} : vector<1x8x96xbf16> to vector<1x8x8xbf16>
    %98 = vector.extract_strided_slice %29 {offsets = [0, 0, 56], sizes = [1, 8, 8], strides = [1, 1, 1]} : vector<1x8x96xbf16> to vector<1x8x8xbf16>
    %99 = vector.extract_strided_slice %29 {offsets = [0, 0, 88], sizes = [1, 8, 8], strides = [1, 1, 1]} : vector<1x8x96xbf16> to vector<1x8x8xbf16>
    "tpu.trace_start"() <{level = 10 : i32, message = "bqd,bkd->bqk"}> : () -> ()
    %cst_43 = arith.constant dense<0.000000e+00> : vector<1x8x8xf32>
    %100 = tpu.matmul %97, %98, %cst_43 {dimension_numbers = #tpu.dot_dimension_numbers<[2], [2], [1], [1], [0, 0, 0, 1, 1, 1], [0], [0]>} : vector<1x8x8xbf16>, vector<1x8x8xbf16>, vector<1x8x8xf32> -> vector<1x8x8xf32>
    "tpu.trace_stop"() : () -> ()
    %cst_44 = arith.constant dense<0xFF800000> : vector<1x8xf32>
    %101 = vector.multi_reduction <maximumf>, %100, %cst_44 [2] : vector<1x8x8xf32> to vector<1x8xf32>
    %102 = vector.shape_cast %101 : vector<1x8xf32> to vector<1x8x1xf32>
    %103 = vector.broadcast %102 : vector<1x8x1xf32> to vector<1x8x8xf32>
    %104 = arith.subf %100, %103 : vector<1x8x8xf32>
    %105 = math.exp %104 : vector<1x8x8xf32>
    %cst_45 = arith.constant dense<0.000000e+00> : vector<1x8xf32>
    %106 = vector.multi_reduction <add>, %105, %cst_45 [2] : vector<1x8x8xf32> to vector<1x8xf32>
    %107 = vector.shape_cast %106 : vector<1x8xf32> to vector<1x8x1xf32>
    %108 = tpu.reciprocal %107 {approx = true} : vector<1x8x1xf32> -> vector<1x8x1xf32>
    %109 = vector.broadcast %108 : vector<1x8x1xf32> to vector<1x8x8xf32>
    %110 = arith.mulf %105, %109 : vector<1x8x8xf32>
    %111 = arith.truncf %110 : vector<1x8x8xf32> to vector<1x8x8xbf16>
    "tpu.trace_start"() <{level = 10 : i32, message = "bqk,bkd->bqd"}> : () -> ()
    %cst_46 = arith.constant dense<0.000000e+00> : vector<1x8x8xf32>
    %112 = tpu.matmul %111, %99, %cst_46 {dimension_numbers = #tpu.dot_dimension_numbers<[2], [1], [1], [2], [0, 0, 0, 1, 1, 2], [0], [0]>} : vector<1x8x8xbf16>, vector<1x8x8xbf16>, vector<1x8x8xf32> -> vector<1x8x8xf32>
    "tpu.trace_stop"() : () -> ()
    %113 = vector.shape_cast %112 : vector<1x8x8xf32> to vector<8x8xf32>
    %114 = arith.truncf %113 : vector<8x8xf32> to vector<8x8xbf16>
    %115 = vector.extract_strided_slice %31 {offsets = [3, 0, 0], sizes = [1, 8, 32], strides = [1, 1, 1]} : vector<4x8x32xbf16> to vector<1x8x32xbf16>
    %116 = vector.shape_cast %115 : vector<1x8x32xbf16> to vector<8x32xbf16>
    %cst_47 = arith.constant dense<0.000000e+00> : vector<8x32xf32>
    %117 = tpu.matmul %114, %116, %cst_47 {dimension_numbers = #tpu.dot_dimension_numbers<[1], [0], [0], [1], [0, 0, 1, 1], [], []>} : vector<8x8xbf16>, vector<8x32xbf16>, vector<8x32xf32> -> vector<8x32xf32>
    %118 = arith.addf %96, %117 : vector<8x32xf32>
    %c0_48 = arith.constant 0 : index
    %c0_49 = arith.constant 0 : index
    %c0_50 = arith.constant 0 : index
    %119 = vector.load %arg11[%c0_48, %c0_49, %c0_50] : memref<2x1x32xf32, #tpu.memory_space<vmem>>, vector<1x1x32xf32>
    %120 = vector.shape_cast %119 : vector<1x1x32xf32> to vector<1x32xf32>
    %121 = vector.broadcast %120 : vector<1x32xf32> to vector<8x32xf32>
    %122 = arith.addf %118, %121 : vector<8x32xf32>
    %c0_51 = arith.constant 0 : index
    %c0_52 = arith.constant 0 : index
    %c0_53 = arith.constant 0 : index
    %123 = vector.load %arg12[%c0_51, %c0_52, %c0_53] : memref<2x1x32xf32, #tpu.memory_space<vmem>>, vector<1x1x32xf32>
    %124 = vector.shape_cast %123 : vector<1x1x32xf32> to vector<1x32xf32>
    %c0_54 = arith.constant 0 : index
    %c0_55 = arith.constant 0 : index
    %c0_56 = arith.constant 0 : index
    %125 = vector.load %arg13[%c0_54, %c0_55, %c0_56] : memref<2x1x32xf32, #tpu.memory_space<vmem>>, vector<1x1x32xf32>
    %126 = vector.shape_cast %125 : vector<1x1x32xf32> to vector<1x32xf32>
    %127 = arith.addf %19, %122 : vector<8x32xf32>
    %cst_57 = arith.constant dense<0.000000e+00> : vector<8xf32>
    %128 = vector.multi_reduction <add>, %127, %cst_57 [1] : vector<8x32xf32> to vector<8xf32>
    %129 = vector.shape_cast %128 : vector<8xf32> to vector<8x1xf32>
    %cst_58 = arith.constant 3.200000e+01 : f32
    %130 = vector.broadcast %cst_58 : f32 to vector<8x1xf32>
    %131 = arith.divf %129, %130 : vector<8x1xf32>
    %132 = vector.broadcast %131 : vector<8x1xf32> to vector<8x32xf32>
    %133 = arith.subf %127, %132 : vector<8x32xf32>
    %134 = arith.mulf %133, %133 : vector<8x32xf32>
    %cst_59 = arith.constant dense<0.000000e+00> : vector<8xf32>
    %135 = vector.multi_reduction <add>, %134, %cst_59 [1] : vector<8x32xf32> to vector<8xf32>
    %136 = vector.shape_cast %135 : vector<8xf32> to vector<8x1xf32>
    %cst_60 = arith.constant 3.200000e+01 : f32
    %137 = vector.broadcast %cst_60 : f32 to vector<8x1xf32>
    %138 = arith.divf %136, %137 : vector<8x1xf32>
    %cst_61 = arith.constant 9.99999974E-6 : f32
    %139 = vector.broadcast %cst_61 : f32 to vector<8x1xf32>
    %140 = arith.addf %138, %139 : vector<8x1xf32>
    %141 = math.rsqrt %140 : vector<8x1xf32>
    %142 = vector.broadcast %141 : vector<8x1xf32> to vector<8x32xf32>
    %143 = arith.mulf %133, %142 : vector<8x32xf32>
    %144 = vector.broadcast %124 : vector<1x32xf32> to vector<8x32xf32>
    %145 = arith.mulf %143, %144 : vector<8x32xf32>
    %146 = vector.broadcast %126 : vector<1x32xf32> to vector<8x32xf32>
    %147 = arith.addf %145, %146 : vector<8x32xf32>
    %148 = arith.truncf %147 : vector<8x32xf32> to vector<8x32xbf16>
    %c0_62 = arith.constant 0 : index
    %c0_63 = arith.constant 0 : index
    %c0_64 = arith.constant 0 : index
    %149 = vector.load %arg14[%c0_62, %c0_63, %c0_64] : memref<2x32x64xbf16, #tpu.memory_space<vmem>>, vector<1x32x64xbf16>
    %150 = vector.shape_cast %149 : vector<1x32x64xbf16> to vector<32x64xbf16>
    %cst_65 = arith.constant dense<0.000000e+00> : vector<8x64xf32>
    %151 = tpu.matmul %148, %150, %cst_65 {dimension_numbers = #tpu.dot_dimension_numbers<[1], [0], [0], [1], [0, 0, 1, 1], [], []>} : vector<8x32xbf16>, vector<32x64xbf16>, vector<8x64xf32> -> vector<8x64xf32>
    %c0_66 = arith.constant 0 : index
    %c0_67 = arith.constant 0 : index
    %c0_68 = arith.constant 0 : index
    %152 = vector.load %arg15[%c0_66, %c0_67, %c0_68] : memref<2x1x64xf32, #tpu.memory_space<vmem>>, vector<1x1x64xf32>
    %153 = vector.shape_cast %152 : vector<1x1x64xf32> to vector<1x64xf32>
    %154 = vector.broadcast %153 : vector<1x64xf32> to vector<8x64xf32>
    %155 = arith.addf %151, %154 : vector<8x64xf32>
    %cst_69 = arith.constant 0.000000e+00 : f32
    %156 = vector.broadcast %cst_69 : f32 to vector<8x64xf32>
    %157 = arith.maximumf %155, %156 : vector<8x64xf32>
    %158 = arith.truncf %157 : vector<8x64xf32> to vector<8x64xbf16>
    %c0_70 = arith.constant 0 : index
    %c0_71 = arith.constant 0 : index
    %c0_72 = arith.constant 0 : index
    %159 = vector.load %arg16[%c0_70, %c0_71, %c0_72] : memref<2x64x32xbf16, #tpu.memory_space<vmem>>, vector<1x64x32xbf16>
    %160 = vector.shape_cast %159 : vector<1x64x32xbf16> to vector<64x32xbf16>
    %cst_73 = arith.constant dense<0.000000e+00> : vector<8x32xf32>
    %161 = tpu.matmul %158, %160, %cst_73 {dimension_numbers = #tpu.dot_dimension_numbers<[1], [0], [0], [1], [0, 0, 1, 1], [], []>} : vector<8x64xbf16>, vector<64x32xbf16>, vector<8x32xf32> -> vector<8x32xf32>
    %c0_74 = arith.constant 0 : index
    %c0_75 = arith.constant 0 : index
    %c0_76 = arith.constant 0 : index
    %162 = vector.load %arg17[%c0_74, %c0_75, %c0_76] : memref<2x1x32xf32, #tpu.memory_space<vmem>>, vector<1x1x32xf32>
    %163 = vector.shape_cast %162 : vector<1x1x32xf32> to vector<1x32xf32>
    %164 = vector.broadcast %163 : vector<1x32xf32> to vector<8x32xf32>
    %165 = arith.addf %161, %164 : vector<8x32xf32>
    %c0_77 = arith.constant 0 : index
    %c0_78 = arith.constant 0 : index
    %c0_79 = arith.constant 0 : index
    %166 = vector.load %arg18[%c0_77, %c0_78, %c0_79] : memref<2x1x32xf32, #tpu.memory_space<vmem>>, vector<1x1x32xf32>
    %167 = vector.shape_cast %166 : vector<1x1x32xf32> to vector<1x32xf32>
    %c0_80 = arith.constant 0 : index
    %c0_81 = arith.constant 0 : index
    %c0_82 = arith.constant 0 : index
    %168 = vector.load %arg19[%c0_80, %c0_81, %c0_82] : memref<2x1x32xf32, #tpu.memory_space<vmem>>, vector<1x1x32xf32>
    %169 = vector.shape_cast %168 : vector<1x1x32xf32> to vector<1x32xf32>
    %170 = arith.addf %147, %165 : vector<8x32xf32>
    %cst_83 = arith.constant dense<0.000000e+00> : vector<8xf32>
    %171 = vector.multi_reduction <add>, %170, %cst_83 [1] : vector<8x32xf32> to vector<8xf32>
    %172 = vector.shape_cast %171 : vector<8xf32> to vector<8x1xf32>
    %cst_84 = arith.constant 3.200000e+01 : f32
    %173 = vector.broadcast %cst_84 : f32 to vector<8x1xf32>
    %174 = arith.divf %172, %173 : vector<8x1xf32>
    %175 = vector.broadcast %174 : vector<8x1xf32> to vector<8x32xf32>
    %176 = arith.subf %170, %175 : vector<8x32xf32>
    %177 = arith.mulf %176, %176 : vector<8x32xf32>
    %cst_85 = arith.constant dense<0.000000e+00> : vector<8xf32>
    %178 = vector.multi_reduction <add>, %177, %cst_85 [1] : vector<8x32xf32> to vector<8xf32>
    %179 = vector.shape_cast %178 : vector<8xf32> to vector<8x1xf32>
    %cst_86 = arith.constant 3.200000e+01 : f32
    %180 = vector.broadcast %cst_86 : f32 to vector<8x1xf32>
    %181 = arith.divf %179, %180 : vector<8x1xf32>
    %cst_87 = arith.constant 9.99999974E-6 : f32
    %182 = vector.broadcast %cst_87 : f32 to vector<8x1xf32>
    %183 = arith.addf %181, %182 : vector<8x1xf32>
    %184 = math.rsqrt %183 : vector<8x1xf32>
    %185 = vector.broadcast %184 : vector<8x1xf32> to vector<8x32xf32>
    %186 = arith.mulf %176, %185 : vector<8x32xf32>
    %187 = vector.broadcast %167 : vector<1x32xf32> to vector<8x32xf32>
    %188 = arith.mulf %186, %187 : vector<8x32xf32>
    %189 = vector.broadcast %169 : vector<1x32xf32> to vector<8x32xf32>
    %190 = arith.addf %188, %189 : vector<8x32xf32>
    %191 = arith.truncf %190 : vector<8x32xf32> to vector<8x32xbf16>
    %c1 = arith.constant 1 : index
    %c0_88 = arith.constant 0 : index
    %c0_89 = arith.constant 0 : index
    %192 = vector.load %arg8[%c1, %c0_88, %c0_89] : memref<2x32x96xbf16, #tpu.memory_space<vmem>>, vector<1x32x96xbf16>
    %193 = vector.shape_cast %192 : vector<1x32x96xbf16> to vector<32x96xbf16>
    %cst_90 = arith.constant dense<0.000000e+00> : vector<8x96xf32>
    %194 = tpu.matmul %191, %193, %cst_90 {dimension_numbers = #tpu.dot_dimension_numbers<[1], [0], [0], [1], [0, 0, 1, 1], [], []>} : vector<8x32xbf16>, vector<32x96xbf16>, vector<8x96xf32> -> vector<8x96xf32>
    %c1_91 = arith.constant 1 : index
    %c0_92 = arith.constant 0 : index
    %c0_93 = arith.constant 0 : index
    %195 = vector.load %arg9[%c1_91, %c0_92, %c0_93] : memref<2x1x96xf32, #tpu.memory_space<vmem>>, vector<1x1x96xf32>
    %196 = vector.shape_cast %195 : vector<1x1x96xf32> to vector<1x96xf32>
    %197 = vector.broadcast %196 : vector<1x96xf32> to vector<8x96xf32>
    %198 = arith.addf %194, %197 : vector<8x96xf32>
    %199 = arith.truncf %198 : vector<8x96xf32> to vector<8x96xbf16>
    %200 = vector.shape_cast %199 : vector<8x96xbf16> to vector<1x8x96xbf16>
    %c1_94 = arith.constant 1 : index
    %c0_95 = arith.constant 0 : index
    %c0_96 = arith.constant 0 : index
    %c0_97 = arith.constant 0 : index
    %201 = vector.load %arg10[%c1_94, %c0_95, %c0_96, %c0_97] : memref<2x4x8x32xbf16, #tpu.memory_space<vmem>>, vector<1x4x8x32xbf16>
    %202 = vector.shape_cast %201 : vector<1x4x8x32xbf16> to vector<4x8x32xbf16>
    %203 = vector.extract_strided_slice %200 {offsets = [0, 0, 0], sizes = [1, 8, 8], strides = [1, 1, 1]} : vector<1x8x96xbf16> to vector<1x8x8xbf16>
    %204 = vector.extract_strided_slice %200 {offsets = [0, 0, 32], sizes = [1, 8, 8], strides = [1, 1, 1]} : vector<1x8x96xbf16> to vector<1x8x8xbf16>
    %205 = vector.extract_strided_slice %200 {offsets = [0, 0, 64], sizes = [1, 8, 8], strides = [1, 1, 1]} : vector<1x8x96xbf16> to vector<1x8x8xbf16>
    "tpu.trace_start"() <{level = 10 : i32, message = "bqd,bkd->bqk"}> : () -> ()
    %cst_98 = arith.constant dense<0.000000e+00> : vector<1x8x8xf32>
    %206 = tpu.matmul %203, %204, %cst_98 {dimension_numbers = #tpu.dot_dimension_numbers<[2], [2], [1], [1], [0, 0, 0, 1, 1, 1], [0], [0]>} : vector<1x8x8xbf16>, vector<1x8x8xbf16>, vector<1x8x8xf32> -> vector<1x8x8xf32>
    "tpu.trace_stop"() : () -> ()
    %cst_99 = arith.constant dense<0xFF800000> : vector<1x8xf32>
    %207 = vector.multi_reduction <maximumf>, %206, %cst_99 [2] : vector<1x8x8xf32> to vector<1x8xf32>
    %208 = vector.shape_cast %207 : vector<1x8xf32> to vector<1x8x1xf32>
    %209 = vector.broadcast %208 : vector<1x8x1xf32> to vector<1x8x8xf32>
    %210 = arith.subf %206, %209 : vector<1x8x8xf32>
    %211 = math.exp %210 : vector<1x8x8xf32>
    %cst_100 = arith.constant dense<0.000000e+00> : vector<1x8xf32>
    %212 = vector.multi_reduction <add>, %211, %cst_100 [2] : vector<1x8x8xf32> to vector<1x8xf32>
    %213 = vector.shape_cast %212 : vector<1x8xf32> to vector<1x8x1xf32>
    %214 = tpu.reciprocal %213 {approx = true} : vector<1x8x1xf32> -> vector<1x8x1xf32>
    %215 = vector.broadcast %214 : vector<1x8x1xf32> to vector<1x8x8xf32>
    %216 = arith.mulf %211, %215 : vector<1x8x8xf32>
    %217 = arith.truncf %216 : vector<1x8x8xf32> to vector<1x8x8xbf16>
    "tpu.trace_start"() <{level = 10 : i32, message = "bqk,bkd->bqd"}> : () -> ()
    %cst_101 = arith.constant dense<0.000000e+00> : vector<1x8x8xf32>
    %218 = tpu.matmul %217, %205, %cst_101 {dimension_numbers = #tpu.dot_dimension_numbers<[2], [1], [1], [2], [0, 0, 0, 1, 1, 2], [0], [0]>} : vector<1x8x8xbf16>, vector<1x8x8xbf16>, vector<1x8x8xf32> -> vector<1x8x8xf32>
    "tpu.trace_stop"() : () -> ()
    %219 = vector.shape_cast %218 : vector<1x8x8xf32> to vector<8x8xf32>
    %220 = arith.truncf %219 : vector<8x8xf32> to vector<8x8xbf16>
    %221 = vector.extract_strided_slice %202 {offsets = [0, 0, 0], sizes = [1, 8, 32], strides = [1, 1, 1]} : vector<4x8x32xbf16> to vector<1x8x32xbf16>
    %222 = vector.shape_cast %221 : vector<1x8x32xbf16> to vector<8x32xbf16>
    %cst_102 = arith.constant dense<0.000000e+00> : vector<8x32xf32>
    %223 = tpu.matmul %220, %222, %cst_102 {dimension_numbers = #tpu.dot_dimension_numbers<[1], [0], [0], [1], [0, 0, 1, 1], [], []>} : vector<8x8xbf16>, vector<8x32xbf16>, vector<8x32xf32> -> vector<8x32xf32>
    %224 = vector.extract_strided_slice %200 {offsets = [0, 0, 8], sizes = [1, 8, 8], strides = [1, 1, 1]} : vector<1x8x96xbf16> to vector<1x8x8xbf16>
    %225 = vector.extract_strided_slice %200 {offsets = [0, 0, 40], sizes = [1, 8, 8], strides = [1, 1, 1]} : vector<1x8x96xbf16> to vector<1x8x8xbf16>
    %226 = vector.extract_strided_slice %200 {offsets = [0, 0, 72], sizes = [1, 8, 8], strides = [1, 1, 1]} : vector<1x8x96xbf16> to vector<1x8x8xbf16>
    "tpu.trace_start"() <{level = 10 : i32, message = "bqd,bkd->bqk"}> : () -> ()
    %cst_103 = arith.constant dense<0.000000e+00> : vector<1x8x8xf32>
    %227 = tpu.matmul %224, %225, %cst_103 {dimension_numbers = #tpu.dot_dimension_numbers<[2], [2], [1], [1], [0, 0, 0, 1, 1, 1], [0], [0]>} : vector<1x8x8xbf16>, vector<1x8x8xbf16>, vector<1x8x8xf32> -> vector<1x8x8xf32>
    "tpu.trace_stop"() : () -> ()
    %cst_104 = arith.constant dense<0xFF800000> : vector<1x8xf32>
    %228 = vector.multi_reduction <maximumf>, %227, %cst_104 [2] : vector<1x8x8xf32> to vector<1x8xf32>
    %229 = vector.shape_cast %228 : vector<1x8xf32> to vector<1x8x1xf32>
    %230 = vector.broadcast %229 : vector<1x8x1xf32> to vector<1x8x8xf32>
    %231 = arith.subf %227, %230 : vector<1x8x8xf32>
    %232 = math.exp %231 : vector<1x8x8xf32>
    %cst_105 = arith.constant dense<0.000000e+00> : vector<1x8xf32>
    %233 = vector.multi_reduction <add>, %232, %cst_105 [2] : vector<1x8x8xf32> to vector<1x8xf32>
    %234 = vector.shape_cast %233 : vector<1x8xf32> to vector<1x8x1xf32>
    %235 = tpu.reciprocal %234 {approx = true} : vector<1x8x1xf32> -> vector<1x8x1xf32>
    %236 = vector.broadcast %235 : vector<1x8x1xf32> to vector<1x8x8xf32>
    %237 = arith.mulf %232, %236 : vector<1x8x8xf32>
    %238 = arith.truncf %237 : vector<1x8x8xf32> to vector<1x8x8xbf16>
    "tpu.trace_start"() <{level = 10 : i32, message = "bqk,bkd->bqd"}> : () -> ()
    %cst_106 = arith.constant dense<0.000000e+00> : vector<1x8x8xf32>
    %239 = tpu.matmul %238, %226, %cst_106 {dimension_numbers = #tpu.dot_dimension_numbers<[2], [1], [1], [2], [0, 0, 0, 1, 1, 2], [0], [0]>} : vector<1x8x8xbf16>, vector<1x8x8xbf16>, vector<1x8x8xf32> -> vector<1x8x8xf32>
    "tpu.trace_stop"() : () -> ()
    %240 = vector.shape_cast %239 : vector<1x8x8xf32> to vector<8x8xf32>
    %241 = arith.truncf %240 : vector<8x8xf32> to vector<8x8xbf16>
    %242 = vector.extract_strided_slice %202 {offsets = [1, 0, 0], sizes = [1, 8, 32], strides = [1, 1, 1]} : vector<4x8x32xbf16> to vector<1x8x32xbf16>
    %243 = vector.shape_cast %242 : vector<1x8x32xbf16> to vector<8x32xbf16>
    %cst_107 = arith.constant dense<0.000000e+00> : vector<8x32xf32>
    %244 = tpu.matmul %241, %243, %cst_107 {dimension_numbers = #tpu.dot_dimension_numbers<[1], [0], [0], [1], [0, 0, 1, 1], [], []>} : vector<8x8xbf16>, vector<8x32xbf16>, vector<8x32xf32> -> vector<8x32xf32>
    %245 = arith.addf %223, %244 : vector<8x32xf32>
    %246 = vector.extract_strided_slice %200 {offsets = [0, 0, 16], sizes = [1, 8, 8], strides = [1, 1, 1]} : vector<1x8x96xbf16> to vector<1x8x8xbf16>
    %247 = vector.extract_strided_slice %200 {offsets = [0, 0, 48], sizes = [1, 8, 8], strides = [1, 1, 1]} : vector<1x8x96xbf16> to vector<1x8x8xbf16>
    %248 = vector.extract_strided_slice %200 {offsets = [0, 0, 80], sizes = [1, 8, 8], strides = [1, 1, 1]} : vector<1x8x96xbf16> to vector<1x8x8xbf16>
    "tpu.trace_start"() <{level = 10 : i32, message = "bqd,bkd->bqk"}> : () -> ()
    %cst_108 = arith.constant dense<0.000000e+00> : vector<1x8x8xf32>
    %249 = tpu.matmul %246, %247, %cst_108 {dimension_numbers = #tpu.dot_dimension_numbers<[2], [2], [1], [1], [0, 0, 0, 1, 1, 1], [0], [0]>} : vector<1x8x8xbf16>, vector<1x8x8xbf16>, vector<1x8x8xf32> -> vector<1x8x8xf32>
    "tpu.trace_stop"() : () -> ()
    %cst_109 = arith.constant dense<0xFF800000> : vector<1x8xf32>
    %250 = vector.multi_reduction <maximumf>, %249, %cst_109 [2] : vector<1x8x8xf32> to vector<1x8xf32>
    %251 = vector.shape_cast %250 : vector<1x8xf32> to vector<1x8x1xf32>
    %252 = vector.broadcast %251 : vector<1x8x1xf32> to vector<1x8x8xf32>
    %253 = arith.subf %249, %252 : vector<1x8x8xf32>
    %254 = math.exp %253 : vector<1x8x8xf32>
    %cst_110 = arith.constant dense<0.000000e+00> : vector<1x8xf32>
    %255 = vector.multi_reduction <add>, %254, %cst_110 [2] : vector<1x8x8xf32> to vector<1x8xf32>
    %256 = vector.shape_cast %255 : vector<1x8xf32> to vector<1x8x1xf32>
    %257 = tpu.reciprocal %256 {approx = true} : vector<1x8x1xf32> -> vector<1x8x1xf32>
    %258 = vector.broadcast %257 : vector<1x8x1xf32> to vector<1x8x8xf32>
    %259 = arith.mulf %254, %258 : vector<1x8x8xf32>
    %260 = arith.truncf %259 : vector<1x8x8xf32> to vector<1x8x8xbf16>
    "tpu.trace_start"() <{level = 10 : i32, message = "bqk,bkd->bqd"}> : () -> ()
    %cst_111 = arith.constant dense<0.000000e+00> : vector<1x8x8xf32>
    %261 = tpu.matmul %260, %248, %cst_111 {dimension_numbers = #tpu.dot_dimension_numbers<[2], [1], [1], [2], [0, 0, 0, 1, 1, 2], [0], [0]>} : vector<1x8x8xbf16>, vector<1x8x8xbf16>, vector<1x8x8xf32> -> vector<1x8x8xf32>
    "tpu.trace_stop"() : () -> ()
    %262 = vector.shape_cast %261 : vector<1x8x8xf32> to vector<8x8xf32>
    %263 = arith.truncf %262 : vector<8x8xf32> to vector<8x8xbf16>
    %264 = vector.extract_strided_slice %202 {offsets = [2, 0, 0], sizes = [1, 8, 32], strides = [1, 1, 1]} : vector<4x8x32xbf16> to vector<1x8x32xbf16>
    %265 = vector.shape_cast %264 : vector<1x8x32xbf16> to vector<8x32xbf16>
    %cst_112 = arith.constant dense<0.000000e+00> : vector<8x32xf32>
    %266 = tpu.matmul %263, %265, %cst_112 {dimension_numbers = #tpu.dot_dimension_numbers<[1], [0], [0], [1], [0, 0, 1, 1], [], []>} : vector<8x8xbf16>, vector<8x32xbf16>, vector<8x32xf32> -> vector<8x32xf32>
    %267 = arith.addf %245, %266 : vector<8x32xf32>
    %268 = vector.extract_strided_slice %200 {offsets = [0, 0, 24], sizes = [1, 8, 8], strides = [1, 1, 1]} : vector<1x8x96xbf16> to vector<1x8x8xbf16>
    %269 = vector.extract_strided_slice %200 {offsets = [0, 0, 56], sizes = [1, 8, 8], strides = [1, 1, 1]} : vector<1x8x96xbf16> to vector<1x8x8xbf16>
    %270 = vector.extract_strided_slice %200 {offsets = [0, 0, 88], sizes = [1, 8, 8], strides = [1, 1, 1]} : vector<1x8x96xbf16> to vector<1x8x8xbf16>
    "tpu.trace_start"() <{level = 10 : i32, message = "bqd,bkd->bqk"}> : () -> ()
    %cst_113 = arith.constant dense<0.000000e+00> : vector<1x8x8xf32>
    %271 = tpu.matmul %268, %269, %cst_113 {dimension_numbers = #tpu.dot_dimension_numbers<[2], [2], [1], [1], [0, 0, 0, 1, 1, 1], [0], [0]>} : vector<1x8x8xbf16>, vector<1x8x8xbf16>, vector<1x8x8xf32> -> vector<1x8x8xf32>
    "tpu.trace_stop"() : () -> ()
    %cst_114 = arith.constant dense<0xFF800000> : vector<1x8xf32>
    %272 = vector.multi_reduction <maximumf>, %271, %cst_114 [2] : vector<1x8x8xf32> to vector<1x8xf32>
    %273 = vector.shape_cast %272 : vector<1x8xf32> to vector<1x8x1xf32>
    %274 = vector.broadcast %273 : vector<1x8x1xf32> to vector<1x8x8xf32>
    %275 = arith.subf %271, %274 : vector<1x8x8xf32>
    %276 = math.exp %275 : vector<1x8x8xf32>
    %cst_115 = arith.constant dense<0.000000e+00> : vector<1x8xf32>
    %277 = vector.multi_reduction <add>, %276, %cst_115 [2] : vector<1x8x8xf32> to vector<1x8xf32>
    %278 = vector.shape_cast %277 : vector<1x8xf32> to vector<1x8x1xf32>
    %279 = tpu.reciprocal %278 {approx = true} : vector<1x8x1xf32> -> vector<1x8x1xf32>
    %280 = vector.broadcast %279 : vector<1x8x1xf32> to vector<1x8x8xf32>
    %281 = arith.mulf %276, %280 : vector<1x8x8xf32>
    %282 = arith.truncf %281 : vector<1x8x8xf32> to vector<1x8x8xbf16>
    "tpu.trace_start"() <{level = 10 : i32, message = "bqk,bkd->bqd"}> : () -> ()
    %cst_116 = arith.constant dense<0.000000e+00> : vector<1x8x8xf32>
    %283 = tpu.matmul %282, %270, %cst_116 {dimension_numbers = #tpu.dot_dimension_numbers<[2], [1], [1], [2], [0, 0, 0, 1, 1, 2], [0], [0]>} : vector<1x8x8xbf16>, vector<1x8x8xbf16>, vector<1x8x8xf32> -> vector<1x8x8xf32>
    "tpu.trace_stop"() : () -> ()
    %284 = vector.shape_cast %283 : vector<1x8x8xf32> to vector<8x8xf32>
    %285 = arith.truncf %284 : vector<8x8xf32> to vector<8x8xbf16>
    %286 = vector.extract_strided_slice %202 {offsets = [3, 0, 0], sizes = [1, 8, 32], strides = [1, 1, 1]} : vector<4x8x32xbf16> to vector<1x8x32xbf16>
    %287 = vector.shape_cast %286 : vector<1x8x32xbf16> to vector<8x32xbf16>
    %cst_117 = arith.constant dense<0.000000e+00> : vector<8x32xf32>
    %288 = tpu.matmul %285, %287, %cst_117 {dimension_numbers = #tpu.dot_dimension_numbers<[1], [0], [0], [1], [0, 0, 1, 1], [], []>} : vector<8x8xbf16>, vector<8x32xbf16>, vector<8x32xf32> -> vector<8x32xf32>
    %289 = arith.addf %267, %288 : vector<8x32xf32>
    %c1_118 = arith.constant 1 : index
    %c0_119 = arith.constant 0 : index
    %c0_120 = arith.constant 0 : index
    %290 = vector.load %arg11[%c1_118, %c0_119, %c0_120] : memref<2x1x32xf32, #tpu.memory_space<vmem>>, vector<1x1x32xf32>
    %291 = vector.shape_cast %290 : vector<1x1x32xf32> to vector<1x32xf32>
    %292 = vector.broadcast %291 : vector<1x32xf32> to vector<8x32xf32>
    %293 = arith.addf %289, %292 : vector<8x32xf32>
    %c1_121 = arith.constant 1 : index
    %c0_122 = arith.constant 0 : index
    %c0_123 = arith.constant 0 : index
    %294 = vector.load %arg12[%c1_121, %c0_122, %c0_123] : memref<2x1x32xf32, #tpu.memory_space<vmem>>, vector<1x1x32xf32>
    %295 = vector.shape_cast %294 : vector<1x1x32xf32> to vector<1x32xf32>
    %c1_124 = arith.constant 1 : index
    %c0_125 = arith.constant 0 : index
    %c0_126 = arith.constant 0 : index
    %296 = vector.load %arg13[%c1_124, %c0_125, %c0_126] : memref<2x1x32xf32, #tpu.memory_space<vmem>>, vector<1x1x32xf32>
    %297 = vector.shape_cast %296 : vector<1x1x32xf32> to vector<1x32xf32>
    %298 = arith.addf %190, %293 : vector<8x32xf32>
    %cst_127 = arith.constant dense<0.000000e+00> : vector<8xf32>
    %299 = vector.multi_reduction <add>, %298, %cst_127 [1] : vector<8x32xf32> to vector<8xf32>
    %300 = vector.shape_cast %299 : vector<8xf32> to vector<8x1xf32>
    %cst_128 = arith.constant 3.200000e+01 : f32
    %301 = vector.broadcast %cst_128 : f32 to vector<8x1xf32>
    %302 = arith.divf %300, %301 : vector<8x1xf32>
    %303 = vector.broadcast %302 : vector<8x1xf32> to vector<8x32xf32>
    %304 = arith.subf %298, %303 : vector<8x32xf32>
    %305 = arith.mulf %304, %304 : vector<8x32xf32>
    %cst_129 = arith.constant dense<0.000000e+00> : vector<8xf32>
    %306 = vector.multi_reduction <add>, %305, %cst_129 [1] : vector<8x32xf32> to vector<8xf32>
    %307 = vector.shape_cast %306 : vector<8xf32> to vector<8x1xf32>
    %cst_130 = arith.constant 3.200000e+01 : f32
    %308 = vector.broadcast %cst_130 : f32 to vector<8x1xf32>
    %309 = arith.divf %307, %308 : vector<8x1xf32>
    %cst_131 = arith.constant 9.99999974E-6 : f32
    %310 = vector.broadcast %cst_131 : f32 to vector<8x1xf32>
    %311 = arith.addf %309, %310 : vector<8x1xf32>
    %312 = math.rsqrt %311 : vector<8x1xf32>
    %313 = vector.broadcast %312 : vector<8x1xf32> to vector<8x32xf32>
    %314 = arith.mulf %304, %313 : vector<8x32xf32>
    %315 = vector.broadcast %295 : vector<1x32xf32> to vector<8x32xf32>
    %316 = arith.mulf %314, %315 : vector<8x32xf32>
    %317 = vector.broadcast %297 : vector<1x32xf32> to vector<8x32xf32>
    %318 = arith.addf %316, %317 : vector<8x32xf32>
    %319 = arith.truncf %318 : vector<8x32xf32> to vector<8x32xbf16>
    %c1_132 = arith.constant 1 : index
    %c0_133 = arith.constant 0 : index
    %c0_134 = arith.constant 0 : index
    %320 = vector.load %arg14[%c1_132, %c0_133, %c0_134] : memref<2x32x64xbf16, #tpu.memory_space<vmem>>, vector<1x32x64xbf16>
    %321 = vector.shape_cast %320 : vector<1x32x64xbf16> to vector<32x64xbf16>
    %cst_135 = arith.constant dense<0.000000e+00> : vector<8x64xf32>
    %322 = tpu.matmul %319, %321, %cst_135 {dimension_numbers = #tpu.dot_dimension_numbers<[1], [0], [0], [1], [0, 0, 1, 1], [], []>} : vector<8x32xbf16>, vector<32x64xbf16>, vector<8x64xf32> -> vector<8x64xf32>
    %c1_136 = arith.constant 1 : index
    %c0_137 = arith.constant 0 : index
    %c0_138 = arith.constant 0 : index
    %323 = vector.load %arg15[%c1_136, %c0_137, %c0_138] : memref<2x1x64xf32, #tpu.memory_space<vmem>>, vector<1x1x64xf32>
    %324 = vector.shape_cast %323 : vector<1x1x64xf32> to vector<1x64xf32>
    %325 = vector.broadcast %324 : vector<1x64xf32> to vector<8x64xf32>
    %326 = arith.addf %322, %325 : vector<8x64xf32>
    %cst_139 = arith.constant 0.000000e+00 : f32
    %327 = vector.broadcast %cst_139 : f32 to vector<8x64xf32>
    %328 = arith.maximumf %326, %327 : vector<8x64xf32>
    %329 = arith.truncf %328 : vector<8x64xf32> to vector<8x64xbf16>
    %c1_140 = arith.constant 1 : index
    %c0_141 = arith.constant 0 : index
    %c0_142 = arith.constant 0 : index
    %330 = vector.load %arg16[%c1_140, %c0_141, %c0_142] : memref<2x64x32xbf16, #tpu.memory_space<vmem>>, vector<1x64x32xbf16>
    %331 = vector.shape_cast %330 : vector<1x64x32xbf16> to vector<64x32xbf16>
    %cst_143 = arith.constant dense<0.000000e+00> : vector<8x32xf32>
    %332 = tpu.matmul %329, %331, %cst_143 {dimension_numbers = #tpu.dot_dimension_numbers<[1], [0], [0], [1], [0, 0, 1, 1], [], []>} : vector<8x64xbf16>, vector<64x32xbf16>, vector<8x32xf32> -> vector<8x32xf32>
    %c1_144 = arith.constant 1 : index
    %c0_145 = arith.constant 0 : index
    %c0_146 = arith.constant 0 : index
    %333 = vector.load %arg17[%c1_144, %c0_145, %c0_146] : memref<2x1x32xf32, #tpu.memory_space<vmem>>, vector<1x1x32xf32>
    %334 = vector.shape_cast %333 : vector<1x1x32xf32> to vector<1x32xf32>
    %335 = vector.broadcast %334 : vector<1x32xf32> to vector<8x32xf32>
    %336 = arith.addf %332, %335 : vector<8x32xf32>
    %c1_147 = arith.constant 1 : index
    %c0_148 = arith.constant 0 : index
    %c0_149 = arith.constant 0 : index
    %337 = vector.load %arg18[%c1_147, %c0_148, %c0_149] : memref<2x1x32xf32, #tpu.memory_space<vmem>>, vector<1x1x32xf32>
    %338 = vector.shape_cast %337 : vector<1x1x32xf32> to vector<1x32xf32>
    %c1_150 = arith.constant 1 : index
    %c0_151 = arith.constant 0 : index
    %c0_152 = arith.constant 0 : index
    %339 = vector.load %arg19[%c1_150, %c0_151, %c0_152] : memref<2x1x32xf32, #tpu.memory_space<vmem>>, vector<1x1x32xf32>
    %340 = vector.shape_cast %339 : vector<1x1x32xf32> to vector<1x32xf32>
    %341 = arith.addf %318, %336 : vector<8x32xf32>
    %cst_153 = arith.constant dense<0.000000e+00> : vector<8xf32>
    %342 = vector.multi_reduction <add>, %341, %cst_153 [1] : vector<8x32xf32> to vector<8xf32>
    %343 = vector.shape_cast %342 : vector<8xf32> to vector<8x1xf32>
    %cst_154 = arith.constant 3.200000e+01 : f32
    %344 = vector.broadcast %cst_154 : f32 to vector<8x1xf32>
    %345 = arith.divf %343, %344 : vector<8x1xf32>
    %346 = vector.broadcast %345 : vector<8x1xf32> to vector<8x32xf32>
    %347 = arith.subf %341, %346 : vector<8x32xf32>
    %348 = arith.mulf %347, %347 : vector<8x32xf32>
    %cst_155 = arith.constant dense<0.000000e+00> : vector<8xf32>
    %349 = vector.multi_reduction <add>, %348, %cst_155 [1] : vector<8x32xf32> to vector<8xf32>
    %350 = vector.shape_cast %349 : vector<8xf32> to vector<8x1xf32>
    %cst_156 = arith.constant 3.200000e+01 : f32
    %351 = vector.broadcast %cst_156 : f32 to vector<8x1xf32>
    %352 = arith.divf %350, %351 : vector<8x1xf32>
    %cst_157 = arith.constant 9.99999974E-6 : f32
    %353 = vector.broadcast %cst_157 : f32 to vector<8x1xf32>
    %354 = arith.addf %352, %353 : vector<8x1xf32>
    %355 = math.rsqrt %354 : vector<8x1xf32>
    %356 = vector.broadcast %355 : vector<8x1xf32> to vector<8x32xf32>
    %357 = arith.mulf %347, %356 : vector<8x32xf32>
    %358 = vector.broadcast %338 : vector<1x32xf32> to vector<8x32xf32>
    %359 = arith.mulf %357, %358 : vector<8x32xf32>
    %360 = vector.broadcast %340 : vector<1x32xf32> to vector<8x32xf32>
    %361 = arith.addf %359, %360 : vector<8x32xf32>
    %362 = arith.truncf %361 : vector<8x32xf32> to vector<8x32xbf16>
    %c0_158 = arith.constant 0 : index
    %c0_159 = arith.constant 0 : index
    %363 = vector.load %arg20[%c0_158, %c0_159] : memref<32x128xbf16, #tpu.memory_space<vmem>>, vector<32x128xbf16>
    %cst_160 = arith.constant dense<0.000000e+00> : vector<8x128xf32>
    %364 = tpu.matmul %362, %363, %cst_160 {dimension_numbers = #tpu.dot_dimension_numbers<[1], [0], [0], [1], [0, 0, 1, 1], [], []>} : vector<8x32xbf16>, vector<32x128xbf16>, vector<8x128xf32> -> vector<8x128xf32>
    %c0_161 = arith.constant 0 : index
    %c0_162 = arith.constant 0 : index
    %365 = vector.load %arg21[%c0_161, %c0_162] : memref<1x128xf32, #tpu.memory_space<vmem>>, vector<1x128xf32>
    %366 = vector.broadcast %365 : vector<1x128xf32> to vector<8x128xf32>
    %367 = arith.addf %364, %366 : vector<8x128xf32>
    %cst_163 = arith.constant dense<0xFF800000> : vector<8xf32>
    %368 = vector.multi_reduction <maximumf>, %367, %cst_163 [1] : vector<8x128xf32> to vector<8xf32>
    %369 = vector.shape_cast %368 : vector<8xf32> to vector<8x1xf32>
    %370 = vector.broadcast %369 : vector<8x1xf32> to vector<8x128xf32>
    %371 = arith.subf %367, %370 : vector<8x128xf32>
    %372 = math.exp %371 : vector<8x128xf32>
    %cst_164 = arith.constant dense<0.000000e+00> : vector<8xf32>
    %373 = vector.multi_reduction <add>, %372, %cst_164 [1] : vector<8x128xf32> to vector<8xf32>
    %374 = vector.shape_cast %373 : vector<8xf32> to vector<8x1xf32>
    %375 = math.log %374 : vector<8x1xf32>
    %376 = vector.broadcast %375 : vector<8x1xf32> to vector<8x128xf32>
    %377 = arith.subf %371, %376 : vector<8x128xf32>
    %378 = vector.shape_cast %377 : vector<8x128xf32> to vector<1x8x128xf32>
    %c0_165 = arith.constant 0 : index
    %c0_166 = arith.constant 0 : index
    %c0_167 = arith.constant 0 : index
    %379 = vector.load %arg22[%c0_165, %c0_166, %c0_167] : memref<1x8x128xf32, #tpu.memory_space<vmem>>, vector<1x8x128xf32>
    tpu.vector_store %arg22[%c0_165, %c0_166, %c0_167], %378 {strides = array<i32>} : memref<1x8x128xf32, #tpu.memory_space<vmem>>, vector<1x8x128xf32>,
    return
  }
  func.func @transform_0(%arg0: i32) -> (i32, i32, i32) {
    %c0_i32 = arith.constant 0 : i32
    %c0_i32_0 = arith.constant 0 : i32
    %c0_i32_1 = arith.constant 0 : i32
    return %arg0, %c0_i32, %c0_i32_0 : i32, i32, i32
  }
  func.func @transform_1(%arg0: i32) -> (i32, i32, i32) {
    %c0_i32 = arith.constant 0 : i32
    %c0_i32_0 = arith.constant 0 : i32
    %c0_i32_1 = arith.constant 0 : i32
    return %arg0, %c0_i32, %c0_i32_0 : i32, i32, i32
  }
  func.func @transform_2(%arg0: i32) -> (i32, i32) {
    %c0_i32 = arith.constant 0 : i32
    %c0_i32_0 = arith.constant 0 : i32
    %c0_i32_1 = arith.constant 0 : i32
    return %c0_i32, %c0_i32_0 : i32, i32
  }
  func.func @transform_3(%arg0: i32) -> (i32, i32) {
    %c0_i32 = arith.constant 0 : i32
    %c0_i32_0 = arith.constant 0 : i32
    %c0_i32_1 = arith.constant 0 : i32
    return %c0_i32, %c0_i32_0 : i32, i32
  }
  func.func @transform_4(%arg0: i32) -> (i32, i32) {
    %c0_i32 = arith.constant 0 : i32
    %c0_i32_0 = arith.constant 0 : i32
    %c0_i32_1 = arith.constant 0 : i32
    return %c0_i32, %c0_i32_0 : i32, i32
  }
  func.func @transform_5(%arg0: i32) -> (i32, i32) {
    %c0_i32 = arith.constant 0 : i32
    %c0_i32_0 = arith.constant 0 : i32
    %c0_i32_1 = arith.constant 0 : i32
    return %c0_i32, %c0_i32_0 : i32, i32
  }
  func.func @transform_6(%arg0: i32) -> (i32, i32) {
    %c0_i32 = arith.constant 0 : i32
    %c0_i32_0 = arith.constant 0 : i32
    %c0_i32_1 = arith.constant 0 : i32
    return %c0_i32, %c0_i32_0 : i32, i32
  }
  func.func @transform_7(%arg0: i32) -> (i32, i32, i32) {
    %c0_i32 = arith.constant 0 : i32
    %c0_i32_0 = arith.constant 0 : i32
    %c0_i32_1 = arith.constant 0 : i32
    %c0_i32_2 = arith.constant 0 : i32
    return %c0_i32, %c0_i32_0, %c0_i32_1 : i32, i32, i32
  }
  func.func @transform_8(%arg0: i32) -> (i32, i32, i32) {
    %c0_i32 = arith.constant 0 : i32
    %c0_i32_0 = arith.constant 0 : i32
    %c0_i32_1 = arith.constant 0 : i32
    %c0_i32_2 = arith.constant 0 : i32
    return %c0_i32, %c0_i32_0, %c0_i32_1 : i32, i32, i32
  }
  func.func @transform_9(%arg0: i32) -> (i32, i32, i32, i32) {
    %c0_i32 = arith.constant 0 : i32
    %c0_i32_0 = arith.constant 0 : i32
    %c0_i32_1 = arith.constant 0 : i32
    %c0_i32_2 = arith.constant 0 : i32
    %c0_i32_3 = arith.constant 0 : i32
    return %c0_i32, %c0_i32_0, %c0_i32_1, %c0_i32_2 : i32, i32, i32, i32
  }
  func.func @transform_10(%arg0: i32) -> (i32, i32, i32) {
    %c0_i32 = arith.constant 0 : i32
    %c0_i32_0 = arith.constant 0 : i32
    %c0_i32_1 = arith.constant 0 : i32
    %c0_i32_2 = arith.constant 0 : i32
    return %c0_i32, %c0_i32_0, %c0_i32_1 : i32, i32, i32
  }
  func.func @transform_11(%arg0: i32) -> (i32, i32, i32) {
    %c0_i32 = arith.constant 0 : i32
    %c0_i32_0 = arith.constant 0 : i32
    %c0_i32_1 = arith.constant 0 : i32
    %c0_i32_2 = arith.constant 0 : i32
    return %c0_i32, %c0_i32_0, %c0_i32_1 : i32, i32, i32
  }
  func.func @transform_12(%arg0: i32) -> (i32, i32, i32) {
    %c0_i32 = arith.constant 0 : i32
    %c0_i32_0 = arith.constant 0 : i32
    %c0_i32_1 = arith.constant 0 : i32
    %c0_i32_2 = arith.constant 0 : i32
    return %c0_i32, %c0_i32_0, %c0_i32_1 : i32, i32, i32
  }
  func.func @transform_13(%arg0: i32) -> (i32, i32, i32) {
    %c0_i32 = arith.constant 0 : i32
    %c0_i32_0 = arith.constant 0 : i32
    %c0_i32_1 = arith.constant 0 : i32
    %c0_i32_2 = arith.constant 0 : i32
    return %c0_i32, %c0_i32_0, %c0_i32_1 : i32, i32, i32
  }
  func.func @transform_14(%arg0: i32) -> (i32, i32, i32) {
    %c0_i32 = arith.constant 0 : i32
    %c0_i32_0 = arith.constant 0 : i32
    %c0_i32_1 = arith.constant 0 : i32
    %c0_i32_2 = arith.constant 0 : i32
    return %c0_i32, %c0_i32_0, %c0_i32_1 : i32, i32, i32
  }
  func.func @transform_15(%arg0: i32) -> (i32, i32, i32) {
    %c0_i32 = arith.constant 0 : i32
    %c0_i32_0 = arith.constant 0 : i32
    %c0_i32_1 = arith.constant 0 : i32
    %c0_i32_2 = arith.constant 0 : i32
    return %c0_i32, %c0_i32_0, %c0_i32_1 : i32, i32, i32
  }
  func.func @transform_16(%arg0: i32) -> (i32, i32, i32) {
    %c0_i32 = arith.constant 0 : i32
    %c0_i32_0 = arith.constant 0 : i32
    %c0_i32_1 = arith.constant 0 : i32
    %c0_i32_2 = arith.constant 0 : i32
    return %c0_i32, %c0_i32_0, %c0_i32_1 : i32, i32, i32
  }
  func.func @transform_17(%arg0: i32) -> (i32, i32, i32) {
    %c0_i32 = arith.constant 0 : i32
    %c0_i32_0 = arith.constant 0 : i32
    %c0_i32_1 = arith.constant 0 : i32
    %c0_i32_2 = arith.constant 0 : i32
    return %c0_i32, %c0_i32_0, %c0_i32_1 : i32, i32, i32
  }
  func.func @transform_18(%arg0: i32) -> (i32, i32, i32) {
    %c0_i32 = arith.constant 0 : i32
    %c0_i32_0 = arith.constant 0 : i32
    %c0_i32_1 = arith.constant 0 : i32
    %c0_i32_2 = arith.constant 0 : i32
    return %c0_i32, %c0_i32_0, %c0_i32_1 : i32, i32, i32
  }
  func.func @transform_19(%arg0: i32) -> (i32, i32) {
    %c0_i32 = arith.constant 0 : i32
    %c0_i32_0 = arith.constant 0 : i32
    %c0_i32_1 = arith.constant 0 : i32
    return %c0_i32, %c0_i32_0 : i32, i32
  }
  func.func @transform_20(%arg0: i32) -> (i32, i32) {
    %c0_i32 = arith.constant 0 : i32
    %c0_i32_0 = arith.constant 0 : i32
    %c0_i32_1 = arith.constant 0 : i32
    return %c0_i32, %c0_i32_0 : i32, i32
  }
  func.func @transform_21(%arg0: i32) -> (i32, i32, i32) {
    %c0_i32 = arith.constant 0 : i32
    %c0_i32_0 = arith.constant 0 : i32
    %c0_i32_1 = arith.constant 0 : i32
    return %arg0, %c0_i32, %c0_i32_0 : i32, i32, i32
  }
}

</mosaic_0001>

<llo_original>
// kernel: cnn_transformer_forward.1
$region0: #{cnn_transformer_forward.1}
  #allocation0 [shape = 'u32[]', space=smem, size = 0x4, offset = 0x4, fixed_abs, tag = 'smem constant byte address 0x4 - core index']
  #allocation1 [shape = 'u32[144,128]{1,0:T(1,128)}', space=vmem, size = 0x12000, scoped, tag = 'internal scratch']
  %s0 = inlined_call_operand.vmem [shape: f32[2,8,1284], index: 0, kind: input, shape index: {}]
  %s1 = inlined_call_operand.vmem [shape: f32[2,8,32], index: 1, kind: input, shape index: {}]
  %s2 = inlined_call_operand.vmem [shape: bf16[1284,32], index: 2, kind: input, shape index: {}]
  %s3 = inlined_call_operand.vmem [shape: f32[1,32], index: 3, kind: input, shape index: {}]
  %s4 = inlined_call_operand.vmem [shape: bf16[32,32], index: 4, kind: input, shape index: {}]
  %s5 = inlined_call_operand.vmem [shape: bf16[32,32], index: 5, kind: input, shape index: {}]
  %s6 = inlined_call_operand.vmem [shape: f32[1,32], index: 6, kind: input, shape index: {}]
  %s7 = inlined_call_operand.vmem [shape: bf16[2,32,96], index: 7, kind: input, shape index: {}]
  %s8 = inlined_call_operand.vmem [shape: f32[2,1,96], index: 8, kind: input, shape index: {}]
  %s9 = inlined_call_operand.vmem [shape: bf16[2,4,8,32], index: 9, kind: input, shape index: {}]
  %s10 = inlined_call_operand.vmem [shape: f32[2,1,32], index: 10, kind: input, shape index: {}]
  %s11 = inlined_call_operand.vmem [shape: f32[2,1,32], index: 11, kind: input, shape index: {}]
  %s12 = inlined_call_operand.vmem [shape: f32[2,1,32], index: 12, kind: input, shape index: {}]
  %s13 = inlined_call_operand.vmem [shape: bf16[2,32,64], index: 13, kind: input, shape index: {}]
  %s14 = inlined_call_operand.vmem [shape: f32[2,1,64], index: 14, kind: input, shape index: {}]
  %s15 = inlined_call_operand.vmem [shape: bf16[2,64,32], index: 15, kind: input, shape index: {}]
  %s16 = inlined_call_operand.vmem [shape: f32[2,1,32], index: 16, kind: input, shape index: {}]
  %s17 = inlined_call_operand.vmem [shape: f32[2,1,32], index: 17, kind: input, shape index: {}]
  %s18 = inlined_call_operand.vmem [shape: f32[2,1,32], index: 18, kind: input, shape index: {}]
  %s19 = inlined_call_operand.vmem [shape: bf16[32,128], index: 19, kind: input, shape index: {}]
  %s20 = inlined_call_operand.vmem [shape: f32[1,128], index: 20, kind: input, shape index: {}]
  %s21 = inlined_call_operand.vmem [shape: f32[2,8,128], index: 21, kind: output, shape index: {}]
  %s22 = sld [smem:[#allocation0]]
  $region117: #{cnn_transformer_forward.1} parent=0
    _
  %s24 = ssub.s32 1, %s22
  %s25 = scalar_select 0, %s24, %s22
  loop: start=0, step=1, limit=4
  $region2: #{cnn_transformer_forward.1} parent=0 // loop_pre_header
    _
  $region3: #{cnn_transformer_forward.1} parent=0 // loop_header
    %s27 = sphi 0, %s31
    %p28 = scmp.ge.s32.totalorder %s27, 4
    %s37 = sphi 0, %s39
    %s40 = sphi 0, %s37
    %s41 = sphi 0, %s40
    %s57 = sphi 0, %s41
    %s63 = sphi 0, %s65
    %s66 = sphi 0, %s63
    %s67 = sphi 0, %s66
    %s83 = sphi 0, %s67
    %s87 = sphi 0, %s87
    %s89 = sphi 0, %s87
    %s90 = sphi 0, %s89
    %s104 = sphi 0, %s90
    %s108 = sphi 0, %s108
    %s110 = sphi 0, %s108
    %s111 = sphi 0, %s110
    %s125 = sphi 0, %s111
    %s129 = sphi 0, %s129
    %s131 = sphi 0, %s129
    %s132 = sphi 0, %s131
    %s146 = sphi 0, %s132
    %s150 = sphi 0, %s150
    %s152 = sphi 0, %s150
    %s153 = sphi 0, %s152
    %s167 = sphi 0, %s153
    %s171 = sphi 0, %s171
    %s173 = sphi 0, %s171
    %s174 = sphi 0, %s173
    %s188 = sphi 0, %s174
    %s192 = sphi 0, %s192
    %s194 = sphi 0, %s192
    %s195 = sphi 0, %s194
    %s209 = sphi 0, %s195
    %s213 = sphi 0, %s213
    %s215 = sphi 0, %s213
    %s216 = sphi 0, %s215
    %s230 = sphi 0, %s216
    %s234 = sphi 0, %s234
    %s236 = sphi 0, %s234
    %s237 = sphi 0, %s236
    %s251 = sphi 0, %s237
    %s255 = sphi 0, %s255
    %s257 = sphi 0, %s255
    %s258 = sphi 0, %s257
    %s272 = sphi 0, %s258
    %s276 = sphi 0, %s276
    %s278 = sphi 0, %s276
    %s279 = sphi 0, %s278
    %s293 = sphi 0, %s279
    %s297 = sphi 0, %s297
    %s299 = sphi 0, %s297
    %s300 = sphi 0, %s299
    %s314 = sphi 0, %s300
    %s318 = sphi 0, %s318
    %s320 = sphi 0, %s318
    %s321 = sphi 0, %s320
    %s335 = sphi 0, %s321
    %s339 = sphi 0, %s339
    %s341 = sphi 0, %s339
    %s342 = sphi 0, %s341
    %s356 = sphi 0, %s342
    %s360 = sphi 0, %s360
    %s362 = sphi 0, %s360
    %s363 = sphi 0, %s362
    %s377 = sphi 0, %s363
    %s381 = sphi 0, %s381
    %s383 = sphi 0, %s381
    %s384 = sphi 0, %s383
    %s398 = sphi 0, %s384
    %s402 = sphi 0, %s402
    %s404 = sphi 0, %s402
    %s405 = sphi 0, %s404
    %s419 = sphi 0, %s405
    %s423 = sphi 0, %s423
    %s425 = sphi 0, %s423
    %s426 = sphi 0, %s425
    %s440 = sphi 0, %s426
    %s444 = sphi 0, %s444
    %s446 = sphi 0, %s444
    %s447 = sphi 0, %s446
    %s461 = sphi 0, %s447
    %s465 = sphi 0, %s465
    %s467 = sphi 0, %s465
    %s468 = sphi 0, %s467
    %s482 = sphi 0, %s468
    %s488 = sphi 0, %s490
    %s491 = sphi 0, %s488
    %s492 = sphi 0, %s491
    %s508 = sphi 0, %s492
  $region4: #{cnn_transformer_forward.1} parent=0 // loop_header_branch
    %30 = sbr.rel (%p28) target = $region8
  $region5: #{cnn_transformer_forward.1} parent=0 // loop_body
    %s32 = ssub.s32 %s27, 1
    %s33 = ssub.s32 %s27, 2
    %s34 = sadd.s32 %s27, 1
    %s35 = ssub.s32 %s27, %s34
    %p36 = scmp.eq.s32.totalorder %s35, 0
    %s38 = sadd.s32 %s37, 1
    %s39 = scalar_select %p36, %s37, %s38
    %p42 = pneg %p36
    %p43 = scmp.eq.s32.totalorder %s27, 1
    %p44 = por %p42, %p43
    %p45 = scmp.ne.s32.totalorder %s37, %s40
    %p46 = scmp.eq.s32.totalorder %s27, 0
    %p47 = por %p45, %p46
    %p48 = scmp.ne.s32.totalorder %s37, %s40
    %p49 = scmp.eq.s32.totalorder %s32, 1
    %p50 = por %p48, %p49
    %p51 = scmp.ne.s32.totalorder %s40, %s41
    %p52 = scmp.eq.s32.totalorder %s32, 0
    %p53 = por %p51, %p52
    %p54 = scmp.ne.s32.totalorder %s40, %s41
    %p55 = scmp.eq.s32.totalorder %s33, 1
    %p56 = por %p54, %p55
    %p58 = scmp.ne.s32.totalorder %s41, %s57
    %p59 = scmp.eq.s32.totalorder %s33, 0
    %p60 = por %p58, %p59
    %s61 = ssub.s32 %s27, %s34
    %p62 = scmp.eq.s32.totalorder %s61, 0
    %s64 = sadd.s32 %s63, 1
    %s65 = scalar_select %p62, %s63, %s64
    %p68 = pneg %p62
    %p69 = scmp.eq.s32.totalorder %s27, 1
    %p70 = por %p68, %p69
    %p71 = scmp.ne.s32.totalorder %s63, %s66
    %p72 = scmp.eq.s32.totalorder %s27, 0
    %p73 = por %p71, %p72
    %p74 = scmp.ne.s32.totalorder %s63, %s66
    %p75 = scmp.eq.s32.totalorder %s32, 1
    %p76 = por %p74, %p75
    %p77 = scmp.ne.s32.totalorder %s66, %s67
    %p78 = scmp.eq.s32.totalorder %s32, 0
    %p79 = por %p77, %p78
    %p80 = scmp.ne.s32.totalorder %s66, %s67
    %p81 = scmp.eq.s32.totalorder %s33, 1
    %p82 = por %p80, %p81
    %p84 = scmp.ne.s32.totalorder %s67, %s83
    %p85 = scmp.eq.s32.totalorder %s33, 0
    %p86 = por %p84, %p85
    %s88 = sadd.s32 %s87, 1
    %p91 = scmp.eq.s32.totalorder %s27, 1
    %p92 = scmp.ne.s32.totalorder %s87, %s89
    %p93 = scmp.eq.s32.totalorder %s27, 0
    %p94 = por %p92, %p93
    %p95 = scmp.ne.s32.totalorder %s87, %s89
    %p96 = scmp.eq.s32.totalorder %s32, 1
    %p97 = por %p95, %p96
    %p98 = scmp.ne.s32.totalorder %s89, %s90
    %p99 = scmp.eq.s32.totalorder %s32, 0
    %p100 = por %p98, %p99
    %p101 = scmp.ne.s32.totalorder %s89, %s90
    %p102 = scmp.eq.s32.totalorder %s33, 1
    %p103 = por %p101, %p102
    %p105 = scmp.ne.s32.totalorder %s90, %s104
    %p106 = scmp.eq.s32.totalorder %s33, 0
    %p107 = por %p105, %p106
    %s109 = sadd.s32 %s108, 1
    %p112 = scmp.eq.s32.totalorder %s27, 1
    %p113 = scmp.ne.s32.totalorder %s108, %s110
    %p114 = scmp.eq.s32.totalorder %s27, 0
    %p115 = por %p113, %p114
    %p116 = scmp.ne.s32.totalorder %s108, %s110
    %p117 = scmp.eq.s32.totalorder %s32, 1
    %p118 = por %p116, %p117
    %p119 = scmp.ne.s32.totalorder %s110, %s111
    %p120 = scmp.eq.s32.totalorder %s32, 0
    %p121 = por %p119, %p120
    %p122 = scmp.ne.s32.totalorder %s110, %s111
    %p123 = scmp.eq.s32.totalorder %s33, 1
    %p124 = por %p122, %p123
    %p126 = scmp.ne.s32.totalorder %s111, %s125
    %p127 = scmp.eq.s32.totalorder %s33, 0
    %p128 = por %p126, %p127
    %s130 = sadd.s32 %s129, 1
    %p133 = scmp.eq.s32.totalorder %s27, 1
    %p134 = scmp.ne.s32.totalorder %s129, %s131
    %p135 = scmp.eq.s32.totalorder %s27, 0
    %p136 = por %p134, %p135
    %p137 = scmp.ne.s32.totalorder %s129, %s131
    %p138 = scmp.eq.s32.totalorder %s32, 1
    %p139 = por %p137, %p138
    %p140 = scmp.ne.s32.totalorder %s131, %s132
    %p141 = scmp.eq.s32.totalorder %s32, 0
    %p142 = por %p140, %p141
    %p143 = scmp.ne.s32.totalorder %s131, %s132
    %p144 = scmp.eq.s32.totalorder %s33, 1
    %p145 = por %p143, %p144
    %p147 = scmp.ne.s32.totalorder %s132, %s146
    %p148 = scmp.eq.s32.totalorder %s33, 0
    %p149 = por %p147, %p148
    %s151 = sadd.s32 %s150, 1
    %p154 = scmp.eq.s32.totalorder %s27, 1
    %p155 = scmp.ne.s32.totalorder %s150, %s152
    %p156 = scmp.eq.s32.totalorder %s27, 0
    %p157 = por %p155, %p156
    %p158 = scmp.ne.s32.totalorder %s150, %s152
    %p159 = scmp.eq.s32.totalorder %s32, 1
    %p160 = por %p158, %p159
    %p161 = scmp.ne.s32.totalorder %s152, %s153
    %p162 = scmp.eq.s32.totalorder %s32, 0
    %p163 = por %p161, %p162
    %p164 = scmp.ne.s32.totalorder %s152, %s153
    %p165 = scmp.eq.s32.totalorder %s33, 1
    %p166 = por %p164, %p165
    %p168 = scmp.ne.s32.totalorder %s153, %s167
    %p169 = scmp.eq.s32.totalorder %s33, 0
    %p170 = por %p168, %p169
    %s172 = sadd.s32 %s171, 1
    %p175 = scmp.eq.s32.totalorder %s27, 1
    %p176 = scmp.ne.s32.totalorder %s171, %s173
    %p177 = scmp.eq.s32.totalorder %s27, 0
    %p178 = por %p176, %p177
    %p179 = scmp.ne.s32.totalorder %s171, %s173
    %p180 = scmp.eq.s32.totalorder %s32, 1
    %p181 = por %p179, %p180
    %p182 = scmp.ne.s32.totalorder %s173, %s174
    %p183 = scmp.eq.s32.totalorder %s32, 0
    %p184 = por %p182, %p183
    %p185 = scmp.ne.s32.totalorder %s173, %s174
    %p186 = scmp.eq.s32.totalorder %s33, 1
    %p187 = por %p185, %p186
    %p189 = scmp.ne.s32.totalorder %s174, %s188
    %p190 = scmp.eq.s32.totalorder %s33, 0
    %p191 = por %p189, %p190
    %s193 = sadd.s32 %s192, 1
    %p196 = scmp.eq.s32.totalorder %s27, 1
    %p197 = scmp.ne.s32.totalorder %s192, %s194
    %p198 = scmp.eq.s32.totalorder %s27, 0
    %p199 = por %p197, %p198
    %p200 = scmp.ne.s32.totalorder %s192, %s194
    %p201 = scmp.eq.s32.totalorder %s32, 1
    %p202 = por %p200, %p201
    %p203 = scmp.ne.s32.totalorder %s194, %s195
    %p204 = scmp.eq.s32.totalorder %s32, 0
    %p205 = por %p203, %p204
    %p206 = scmp.ne.s32.totalorder %s194, %s195
    %p207 = scmp.eq.s32.totalorder %s33, 1
    %p208 = por %p206, %p207
    %p210 = scmp.ne.s32.totalorder %s195, %s209
    %p211 = scmp.eq.s32.totalorder %s33, 0
    %p212 = por %p210, %p211
    %s214 = sadd.s32 %s213, 1
    %p217 = scmp.eq.s32.totalorder %s27, 1
    %p218 = scmp.ne.s32.totalorder %s213, %s215
    %p219 = scmp.eq.s32.totalorder %s27, 0
    %p220 = por %p218, %p219
    %p221 = scmp.ne.s32.totalorder %s213, %s215
    %p222 = scmp.eq.s32.totalorder %s32, 1
    %p223 = por %p221, %p222
    %p224 = scmp.ne.s32.totalorder %s215, %s216
    %p225 = scmp.eq.s32.totalorder %s32, 0
    %p226 = por %p224, %p225
    %p227 = scmp.ne.s32.totalorder %s215, %s216
    %p228 = scmp.eq.s32.totalorder %s33, 1
    %p229 = por %p227, %p228
    %p231 = scmp.ne.s32.totalorder %s216, %s230
    %p232 = scmp.eq.s32.totalorder %s33, 0
    %p233 = por %p231, %p232
    %s235 = sadd.s32 %s234, 1
    %p238 = scmp.eq.s32.totalorder %s27, 1
    %p239 = scmp.ne.s32.totalorder %s234, %s236
    %p240 = scmp.eq.s32.totalorder %s27, 0
    %p241 = por %p239, %p240
    %p242 = scmp.ne.s32.totalorder %s234, %s236
    %p243 = scmp.eq.s32.totalorder %s32, 1
    %p244 = por %p242, %p243
    %p245 = scmp.ne.s32.totalorder %s236, %s237
    %p246 = scmp.eq.s32.totalorder %s32, 0
    %p247 = por %p245, %p246
    %p248 = scmp.ne.s32.totalorder %s236, %s237
    %p249 = scmp.eq.s32.totalorder %s33, 1
    %p250 = por %p248, %p249
    %p252 = scmp.ne.s32.totalorder %s237, %s251
    %p253 = scmp.eq.s32.totalorder %s33, 0
    %p254 = por %p252, %p253
    %s256 = sadd.s32 %s255, 1
    %p259 = scmp.eq.s32.totalorder %s27, 1
    %p260 = scmp.ne.s32.totalorder %s255, %s257
    %p261 = scmp.eq.s32.totalorder %s27, 0
    %p262 = por %p260, %p261
    %p263 = scmp.ne.s32.totalorder %s255, %s257
    %p264 = scmp.eq.s32.totalorder %s32, 1
    %p265 = por %p263, %p264
    %p266 = scmp.ne.s32.totalorder %s257, %s258
    %p267 = scmp.eq.s32.totalorder %s32, 0
    %p268 = por %p266, %p267
    %p269 = scmp.ne.s32.totalorder %s257, %s258
    %p270 = scmp.eq.s32.totalorder %s33, 1
    %p271 = por %p269, %p270
    %p273 = scmp.ne.s32.totalorder %s258, %s272
    %p274 = scmp.eq.s32.totalorder %s33, 0
    %p275 = por %p273, %p274
    %s277 = sadd.s32 %s276, 1
    %p280 = scmp.eq.s32.totalorder %s27, 1
    %p281 = scmp.ne.s32.totalorder %s276, %s278
    %p282 = scmp.eq.s32.totalorder %s27, 0
    %p283 = por %p281, %p282
    %p284 = scmp.ne.s32.totalorder %s276, %s278
    %p285 = scmp.eq.s32.totalorder %s32, 1
    %p286 = por %p284, %p285
    %p287 = scmp.ne.s32.totalorder %s278, %s279
    %p288 = scmp.eq.s32.totalorder %s32, 0
    %p289 = por %p287, %p288
    %p290 = scmp.ne.s32.totalorder %s278, %s279
    %p291 = scmp.eq.s32.totalorder %s33, 1
    %p292 = por %p290, %p291
    %p294 = scmp.ne.s32.totalorder %s279, %s293
    %p295 = scmp.eq.s32.totalorder %s33, 0
    %p296 = por %p294, %p295
    %s298 = sadd.s32 %s297, 1
    %p301 = scmp.eq.s32.totalorder %s27, 1
    %p302 = scmp.ne.s32.totalorder %s297, %s299
    %p303 = scmp.eq.s32.totalorder %s27, 0
    %p304 = por %p302, %p303
    %p305 = scmp.ne.s32.totalorder %s297, %s299
    %p306 = scmp.eq.s32.totalorder %s32, 1
    %p307 = por %p305, %p306
    %p308 = scmp.ne.s32.totalorder %s299, %s300
    %p309 = scmp.eq.s32.totalorder %s32, 0
    %p310 = por %p308, %p309
    %p311 = scmp.ne.s32.totalorder %s299, %s300
    %p312 = scmp.eq.s32.totalorder %s33, 1
    %p313 = por %p311, %p312
    %p315 = scmp.ne.s32.totalorder %s300, %s314
    %p316 = scmp.eq.s32.totalorder %s33, 0
    %p317 = por %p315, %p316
    %s319 = sadd.s32 %s318, 1
    %p322 = scmp.eq.s32.totalorder %s27, 1
    %p323 = scmp.ne.s32.totalorder %s318, %s320
    %p324 = scmp.eq.s32.totalorder %s27, 0
    %p325 = por %p323, %p324
    %p326 = scmp.ne.s32.totalorder %s318, %s320
    %p327 = scmp.eq.s32.totalorder %s32, 1
    %p328 = por %p326, %p327
    %p329 = scmp.ne.s32.totalorder %s320, %s321
    %p330 = scmp.eq.s32.totalorder %s32, 0
    %p331 = por %p329, %p330
    %p332 = scmp.ne.s32.totalorder %s320, %s321
    %p333 = scmp.eq.s32.totalorder %s33, 1
    %p334 = por %p332, %p333
    %p336 = scmp.ne.s32.totalorder %s321, %s335
    %p337 = scmp.eq.s32.totalorder %s33, 0
    %p338 = por %p336, %p337
    %s340 = sadd.s32 %s339, 1
    %p343 = scmp.eq.s32.totalorder %s27, 1
    %p344 = scmp.ne.s32.totalorder %s339, %s341
    %p345 = scmp.eq.s32.totalorder %s27, 0
    %p346 = por %p344, %p345
    %p347 = scmp.ne.s32.totalorder %s339, %s341
    %p348 = scmp.eq.s32.totalorder %s32, 1
    %p349 = por %p347, %p348
    %p350 = scmp.ne.s32.totalorder %s341, %s342
    %p351 = scmp.eq.s32.totalorder %s32, 0
    %p352 = por %p350, %p351
    %p353 = scmp.ne.s32.totalorder %s341, %s342
    %p354 = scmp.eq.s32.totalorder %s33, 1
    %p355 = por %p353, %p354
    %p357 = scmp.ne.s32.totalorder %s342, %s356
    %p358 = scmp.eq.s32.totalorder %s33, 0
    %p359 = por %p357, %p358
    %s361 = sadd.s32 %s360, 1
    %p364 = scmp.eq.s32.totalorder %s27, 1
    %p365 = scmp.ne.s32.totalorder %s360, %s362
    %p366 = scmp.eq.s32.totalorder %s27, 0
    %p367 = por %p365, %p366
    %p368 = scmp.ne.s32.totalorder %s360, %s362
    %p369 = scmp.eq.s32.totalorder %s32, 1
    %p370 = por %p368, %p369
    %p371 = scmp.ne.s32.totalorder %s362, %s363
    %p372 = scmp.eq.s32.totalorder %s32, 0
    %p373 = por %p371, %p372
    %p374 = scmp.ne.s32.totalorder %s362, %s363
    %p375 = scmp.eq.s32.totalorder %s33, 1
    %p376 = por %p374, %p375
    %p378 = scmp.ne.s32.totalorder %s363, %s377
    %p379 = scmp.eq.s32.totalorder %s33, 0
    %p380 = por %p378, %p379
    %s382 = sadd.s32 %s381, 1
    %p385 = scmp.eq.s32.totalorder %s27, 1
    %p386 = scmp.ne.s32.totalorder %s381, %s383
    %p387 = scmp.eq.s32.totalorder %s27, 0
    %p388 = por %p386, %p387
    %p389 = scmp.ne.s32.totalorder %s381, %s383
    %p390 = scmp.eq.s32.totalorder %s32, 1
    %p391 = por %p389, %p390
    %p392 = scmp.ne.s32.totalorder %s383, %s384
    %p393 = scmp.eq.s32.totalorder %s32, 0
    %p394 = por %p392, %p393
    %p395 = scmp.ne.s32.totalorder %s383, %s384
    %p396 = scmp.eq.s32.totalorder %s33, 1
    %p397 = por %p395, %p396
    %p399 = scmp.ne.s32.totalorder %s384, %s398
    %p400 = scmp.eq.s32.totalorder %s33, 0
    %p401 = por %p399, %p400
    %s403 = sadd.s32 %s402, 1
    %p406 = scmp.eq.s32.totalorder %s27, 1
    %p407 = scmp.ne.s32.totalorder %s402, %s404
    %p408 = scmp.eq.s32.totalorder %s27, 0
    %p409 = por %p407, %p408
    %p410 = scmp.ne.s32.totalorder %s402, %s404
    %p411 = scmp.eq.s32.totalorder %s32, 1
    %p412 = por %p410, %p411
    %p413 = scmp.ne.s32.totalorder %s404, %s405
    %p414 = scmp.eq.s32.totalorder %s32, 0
    %p415 = por %p413, %p414
    %p416 = scmp.ne.s32.totalorder %s404, %s405
    %p417 = scmp.eq.s32.totalorder %s33, 1
    %p418 = por %p416, %p417
    %p420 = scmp.ne.s32.totalorder %s405, %s419
    %p421 = scmp.eq.s32.totalorder %s33, 0
    %p422 = por %p420, %p421
    %s424 = sadd.s32 %s423, 1
    %p427 = scmp.eq.s32.totalorder %s27, 1
    %p428 = scmp.ne.s32.totalorder %s423, %s425
    %p429 = scmp.eq.s32.totalorder %s27, 0
    %p430 = por %p428, %p429
    %p431 = scmp.ne.s32.totalorder %s423, %s425
    %p432 = scmp.eq.s32.totalorder %s32, 1
    %p433 = por %p431, %p432
    %p434 = scmp.ne.s32.totalorder %s425, %s426
    %p435 = scmp.eq.s32.totalorder %s32, 0
    %p436 = por %p434, %p435
    %p437 = scmp.ne.s32.totalorder %s425, %s426
    %p438 = scmp.eq.s32.totalorder %s33, 1
    %p439 = por %p437, %p438
    %p441 = scmp.ne.s32.totalorder %s426, %s440
    %p442 = scmp.eq.s32.totalorder %s33, 0
    %p443 = por %p441, %p442
    %s445 = sadd.s32 %s444, 1
    %p448 = scmp.eq.s32.totalorder %s27, 1
    %p449 = scmp.ne.s32.totalorder %s444, %s446
    %p450 = scmp.eq.s32.totalorder %s27, 0
    %p451 = por %p449, %p450
    %p452 = scmp.ne.s32.totalorder %s444, %s446
    %p453 = scmp.eq.s32.totalorder %s32, 1
    %p454 = por %p452, %p453
    %p455 = scmp.ne.s32.totalorder %s446, %s447
    %p456 = scmp.eq.s32.totalorder %s32, 0
    %p457 = por %p455, %p456
    %p458 = scmp.ne.s32.totalorder %s446, %s447
    %p459 = scmp.eq.s32.totalorder %s33, 1
    %p460 = por %p458, %p459
    %p462 = scmp.ne.s32.totalorder %s447, %s461
    %p463 = scmp.eq.s32.totalorder %s33, 0
    %p464 = por %p462, %p463
    %s466 = sadd.s32 %s465, 1
    %p469 = scmp.eq.s32.totalorder %s27, 1
    %p470 = scmp.ne.s32.totalorder %s465, %s467
    %p471 = scmp.eq.s32.totalorder %s27, 0
    %p472 = por %p470, %p471
    %p473 = scmp.ne.s32.totalorder %s465, %s467
    %p474 = scmp.eq.s32.totalorder %s32, 1
    %p475 = por %p473, %p474
    %p476 = scmp.ne.s32.totalorder %s467, %s468
    %p477 = scmp.eq.s32.totalorder %s32, 0
    %p478 = por %p476, %p477
    %p479 = scmp.ne.s32.totalorder %s467, %s468
    %p480 = scmp.eq.s32.totalorder %s33, 1
    %p481 = por %p479, %p480
    %p483 = scmp.ne.s32.totalorder %s468, %s482
    %p484 = scmp.eq.s32.totalorder %s33, 0
    %p485 = por %p483, %p484
    %s486 = ssub.s32 %s27, %s34
    %p487 = scmp.eq.s32.totalorder %s486, 0
    %s489 = sadd.s32 %s488, 1
    %s490 = scalar_select %p487, %s488, %s489
    %p493 = pneg %p487
    %p494 = scmp.eq.s32.totalorder %s27, 1
    %p495 = por %p493, %p494
    %p496 = scmp.ne.s32.totalorder %s488, %s491
    %p497 = scmp.eq.s32.totalorder %s27, 0
    %p498 = por %p496, %p497
    %p499 = scmp.ne.s32.totalorder %s488, %s491
    %p500 = scmp.eq.s32.totalorder %s32, 1
    %p501 = por %p499, %p500
    %p502 = scmp.ne.s32.totalorder %s491, %s492
    %p503 = scmp.eq.s32.totalorder %s32, 0
    %p504 = por %p502, %p503
    %p505 = scmp.ne.s32.totalorder %s491, %s492
    %p506 = scmp.eq.s32.totalorder %s33, 1
    %p507 = por %p505, %p506
    %p509 = scmp.ne.s32.totalorder %s492, %s508
    %p510 = scmp.eq.s32.totalorder %s33, 0
    %p511 = por %p509, %p510
    %p512 = scmp.le.s32.totalorder 1, %s27
    %p513 = scmp.lt.s32.totalorder %s27, 3
    %p514 = pnand %p512, %p513
    %p515 = pneg %p514
    // Predicated region
    $region9: #{cnn_transformer_forward.1} parent=5 // pred_check
      _
    $region10: #{cnn_transformer_forward.1} parent=5 // pred_check_branch
      %517 = sbr.rel (%p514) target = $region12
    $region11: #{cnn_transformer_forward.1} parent=5 // pred_region
      %s518 = ssub.s32 %s27, 1
      // Predicated region
      $region13: #{cnn_transformer_forward.1} parent=11 // pred_check
        %p519 = pneg %p100
      $region14: #{cnn_transformer_forward.1} parent=11 // pred_check_branch
        %521 = sbr.rel (%p519) target = $region16
      $region15: #{cnn_transformer_forward.1} parent=11 // pred_region
        _
      $region16: #{cnn_transformer_forward.1} parent=11 // pred_fallthru
        _
      // Predicated region
      $region17: #{cnn_transformer_forward.1} parent=11 // pred_check
        %p522 = pneg %p121
      $region18: #{cnn_transformer_forward.1} parent=11 // pred_check_branch
        %524 = sbr.rel (%p522) target = $region20
      $region19: #{cnn_transformer_forward.1} parent=11 // pred_region
        _
      $region20: #{cnn_transformer_forward.1} parent=11 // pred_fallthru
        _
      // Predicated region
      $region21: #{cnn_transformer_forward.1} parent=11 // pred_check
        %p525 = pneg %p142
      $region22: #{cnn_transformer_forward.1} parent=11 // pred_check_branch
        %527 = sbr.rel (%p525) target = $region24
      $region23: #{cnn_transformer_forward.1} parent=11 // pred_region
        _
      $region24: #{cnn_transformer_forward.1} parent=11 // pred_fallthru
        _
      // Predicated region
      $region25: #{cnn_transformer_forward.1} parent=11 // pred_check
        %p528 = pneg %p163
      $region26: #{cnn_transformer_forward.1} parent=11 // pred_check_branch
        %530 = sbr.rel (%p528) target = $region28
      $region27: #{cnn_transformer_forward.1} parent=11 // pred_region
        _
      $region28: #{cnn_transformer_forward.1} parent=11 // pred_fallthru
        _
      // Predicated region
      $region29: #{cnn_transformer_forward.1} parent=11 // pred_check
        %p531 = pneg %p184
      $region30: #{cnn_transformer_forward.1} parent=11 // pred_check_branch
        %533 = sbr.rel (%p531) target = $region32
      $region31: #{cnn_transformer_forward.1} parent=11 // pred_region
        _
      $region32: #{cnn_transformer_forward.1} parent=11 // pred_fallthru
        _
      // Predicated region
      $region33: #{cnn_transformer_forward.1} parent=11 // pred_check
        %p534 = pneg %p205
      $region34: #{cnn_transformer_forward.1} parent=11 // pred_check_branch
        %536 = sbr.rel (%p534) target = $region36
      $region35: #{cnn_transformer_forward.1} parent=11 // pred_region
        _
      $region36: #{cnn_transformer_forward.1} parent=11 // pred_fallthru
        _
      // Predicated region
      $region37: #{cnn_transformer_forward.1} parent=11 // pred_check
        %p537 = pneg %p226
      $region38: #{cnn_transformer_forward.1} parent=11 // pred_check_branch
        %539 = sbr.rel (%p537) target = $region40
      $region39: #{cnn_transformer_forward.1} parent=11 // pred_region
        _
      $region40: #{cnn_transformer_forward.1} parent=11 // pred_fallthru
        _
      // Predicated region
      $region41: #{cnn_transformer_forward.1} parent=11 // pred_check
        %p540 = pneg %p247
      $region42: #{cnn_transformer_forward.1} parent=11 // pred_check_branch
        %542 = sbr.rel (%p540) target = $region44
      $region43: #{cnn_transformer_forward.1} parent=11 // pred_region
        _
      $region44: #{cnn_transformer_forward.1} parent=11 // pred_fallthru
        _
      // Predicated region
      $region45: #{cnn_transformer_forward.1} parent=11 // pred_check
        %p543 = pneg %p268
      $region46: #{cnn_transformer_forward.1} parent=11 // pred_check_branch
        %545 = sbr.rel (%p543) target = $region48
      $region47: #{cnn_transformer_forward.1} parent=11 // pred_region
        _
      $region48: #{cnn_transformer_forward.1} parent=11 // pred_fallthru
        _
      // Predicated region
      $region49: #{cnn_transformer_forward.1} parent=11 // pred_check
        %p546 = pneg %p289
      $region50: #{cnn_transformer_forward.1} parent=11 // pred_check_branch
        %548 = sbr.rel (%p546) target = $region52
      $region51: #{cnn_transformer_forward.1} parent=11 // pred_region
        _
      $region52: #{cnn_transformer_forward.1} parent=11 // pred_fallthru
        _
      // Predicated region
      $region53: #{cnn_transformer_forward.1} parent=11 // pred_check
        %p549 = pneg %p310
      $region54: #{cnn_transformer_forward.1} parent=11 // pred_check_branch
        %551 = sbr.rel (%p549) target = $region56
      $region55: #{cnn_transformer_forward.1} parent=11 // pred_region
        _
      $region56: #{cnn_transformer_forward.1} parent=11 // pred_fallthru
        _
      // Predicated region
      $region57: #{cnn_transformer_forward.1} parent=11 // pred_check
        %p552 = pneg %p331
      $region58: #{cnn_transformer_forward.1} parent=11 // pred_check_branch
        %554 = sbr.rel (%p552) target = $region60
      $region59: #{cnn_transformer_forward.1} parent=11 // pred_region
        _
      $region60: #{cnn_transformer_forward.1} parent=11 // pred_fallthru
        _
      // Predicated region
      $region61: #{cnn_transformer_forward.1} parent=11 // pred_check
        %p555 = pneg %p352
      $region62: #{cnn_transformer_forward.1} parent=11 // pred_check_branch
        %557 = sbr.rel (%p555) target = $region64
      $region63: #{cnn_transformer_forward.1} parent=11 // pred_region
        _
      $region64: #{cnn_transformer_forward.1} parent=11 // pred_fallthru
        _
      // Predicated region
      $region65: #{cnn_transformer_forward.1} parent=11 // pred_check
        %p558 = pneg %p373
      $region66: #{cnn_transformer_forward.1} parent=11 // pred_check_branch
        %560 = sbr.rel (%p558) target = $region68
      $region67: #{cnn_transformer_forward.1} parent=11 // pred_region
        _
      $region68: #{cnn_transformer_forward.1} parent=11 // pred_fallthru
        _
      // Predicated region
      $region69: #{cnn_transformer_forward.1} parent=11 // pred_check
        %p561 = pneg %p394
      $region70: #{cnn_transformer_forward.1} parent=11 // pred_check_branch
        %563 = sbr.rel (%p561) target = $region72
      $region71: #{cnn_transformer_forward.1} parent=11 // pred_region
        _
      $region72: #{cnn_transformer_forward.1} parent=11 // pred_fallthru
        _
      // Predicated region
      $region73: #{cnn_transformer_forward.1} parent=11 // pred_check
        %p564 = pneg %p415
      $region74: #{cnn_transformer_forward.1} parent=11 // pred_check_branch
        %566 = sbr.rel (%p564) target = $region76
      $region75: #{cnn_transformer_forward.1} parent=11 // pred_region
        _
      $region76: #{cnn_transformer_forward.1} parent=11 // pred_fallthru
        _
      // Predicated region
      $region77: #{cnn_transformer_forward.1} parent=11 // pred_check
        %p567 = pneg %p436
      $region78: #{cnn_transformer_forward.1} parent=11 // pred_check_branch
        %569 = sbr.rel (%p567) target = $region80
      $region79: #{cnn_transformer_forward.1} parent=11 // pred_region
        _
      $region80: #{cnn_transformer_forward.1} parent=11 // pred_fallthru
        _
      // Predicated region
      $region81: #{cnn_transformer_forward.1} parent=11 // pred_check
        %p570 = pneg %p457
      $region82: #{cnn_transformer_forward.1} parent=11 // pred_check_branch
        %572 = sbr.rel (%p570) target = $region84
      $region83: #{cnn_transformer_forward.1} parent=11 // pred_region
        _
      $region84: #{cnn_transformer_forward.1} parent=11 // pred_fallthru
        _
      // Predicated region
      $region85: #{cnn_transformer_forward.1} parent=11 // pred_check
        %p573 = pneg %p478
      $region86: #{cnn_transformer_forward.1} parent=11 // pred_check_branch
        %575 = sbr.rel (%p573) target = $region88
      $region87: #{cnn_transformer_forward.1} parent=11 // pred_region
        _
      $region88: #{cnn_transformer_forward.1} parent=11 // pred_fallthru
        _
    $region12: #{cnn_transformer_forward.1} parent=5 // pred_fallthru
      _
    %p576 = scmp.lt.s32.totalorder %s27, 2
    // Predicated region
    $region89: #{cnn_transformer_forward.1} parent=5 // pred_check
      %p577 = pneg %p576
    $region90: #{cnn_transformer_forward.1} parent=5 // pred_check_branch
      %579 = sbr.rel (%p577) target = $region92
    $region91: #{cnn_transformer_forward.1} parent=5 // pred_region
      // Predicated region
      $region93: #{cnn_transformer_forward.1} parent=91 // pred_check
        %p580 = pneg %p47
      $region94: #{cnn_transformer_forward.1} parent=91 // pred_check_branch
        %582 = sbr.rel (%p580) target = $region96
      $region95: #{cnn_transformer_forward.1} parent=91 // pred_region
        %p583 = scmp.lt.s32.totalorder %s27, 1
        %s584 = scalar_select %p583, %s27, 1
        %s585 = smul.addr %s584, 11
        %s586 = smul.addr %s585, 8
        %s587 = scalar_lea.vmem %s0, %s586
      $region96: #{cnn_transformer_forward.1} parent=91 // pred_fallthru
        _
      // Predicated region
      $region97: #{cnn_transformer_forward.1} parent=91 // pred_check
        %p588 = pneg %p73
      $region98: #{cnn_transformer_forward.1} parent=91 // pred_check_branch
        %590 = sbr.rel (%p588) target = $region100
      $region99: #{cnn_transformer_forward.1} parent=91 // pred_region
        %p591 = scmp.lt.s32.totalorder %s27, 1
        %s592 = scalar_select %p591, %s27, 1
        %s593 = smul.addr %s592, 8
        %s594 = scalar_lea.vmem %s1, %s593
      $region100: #{cnn_transformer_forward.1} parent=91 // pred_fallthru
        _
    $region92: #{cnn_transformer_forward.1} parent=5 // pred_fallthru
      _
    %p595 = scmp.le.s32.totalorder 1, %s27
    %p596 = scmp.lt.s32.totalorder %s27, 3
    %p597 = pnand %p595, %p596
    %p598 = pneg %p597
    // Predicated region
    $region101: #{cnn_transformer_forward.1} parent=5 // pred_check
      _
    $region102: #{cnn_transformer_forward.1} parent=5 // pred_check_branch
      %600 = sbr.rel (%p597) target = $region104
    $region103: #{cnn_transformer_forward.1} parent=5 // pred_region
      %s601 = ssub.s32 %s27, 1
      %p602 = scmp.lt.s32.totalorder %s32, 1
      %s603 = scalar_select %p602, %s32, 1
      %s604 = smul.addr %s603, 11
      %s605 = smul.addr %s604, 8
      %s606 = scalar_lea.vmem %s0, %s605
      %p607 = pneg %p53
      %p608 = pneg %p50
      %p609 = scmp.lt.s32.totalorder %s32, 1
      %s610 = scalar_select %p609, %s32, 1
      %s611 = smul.addr %s610, 8
      %s612 = scalar_lea.vmem %s1, %s611
      %p613 = pneg %p79
      %p614 = pneg %p76
      %p615 = pneg %p100
      %p616 = pneg %p97
      %p617 = pneg %p121
      %p618 = pneg %p118
      %p619 = pneg %p142
      %p620 = pneg %p139
      %p621 = pneg %p163
      %p622 = pneg %p160
      %p623 = pneg %p184
      %p624 = pneg %p181
      %p625 = pneg %p205
      %p626 = pneg %p202
      %p627 = pneg %p226
      %p628 = pneg %p223
      %p629 = pneg %p247
      %p630 = pneg %p244
      %p631 = pneg %p268
      %p632 = pneg %p265
      %p633 = pneg %p289
      %p634 = pneg %p286
      %p635 = pneg %p310
      %p636 = pneg %p307
      %p637 = pneg %p331
      %p638 = pneg %p328
      %p639 = pneg %p352
      %p640 = pneg %p349
      %p641 = pneg %p373
      %p642 = pneg %p370
      %p643 = pneg %p394
      %p644 = pneg %p391
      %p645 = pneg %p415
      %p646 = pneg %p412
      %p647 = pneg %p436
      %p648 = pneg %p433
      %p649 = pneg %p457
      %p650 = pneg %p454
      %p651 = pneg %p478
      %p652 = pneg %p475
      %p653 = pneg %p504
      %p654 = pneg %p501
      %p655 = scmp.lt.s32.totalorder %s32, 1
      %s656 = scalar_select %p655, %s32, 1
      %s657 = smul.addr %s656, 8
      %s658 = scalar_lea.vmem %s21, %s657
      %p659 = scmp.lt.s32.totalorder %s32, 1
      %s660 = scalar_select %p659, %s32, 1
      %s661 = smul.addr %s660, 11
      %s662 = smul.addr %s661, 8
      %s663 = scalar_lea.vmem %s0, %s662
      %p664 = scmp.lt.s32.totalorder %s32, 1
      %s665 = scalar_select %p664, %s32, 1
      %s666 = smul.addr %s665, 8
      %s667 = scalar_lea.vmem %s1, %s666
      %p668 = scmp.lt.s32.totalorder %s32, 1
      %s669 = scalar_select %p668, %s32, 1
      %s670 = smul.addr %s669, 8
      %s671 = scalar_lea.vmem %s21, %s670
      %v673 = vld [vmem:[%s663] sm:$0xff]
      %v674 = vld [vmem:[%s663 + $0x8] sm:$0xff]
      %v675 = vld [vmem:[%s663 + $0x10] sm:$0xff]
      %v676 = vld [vmem:[%s663 + $0x18] sm:$0xff]
      %v677 = vld [vmem:[%s663 + $0x20] sm:$0xff]
      %v678 = vld [vmem:[%s663 + $0x28] sm:$0xff]
      %v679 = vld [vmem:[%s663 + $0x30] sm:$0xff]
      %v680 = vld [vmem:[%s663 + $0x38] sm:$0xff]
      %v681 = vld [vmem:[%s663 + $0x40] sm:$0xff]
      %v682 = vld [vmem:[%s663 + $0x48] sm:$0xff]
      %v683 = vld [vmem:[%s663 + $0x50] sm:$0xff]
      %v684 = vpack.c.bf16 %v673, %v673
      %v685 = vpack.c.bf16 %v674, %v674
      %v686 = vpack.c.bf16 %v675, %v675
      %v687 = vpack.c.bf16 %v676, %v676
      %v688 = vpack.c.bf16 %v677, %v677
      %v689 = vpack.c.bf16 %v678, %v678
      %v690 = vpack.c.bf16 %v679, %v679
      %v691 = vpack.c.bf16 %v680, %v680
      %v692 = vpack.c.bf16 %v681, %v681
      %v693 = vpack.c.bf16 %v682, %v682
      %v694 = vpack.c.bf16 %v683, %v683
      %v695 = vld [vmem:[%s667] sm:$0xff]
      %v696 = vpack.c.bf16 %v695, %v695
      %v697 = vld [vmem:[%s2] sm:$0xf]
      %v698 = vld [vmem:[%s2 + $0x4] sm:$0xf]
      %v699 = vld [vmem:[%s2 + $0x8] sm:$0xf]
      %v700 = vld [vmem:[%s2 + $0xc] sm:$0xf]
      %v701 = vld [vmem:[%s2 + $0x10] sm:$0xf]
      %v702 = vld [vmem:[%s2 + $0x14] sm:$0xf]
      %v703 = vld [vmem:[%s2 + $0x18] sm:$0xf]
      %v704 = vld [vmem:[%s2 + $0x1c] sm:$0xf]
      %v705 = vld [vmem:[%s2 + $0x20] sm:$0xf]
      %v706 = vld [vmem:[%s2 + $0x24] sm:$0xf]
      %v707 = vld [vmem:[%s2 + $0x28] sm:$0xf]
      %v708 = vld [vmem:[%s2 + $0x2c] sm:$0xf]
      %v709 = vld [vmem:[%s2 + $0x30] sm:$0xf]
      %v710 = vld [vmem:[%s2 + $0x34] sm:$0xf]
      %v711 = vld [vmem:[%s2 + $0x38] sm:$0xf]
      %v712 = vld [vmem:[%s2 + $0x3c] sm:$0xf]
      %v713 = vld [vmem:[%s2 + $0x40] sm:$0xf]
      %v714 = vld [vmem:[%s2 + $0x44] sm:$0xf]
      %v715 = vld [vmem:[%s2 + $0x48] sm:$0xf]
      %v716 = vld [vmem:[%s2 + $0x4c] sm:$0xf]
      %v717 = vld [vmem:[%s2 + $0x50] sm:$0xf]
      %v718 = vld [vmem:[%s2 + $0x54] sm:$0xf]
      %v719 = vld [vmem:[%s2 + $0x58] sm:$0xf]
      %v720 = vld [vmem:[%s2 + $0x5c] sm:$0xf]
      %v721 = vld [vmem:[%s2 + $0x60] sm:$0xf]
      %v722 = vld [vmem:[%s2 + $0x64] sm:$0xf]
      %v723 = vld [vmem:[%s2 + $0x68] sm:$0xf]
      %v724 = vld [vmem:[%s2 + $0x6c] sm:$0xf]
      %v725 = vld [vmem:[%s2 + $0x70] sm:$0xf]
      %v726 = vld [vmem:[%s2 + $0x74] sm:$0xf]
      %v727 = vld [vmem:[%s2 + $0x78] sm:$0xf]
      %v728 = vld [vmem:[%s2 + $0x7c] sm:$0xf]
      %v729 = vld [vmem:[%s2 + $0x80] sm:$0xf]
      %v730 = vld [vmem:[%s2 + $0x84] sm:$0xf]
      %v731 = vld [vmem:[%s2 + $0x88] sm:$0xf]
      %v732 = vld [vmem:[%s2 + $0x8c] sm:$0xf]
      %v733 = vld [vmem:[%s2 + $0x90] sm:$0xf]
      %v734 = vld [vmem:[%s2 + $0x94] sm:$0xf]
      %v735 = vld [vmem:[%s2 + $0x98] sm:$0xf]
      %v736 = vld [vmem:[%s2 + $0x9c] sm:$0xf]
      %v737 = vld [vmem:[%s2 + $0xa0] sm:$0xf]
      %v738 = vld [vmem:[%s2 + $0xa4] sm:$0xf]
      %v739 = vld [vmem:[%s2 + $0xa8] sm:$0xf]
      %v740 = vld [vmem:[%s2 + $0xac] sm:$0xf]
      %v741 = vld [vmem:[%s2 + $0xb0] sm:$0xf]
      %v742 = vld [vmem:[%s2 + $0xb4] sm:$0xf]
      %v743 = vld [vmem:[%s2 + $0xb8] sm:$0xf]
      %v744 = vld [vmem:[%s2 + $0xbc] sm:$0xf]
      %v745 = vld [vmem:[%s2 + $0xc0] sm:$0xf]
      %v746 = vld [vmem:[%s2 + $0xc4] sm:$0xf]
      %v747 = vld [vmem:[%s2 + $0xc8] sm:$0xf]
      %v748 = vld [vmem:[%s2 + $0xcc] sm:$0xf]
      %v749 = vld [vmem:[%s2 + $0xd0] sm:$0xf]
      %v750 = vld [vmem:[%s2 + $0xd4] sm:$0xf]
      %v751 = vld [vmem:[%s2 + $0xd8] sm:$0xf]
      %v752 = vld [vmem:[%s2 + $0xdc] sm:$0xf]
      %v753 = vld [vmem:[%s2 + $0xe0] sm:$0xf]
      %v754 = vld [vmem:[%s2 + $0xe4] sm:$0xf]
      %v755 = vld [vmem:[%s2 + $0xe8] sm:$0xf]
      %v756 = vld [vmem:[%s2 + $0xec] sm:$0xf]
      %v757 = vld [vmem:[%s2 + $0xf0] sm:$0xf]
      %v758 = vld [vmem:[%s2 + $0xf4] sm:$0xf]
      %v759 = vld [vmem:[%s2 + $0xf8] sm:$0xf]
      %v760 = vld [vmem:[%s2 + $0xfc] sm:$0xf]
      %v761 = vld [vmem:[%s2 + $0x100] sm:$0xf]
      %v762 = vld [vmem:[%s2 + $0x104] sm:$0xf]
      %v763 = vld [vmem:[%s2 + $0x108] sm:$0xf]
      %v764 = vld [vmem:[%s2 + $0x10c] sm:$0xf]
      %v765 = vld [vmem:[%s2 + $0x110] sm:$0xf]
      %v766 = vld [vmem:[%s2 + $0x114] sm:$0xf]
      %v767 = vld [vmem:[%s2 + $0x118] sm:$0xf]
      %v768 = vld [vmem:[%s2 + $0x11c] sm:$0xf]
      %v769 = vld [vmem:[%s2 + $0x120] sm:$0xf]
      %v770 = vld [vmem:[%s2 + $0x124] sm:$0xf]
      %v771 = vld [vmem:[%s2 + $0x128] sm:$0xf]
      %v772 = vld [vmem:[%s2 + $0x12c] sm:$0xf]
      %v773 = vld [vmem:[%s2 + $0x130] sm:$0xf]
      %v774 = vld [vmem:[%s2 + $0x134] sm:$0xf]
      %v775 = vld [vmem:[%s2 + $0x138] sm:$0xf]
      %v776 = vld [vmem:[%s2 + $0x13c] sm:$0xf]
      %v777 = vld [vmem:[%s2 + $0x140] sm:$0xf]
      %v778 = vld [vmem:[%s2 + $0x144] sm:$0xf]
      %v779 = vld [vmem:[%s2 + $0x148] sm:$0xf]
      %v780 = vld [vmem:[%s2 + $0x14c] sm:$0xf]
      %v781 = vld [vmem:[%s2 + $0x150] sm:$0xf]
      %v782 = vld [vmem:[%s2 + $0x154] sm:$0xf]
      %v783 = vld [vmem:[%s2 + $0x158] sm:$0xf]
      %v784 = vld [vmem:[%s2 + $0x15c] sm:$0xf]
      %v785 = vld [vmem:[%s2 + $0x160] sm:$0xf]
      %v786 = vld [vmem:[%s2 + $0x164] sm:$0xf]
      %v787 = vld [vmem:[%s2 + $0x168] sm:$0xf]
      %v788 = vld [vmem:[%s2 + $0x16c] sm:$0xf]
      %v789 = vld [vmem:[%s2 + $0x170] sm:$0xf]
      %v790 = vld [vmem:[%s2 + $0x174] sm:$0xf]
      %v791 = vld [vmem:[%s2 + $0x178] sm:$0xf]
      %v792 = vld [vmem:[%s2 + $0x17c] sm:$0xf]
      %v793 = vld [vmem:[%s2 + $0x180] sm:$0xf]
      %v794 = vld [vmem:[%s2 + $0x184] sm:$0xf]
      %v795 = vld [vmem:[%s2 + $0x188] sm:$0xf]
      %v796 = vld [vmem:[%s2 + $0x18c] sm:$0xf]
      %v797 = vld [vmem:[%s2 + $0x190] sm:$0xf]
      %v798 = vld [vmem:[%s2 + $0x194] sm:$0xf]
      %v799 = vld [vmem:[%s2 + $0x198] sm:$0xf]
      %v800 = vld [vmem:[%s2 + $0x19c] sm:$0xf]
      %v801 = vld [vmem:[%s2 + $0x1a0] sm:$0xf]
      %v802 = vld [vmem:[%s2 + $0x1a4] sm:$0xf]
      %v803 = vld [vmem:[%s2 + $0x1a8] sm:$0xf]
      %v804 = vld [vmem:[%s2 + $0x1ac] sm:$0xf]
      %v805 = vld [vmem:[%s2 + $0x1b0] sm:$0xf]
      %v806 = vld [vmem:[%s2 + $0x1b4] sm:$0xf]
      %v807 = vld [vmem:[%s2 + $0x1b8] sm:$0xf]
      %v808 = vld [vmem:[%s2 + $0x1bc] sm:$0xf]
      %v809 = vld [vmem:[%s2 + $0x1c0] sm:$0xf]
      %v810 = vld [vmem:[%s2 + $0x1c4] sm:$0xf]
      %v811 = vld [vmem:[%s2 + $0x1c8] sm:$0xf]
      %v812 = vld [vmem:[%s2 + $0x1cc] sm:$0xf]
      %v813 = vld [vmem:[%s2 + $0x1d0] sm:$0xf]
      %v814 = vld [vmem:[%s2 + $0x1d4] sm:$0xf]
      %v815 = vld [vmem:[%s2 + $0x1d8] sm:$0xf]
      %v816 = vld [vmem:[%s2 + $0x1dc] sm:$0xf]
      %v817 = vld [vmem:[%s2 + $0x1e0] sm:$0xf]
      %v818 = vld [vmem:[%s2 + $0x1e4] sm:$0xf]
      %v819 = vld [vmem:[%s2 + $0x1e8] sm:$0xf]
      %v820 = vld [vmem:[%s2 + $0x1ec] sm:$0xf]
      %v821 = vld [vmem:[%s2 + $0x1f0] sm:$0xf]
      %v822 = vld [vmem:[%s2 + $0x1f4] sm:$0xf]
      %v823 = vld [vmem:[%s2 + $0x1f8] sm:$0xf]
      %v824 = vld [vmem:[%s2 + $0x1fc] sm:$0xf]
      %v825 = vld [vmem:[%s2 + $0x200] sm:$0xf]
      %v826 = vld [vmem:[%s2 + $0x204] sm:$0xf]
      %v827 = vld [vmem:[%s2 + $0x208] sm:$0xf]
      %v828 = vld [vmem:[%s2 + $0x20c] sm:$0xf]
      %v829 = vld [vmem:[%s2 + $0x210] sm:$0xf]
      %v830 = vld [vmem:[%s2 + $0x214] sm:$0xf]
      %v831 = vld [vmem:[%s2 + $0x218] sm:$0xf]
      %v832 = vld [vmem:[%s2 + $0x21c] sm:$0xf]
      %v833 = vld [vmem:[%s2 + $0x220] sm:$0xf]
      %v834 = vld [vmem:[%s2 + $0x224] sm:$0xf]
      %v835 = vld [vmem:[%s2 + $0x228] sm:$0xf]
      %v836 = vld [vmem:[%s2 + $0x22c] sm:$0xf]
      %v837 = vld [vmem:[%s2 + $0x230] sm:$0xf]
      %v838 = vld [vmem:[%s2 + $0x234] sm:$0xf]
      %v839 = vld [vmem:[%s2 + $0x238] sm:$0xf]
      %v840 = vld [vmem:[%s2 + $0x23c] sm:$0xf]
      %v841 = vld [vmem:[%s2 + $0x240] sm:$0xf]
      %v842 = vld [vmem:[%s2 + $0x244] sm:$0xf]
      %v843 = vld [vmem:[%s2 + $0x248] sm:$0xf]
      %v844 = vld [vmem:[%s2 + $0x24c] sm:$0xf]
      %v845 = vld [vmem:[%s2 + $0x250] sm:$0xf]
      %v846 = vld [vmem:[%s2 + $0x254] sm:$0xf]
      %v847 = vld [vmem:[%s2 + $0x258] sm:$0xf]
      %v848 = vld [vmem:[%s2 + $0x25c] sm:$0xf]
      %v849 = vld [vmem:[%s2 + $0x260] sm:$0xf]
      %v850 = vld [vmem:[%s2 + $0x264] sm:$0xf]
      %v851 = vld [vmem:[%s2 + $0x268] sm:$0xf]
      %v852 = vld [vmem:[%s2 + $0x26c] sm:$0xf]
      %v853 = vld [vmem:[%s2 + $0x270] sm:$0xf]
      %v854 = vld [vmem:[%s2 + $0x274] sm:$0xf]
      %v855 = vld [vmem:[%s2 + $0x278] sm:$0xf]
      %v856 = vld [vmem:[%s2 + $0x27c] sm:$0xf]
      %v857 = vld [vmem:[%s2 + $0x280] sm:$0x3]
      %v858 = vld [vmem:[%s3] sm:$0x1]
      %v860 = vlaneseq
      %v861 = vshrl.u32 %v860, 7
      %v862 = vsub.s32 0, %v861
      %v863 = vrot.slane %v858, %v862
      %v1026 = vunpack.c.l.b16 %v697
      %v1027 = vunpack.c.l.b16 %v698
      %v1028 = vunpack.c.l.b16 %v699
      %v1029 = vunpack.c.l.b16 %v700
      %v1030 = vunpack.c.l.b16 %v701
      %v1031 = vunpack.c.l.b16 %v702
      %v1032 = vunpack.c.l.b16 %v703
      %v1033 = vunpack.c.l.b16 %v704
      %v1034 = vunpack.c.l.b16 %v705
      %v1035 = vunpack.c.l.b16 %v706
      %v1036 = vunpack.c.l.b16 %v707
      %v1037 = vunpack.c.l.b16 %v708
      %v1038 = vunpack.c.l.b16 %v709
      %v1039 = vunpack.c.l.b16 %v710
      %v1040 = vunpack.c.l.b16 %v711
      %v1041 = vunpack.c.l.b16 %v712
      %v1042 = vunpack.c.l.b16 %v713
      %v1043 = vunpack.c.l.b16 %v714
      %v1044 = vunpack.c.l.b16 %v715
      %v1045 = vunpack.c.l.b16 %v716
      %v1046 = vunpack.c.l.b16 %v717
      %v1047 = vunpack.c.l.b16 %v718
      %v1048 = vunpack.c.l.b16 %v719
      %v1049 = vunpack.c.l.b16 %v720
      %v1050 = vunpack.c.l.b16 %v721
      %v1051 = vunpack.c.l.b16 %v722
      %v1052 = vunpack.c.l.b16 %v723
      %v1053 = vunpack.c.l.b16 %v724
      %v1054 = vunpack.c.l.b16 %v725
      %v1055 = vunpack.c.l.b16 %v726
      %v1056 = vunpack.c.l.b16 %v727
      %v1057 = vunpack.c.l.b16 %v728
      %v1058 = vunpack.c.l.b16 %v729
      %v1059 = vunpack.c.l.b16 %v730
      %v1060 = vunpack.c.l.b16 %v731
      %v1061 = vunpack.c.l.b16 %v732
      %v1062 = vunpack.c.l.b16 %v733
      %v1063 = vunpack.c.l.b16 %v734
      %v1064 = vunpack.c.l.b16 %v735
      %v1065 = vunpack.c.l.b16 %v736
      %v1066 = vunpack.c.l.b16 %v737
      %v1067 = vunpack.c.l.b16 %v738
      %v1068 = vunpack.c.l.b16 %v739
      %v1069 = vunpack.c.l.b16 %v740
      %v1070 = vunpack.c.l.b16 %v741
      %v1071 = vunpack.c.l.b16 %v742
      %v1072 = vunpack.c.l.b16 %v743
      %v1073 = vunpack.c.l.b16 %v744
      %v1074 = vunpack.c.l.b16 %v745
      %v1075 = vunpack.c.l.b16 %v746
      %v1076 = vunpack.c.l.b16 %v747
      %v1077 = vunpack.c.l.b16 %v748
      %v1078 = vunpack.c.l.b16 %v749
      %v1079 = vunpack.c.l.b16 %v750
      %v1080 = vunpack.c.l.b16 %v751
      %v1081 = vunpack.c.l.b16 %v752
      %v1082 = vunpack.c.l.b16 %v753
      %v1083 = vunpack.c.l.b16 %v754
      %v1084 = vunpack.c.l.b16 %v755
      %v1085 = vunpack.c.l.b16 %v756
      %v1086 = vunpack.c.l.b16 %v757
      %v1087 = vunpack.c.l.b16 %v758
      %v1088 = vunpack.c.l.b16 %v759
      %v1089 = vunpack.c.l.b16 %v760
      %v1090 = vunpack.c.l.b16 %v761
      %v1091 = vunpack.c.l.b16 %v762
      %v1092 = vunpack.c.l.b16 %v763
      %v1093 = vunpack.c.l.b16 %v764
      %v1094 = vunpack.c.l.b16 %v765
      %v1095 = vunpack.c.l.b16 %v766
      %v1096 = vunpack.c.l.b16 %v767
      %v1097 = vunpack.c.l.b16 %v768
      %v1098 = vunpack.c.l.b16 %v769
      %v1099 = vunpack.c.l.b16 %v770
      %v1100 = vunpack.c.l.b16 %v771
      %v1101 = vunpack.c.l.b16 %v772
      %v1102 = vunpack.c.l.b16 %v773
      %v1103 = vunpack.c.l.b16 %v774
      %v1104 = vunpack.c.l.b16 %v775
      %v1105 = vunpack.c.l.b16 %v776
      %v1106 = vunpack.c.l.b16 %v777
      %v1107 = vunpack.c.l.b16 %v778
      %v1108 = vunpack.c.l.b16 %v779
      %v1109 = vunpack.c.l.b16 %v780
      %v1110 = vunpack.c.l.b16 %v781
      %v1111 = vunpack.c.l.b16 %v782
      %v1112 = vunpack.c.l.b16 %v783
      %v1113 = vunpack.c.l.b16 %v784
      %v1114 = vunpack.c.l.b16 %v785
      %v1115 = vunpack.c.l.b16 %v786
      %v1116 = vunpack.c.l.b16 %v787
      %v1117 = vunpack.c.l.b16 %v788
      %v1118 = vunpack.c.l.b16 %v789
      %v1119 = vunpack.c.l.b16 %v790
      %v1120 = vunpack.c.l.b16 %v791
      %v1121 = vunpack.c.l.b16 %v792
      %v1122 = vunpack.c.l.b16 %v793
      %v1123 = vunpack.c.l.b16 %v794
      %v1124 = vunpack.c.l.b16 %v795
      %v1125 = vunpack.c.l.b16 %v796
      %v1126 = vunpack.c.l.b16 %v797
      %v1127 = vunpack.c.l.b16 %v798
      %v1128 = vunpack.c.l.b16 %v799
      %v1129 = vunpack.c.l.b16 %v800
      %v1130 = vunpack.c.l.b16 %v801
      %v1131 = vunpack.c.l.b16 %v802
      %v1132 = vunpack.c.l.b16 %v803
      %v1133 = vunpack.c.l.b16 %v804
      %v1134 = vunpack.c.l.b16 %v805
      %v1135 = vunpack.c.l.b16 %v806
      %v1136 = vunpack.c.l.b16 %v807
      %v1137 = vunpack.c.l.b16 %v808
      %v1138 = vunpack.c.l.b16 %v809
      %v1139 = vunpack.c.l.b16 %v810
      %v1140 = vunpack.c.l.b16 %v811
      %v1141 = vunpack.c.l.b16 %v812
      %v1142 = vunpack.c.l.b16 %v813
      %v1143 = vunpack.c.l.b16 %v814
      %v1144 = vunpack.c.l.b16 %v815
      %v1145 = vunpack.c.l.b16 %v816
      %v1146 = vunpack.c.l.b16 %v817
      %v1147 = vunpack.c.l.b16 %v818
      %v1148 = vunpack.c.l.b16 %v819
      %v1149 = vunpack.c.l.b16 %v820
      %v1150 = vunpack.c.l.b16 %v821
      %v1151 = vunpack.c.l.b16 %v822
      %v1152 = vunpack.c.l.b16 %v823
      %v1153 = vunpack.c.l.b16 %v824
      %v1154 = vunpack.c.l.b16 %v825
      %v1155 = vunpack.c.l.b16 %v826
      %v1156 = vunpack.c.l.b16 %v827
      %v1157 = vunpack.c.l.b16 %v828
      %v1158 = vunpack.c.l.b16 %v829
      %v1159 = vunpack.c.l.b16 %v830
      %v1160 = vunpack.c.l.b16 %v831
      %v1161 = vunpack.c.l.b16 %v832
      %v1162 = vunpack.c.l.b16 %v833
      %v1163 = vunpack.c.l.b16 %v834
      %v1164 = vunpack.c.l.b16 %v835
      %v1165 = vunpack.c.l.b16 %v836
      %v1166 = vunpack.c.l.b16 %v837
      %v1167 = vunpack.c.l.b16 %v838
      %v1168 = vunpack.c.l.b16 %v839
      %v1169 = vunpack.c.l.b16 %v840
      %v1170 = vunpack.c.l.b16 %v841
      %v1171 = vunpack.c.l.b16 %v842
      %v1172 = vunpack.c.l.b16 %v843
      %v1173 = vunpack.c.l.b16 %v844
      %v1174 = vunpack.c.l.b16 %v845
      %v1175 = vunpack.c.l.b16 %v846
      %v1176 = vunpack.c.l.b16 %v847
      %v1177 = vunpack.c.l.b16 %v848
      %v1178 = vunpack.c.l.b16 %v849
      %v1179 = vunpack.c.l.b16 %v850
      %v1180 = vunpack.c.l.b16 %v851
      %v1181 = vunpack.c.l.b16 %v852
      %v1182 = vunpack.c.l.b16 %v853
      %v1183 = vunpack.c.l.b16 %v854
      %v1184 = vunpack.c.l.b16 %v855
      %v1185 = vunpack.c.l.b16 %v856
      %v1186 = vunpack.c.l.b16 %v857
      %v1187 = vpack.c.b16 %v1027, %v1026
      %v1188 = vpack.c.b16 %v1029, %v1028
      %v1189 = vpack.c.b16 %v1031, %v1030
      %v1190 = vpack.c.b16 %v1033, %v1032
      %v1191 = vpack.c.b16 %v1035, %v1034
      %v1192 = vpack.c.b16 %v1037, %v1036
      %v1193 = vpack.c.b16 %v1039, %v1038
      %v1194 = vpack.c.b16 %v1041, %v1040
      %v1195 = vpack.c.b16 %v1043, %v1042
      %v1196 = vpack.c.b16 %v1045, %v1044
      %v1197 = vpack.c.b16 %v1047, %v1046
      %v1198 = vpack.c.b16 %v1049, %v1048
      %v1199 = vpack.c.b16 %v1051, %v1050
      %v1200 = vpack.c.b16 %v1053, %v1052
      %v1201 = vpack.c.b16 %v1055, %v1054
      %v1202 = vpack.c.b16 %v1057, %v1056
      %v1203 = vpack.c.b16 %v1059, %v1058
      %v1204 = vpack.c.b16 %v1061, %v1060
      %v1205 = vpack.c.b16 %v1063, %v1062
      %v1206 = vpack.c.b16 %v1065, %v1064
      %v1207 = vpack.c.b16 %v1067, %v1066
      %v1208 = vpack.c.b16 %v1069, %v1068
      %v1209 = vpack.c.b16 %v1071, %v1070
      %v1210 = vpack.c.b16 %v1073, %v1072
      %v1211 = vpack.c.b16 %v1075, %v1074
      %v1212 = vpack.c.b16 %v1077, %v1076
      %v1213 = vpack.c.b16 %v1079, %v1078
      %v1214 = vpack.c.b16 %v1081, %v1080
      %v1215 = vpack.c.b16 %v1083, %v1082
      %v1216 = vpack.c.b16 %v1085, %v1084
      %v1217 = vpack.c.b16 %v1087, %v1086
      %v1218 = vpack.c.b16 %v1089, %v1088
      %v1219 = vpack.c.b16 %v1091, %v1090
      %v1220 = vpack.c.b16 %v1093, %v1092
      %v1221 = vpack.c.b16 %v1095, %v1094
      %v1222 = vpack.c.b16 %v1097, %v1096
      %v1223 = vpack.c.b16 %v1099, %v1098
      %v1224 = vpack.c.b16 %v1101, %v1100
      %v1225 = vpack.c.b16 %v1103, %v1102
      %v1226 = vpack.c.b16 %v1105, %v1104
      %v1227 = vpack.c.b16 %v1107, %v1106
      %v1228 = vpack.c.b16 %v1109, %v1108
      %v1229 = vpack.c.b16 %v1111, %v1110
      %v1230 = vpack.c.b16 %v1113, %v1112
      %v1231 = vpack.c.b16 %v1115, %v1114
      %v1232 = vpack.c.b16 %v1117, %v1116
      %v1233 = vpack.c.b16 %v1119, %v1118
      %v1234 = vpack.c.b16 %v1121, %v1120
      %v1235 = vpack.c.b16 %v1123, %v1122
      %v1236 = vpack.c.b16 %v1125, %v1124
      %v1237 = vpack.c.b16 %v1127, %v1126
      %v1238 = vpack.c.b16 %v1129, %v1128
      %v1239 = vpack.c.b16 %v1131, %v1130
      %v1240 = vpack.c.b16 %v1133, %v1132
      %v1241 = vpack.c.b16 %v1135, %v1134
      %v1242 = vpack.c.b16 %v1137, %v1136
      %v1243 = vpack.c.b16 %v1139, %v1138
      %v1244 = vpack.c.b16 %v1141, %v1140
      %v1245 = vpack.c.b16 %v1143, %v1142
      %v1246 = vpack.c.b16 %v1145, %v1144
      %v1247 = vpack.c.b16 %v1147, %v1146
      %v1248 = vpack.c.b16 %v1149, %v1148
      %v1249 = vpack.c.b16 %v1151, %v1150
      %v1250 = vpack.c.b16 %v1153, %v1152
      %v1251 = vpack.c.b16 %v1155, %v1154
      %v1252 = vpack.c.b16 %v1157, %v1156
      %v1253 = vpack.c.b16 %v1159, %v1158
      %v1254 = vpack.c.b16 %v1161, %v1160
      %v1255 = vpack.c.b16 %v1163, %v1162
      %v1256 = vpack.c.b16 %v1165, %v1164
      %v1257 = vpack.c.b16 %v1167, %v1166
      %v1258 = vpack.c.b16 %v1169, %v1168
      %v1259 = vpack.c.b16 %v1171, %v1170
      %v1260 = vpack.c.b16 %v1173, %v1172
      %v1261 = vpack.c.b16 %v1175, %v1174
      %v1262 = vpack.c.b16 %v1177, %v1176
      %v1263 = vpack.c.b16 %v1179, %v1178
      %v1264 = vpack.c.b16 %v1181, %v1180
      %v1265 = vpack.c.b16 %v1183, %v1182
      %v1266 = vpack.c.b16 %v1185, %v1184
      %v1267 = vpack.c.b16 %v1186, %v1186
      %vm1348 = vcmask 31744
      %v1350 = vsel %vm1348, %v694, 0
      %vm1352 = vcmask 1041408
      %v1354 = vsel %vm1352, %v1267, 0
      %1356 = vmatprep.subr.bf16.mxu0 0
      %1357 = vmatpush1.bf16.msra.mxu0 %v1187
      %1358 = vmatprep.subr.bf16.mxu0 0
      %1359 = vmatpush1.bf16.msra.mxu0 %v1188
      %1360 = vmatprep.subr.bf16.mxu0 0
      %1361 = vmatpush1.bf16.msra.mxu0 %v1189
      %1362 = vmatprep.subr.bf16.mxu0 0
      %1363 = vmatpush1.bf16.msra.mxu0 %v1190
      %1364 = vmatprep.subr.bf16.mxu0 0
      %1365 = vmatpush1.bf16.msra.mxu0 %v1191
      %1366 = vmatprep.subr.bf16.mxu0 0
      %1367 = vmatpush1.bf16.msra.mxu0 %v1192
      %1368 = vmatprep.subr.bf16.mxu0 0
      %1369 = vmatpush1.bf16.msra.mxu0 %v1193
      %1370 = vmatprep.subr.bf16.mxu0 0
      %1371 = vmatpush1.bf16.msra.mxu0 %v1194
      %1372 = vmatprep.subr.bf16.mxu0 0
      %1373 = vmatpush1.bf16.msra.mxu0 %v1195
      %1374 = vmatprep.subr.bf16.mxu0 0
      %1375 = vmatpush1.bf16.msra.mxu0 %v1196
      %1376 = vmatprep.subr.bf16.mxu0 0
      %1377 = vmatpush1.bf16.msra.mxu0 %v1197
      %1378 = vmatprep.subr.bf16.mxu0 0
      %1379 = vmatpush1.bf16.msra.mxu0 %v1198
      %1380 = vmatprep.subr.bf16.mxu0 0
      %1381 = vmatpush1.bf16.msra.mxu0 %v1199
      %1382 = vmatprep.subr.bf16.mxu0 0
      %1383 = vmatpush1.bf16.msra.mxu0 %v1200
      %1384 = vmatprep.subr.bf16.mxu0 0
      %1385 = vmatpush1.bf16.msra.mxu0 %v1201
      %1386 = vmatprep.subr.bf16.mxu0 0
      %1387 = vmatpush1.bf16.msra.mxu0 %v1202
      %1388 = vmatprep.mubr.bf16.mxu0 %v685
      %1389 = vmatmul.mubr.bf16.gmra.mrb[0].mxu0 %v684
      %v1390 = vpop.f32.mrb[0].mxu0
      %v1391 = vadd.f32 %v863, %v1390
      %v1392 = vpop.f32.mrb[0].mxu0
      %v1393 = vpop.f32.mrb[0].mxu0
      %v1394 = vpop.f32.mrb[0].mxu0
      %1395 = vdwg.mxu0
      %1396 = vmatprep.subr.bf16.mxu0 0
      %1397 = vmatpush1.bf16.msra.mxu0 %v1203
      %1398 = vmatprep.subr.bf16.mxu0 0
      %1399 = vmatpush1.bf16.msra.mxu0 %v1204
      %1400 = vmatprep.subr.bf16.mxu0 0
      %1401 = vmatpush1.bf16.msra.mxu0 %v1205
      %1402 = vmatprep.subr.bf16.mxu0 0
      %1403 = vmatpush1.bf16.msra.mxu0 %v1206
      %1404 = vmatprep.subr.bf16.mxu0 0
      %1405 = vmatpush1.bf16.msra.mxu0 %v1207
      %1406 = vmatprep.subr.bf16.mxu0 0
      %1407 = vmatpush1.bf16.msra.mxu0 %v1208
      %1408 = vmatprep.subr.bf16.mxu0 0
      %1409 = vmatpush1.bf16.msra.mxu0 %v1209
      %1410 = vmatprep.subr.bf16.mxu0 0
      %1411 = vmatpush1.bf16.msra.mxu0 %v1210
      %1412 = vmatprep.subr.bf16.mxu0 0
      %1413 = vmatpush1.bf16.msra.mxu0 %v1211
      %1414 = vmatprep.subr.bf16.mxu0 0
      %1415 = vmatpush1.bf16.msra.mxu0 %v1212
      %1416 = vmatprep.subr.bf16.mxu0 0
      %1417 = vmatpush1.bf16.msra.mxu0 %v1213
      %1418 = vmatprep.subr.bf16.mxu0 0
      %1419 = vmatpush1.bf16.msra.mxu0 %v1214
      %1420 = vmatprep.subr.bf16.mxu0 0
      %1421 = vmatpush1.bf16.msra.mxu0 %v1215
      %1422 = vmatprep.subr.bf16.mxu0 0
      %1423 = vmatpush1.bf16.msra.mxu0 %v1216
      %1424 = vmatprep.subr.bf16.mxu0 0
      %1425 = vmatpush1.bf16.msra.mxu0 %v1217
      %1426 = vmatprep.subr.bf16.mxu0 0
      %1427 = vmatpush1.bf16.msra.mxu0 %v1218
      %1428 = vmatprep.mubr.bf16.mxu0 %v687
      %1429 = vmatmul.mubr.bf16.gmra.mrb[0].mxu0 %v686
      %v1430 = vpop.f32.mrb[0].mxu0
      %v1431 = vadd.f32 %v1391, %v1430
      %v1432 = vpop.f32.mrb[0].mxu0
      %v1433 = vpop.f32.mrb[0].mxu0
      %v1434 = vpop.f32.mrb[0].mxu0
      %1435 = vdwg.mxu0
      %1436 = vmatprep.subr.bf16.mxu0 0
      %1437 = vmatpush1.bf16.msra.mxu0 %v1219
      %1438 = vmatprep.subr.bf16.mxu0 0
      %1439 = vmatpush1.bf16.msra.mxu0 %v1220
      %1440 = vmatprep.subr.bf16.mxu0 0
      %1441 = vmatpush1.bf16.msra.mxu0 %v1221
      %1442 = vmatprep.subr.bf16.mxu0 0
      %1443 = vmatpush1.bf16.msra.mxu0 %v1222
      %1444 = vmatprep.subr.bf16.mxu0 0
      %1445 = vmatpush1.bf16.msra.mxu0 %v1223
      %1446 = vmatprep.subr.bf16.mxu0 0
      %1447 = vmatpush1.bf16.msra.mxu0 %v1224
      %1448 = vmatprep.subr.bf16.mxu0 0
      %1449 = vmatpush1.bf16.msra.mxu0 %v1225
      %1450 = vmatprep.subr.bf16.mxu0 0
      %1451 = vmatpush1.bf16.msra.mxu0 %v1226
      %1452 = vmatprep.subr.bf16.mxu0 0
      %1453 = vmatpush1.bf16.msra.mxu0 %v1227
      %1454 = vmatprep.subr.bf16.mxu0 0
      %1455 = vmatpush1.bf16.msra.mxu0 %v1228
      %1456 = vmatprep.subr.bf16.mxu0 0
      %1457 = vmatpush1.bf16.msra.mxu0 %v1229
      %1458 = vmatprep.subr.bf16.mxu0 0
      %1459 = vmatpush1.bf16.msra.mxu0 %v1230
      %1460 = vmatprep.subr.bf16.mxu0 0
      %1461 = vmatpush1.bf16.msra.mxu0 %v1231
      %1462 = vmatprep.subr.bf16.mxu0 0
      %1463 = vmatpush1.bf16.msra.mxu0 %v1232
      %1464 = vmatprep.subr.bf16.mxu0 0
      %1465 = vmatpush1.bf16.msra.mxu0 %v1233
      %1466 = vmatprep.subr.bf16.mxu0 0
      %1467 = vmatpush1.bf16.msra.mxu0 %v1234
      %1468 = vmatprep.mubr.bf16.mxu0 %v689
      %1469 = vmatmul.mubr.bf16.gmra.mrb[0].mxu0 %v688
      %v1470 = vpop.f32.mrb[0].mxu0
      %v1471 = vadd.f32 %v1431, %v1470
      %v1472 = vpop.f32.mrb[0].mxu0
      %v1473 = vpop.f32.mrb[0].mxu0
      %v1474 = vpop.f32.mrb[0].mxu0
      %1475 = vdwg.mxu0
      %1476 = vmatprep.subr.bf16.mxu0 0
      %1477 = vmatpush1.bf16.msra.mxu0 %v1235
      %1478 = vmatprep.subr.bf16.mxu0 0
      %1479 = vmatpush1.bf16.msra.mxu0 %v1236
      %1480 = vmatprep.subr.bf16.mxu0 0
      %1481 = vmatpush1.bf16.msra.mxu0 %v1237
      %1482 = vmatprep.subr.bf16.mxu0 0
      %1483 = vmatpush1.bf16.msra.mxu0 %v1238
      %1484 = vmatprep.subr.bf16.mxu0 0
      %1485 = vmatpush1.bf16.msra.mxu0 %v1239
      %1486 = vmatprep.subr.bf16.mxu0 0
      %1487 = vmatpush1.bf16.msra.mxu0 %v1240
      %1488 = vmatprep.subr.bf16.mxu0 0
      %1489 = vmatpush1.bf16.msra.mxu0 %v1241
      %1490 = vmatprep.subr.bf16.mxu0 0
      %1491 = vmatpush1.bf16.msra.mxu0 %v1242
      %1492 = vmatprep.subr.bf16.mxu0 0
      %1493 = vmatpush1.bf16.msra.mxu0 %v1243
      %1494 = vmatprep.subr.bf16.mxu0 0
      %1495 = vmatpush1.bf16.msra.mxu0 %v1244
      %1496 = vmatprep.subr.bf16.mxu0 0
      %1497 = vmatpush1.bf16.msra.mxu0 %v1245
      %1498 = vmatprep.subr.bf16.mxu0 0
      %1499 = vmatpush1.bf16.msra.mxu0 %v1246
      %1500 = vmatprep.subr.bf16.mxu0 0
      %1501 = vmatpush1.bf16.msra.mxu0 %v1247
      %1502 = vmatprep.subr.bf16.mxu0 0
      %1503 = vmatpush1.bf16.msra.mxu0 %v1248
      %1504 = vmatprep.subr.bf16.mxu0 0
      %1505 = vmatpush1.bf16.msra.mxu0 %v1249
      %1506 = vmatprep.subr.bf16.mxu0 0
      %1507 = vmatpush1.bf16.msra.mxu0 %v1250
      %1508 = vmatprep.mubr.bf16.mxu0 %v691
      %1509 = vmatmul.mubr.bf16.gmra.mrb[0].mxu0 %v690
      %v1510 = vpop.f32.mrb[0].mxu0
      %v1511 = vadd.f32 %v1471, %v1510
      %v1512 = vpop.f32.mrb[0].mxu0
      %v1513 = vpop.f32.mrb[0].mxu0
      %v1514 = vpop.f32.mrb[0].mxu0
      %1515 = vdwg.mxu0
      %1516 = vmatprep.subr.bf16.mxu0 0
      %1517 = vmatpush1.bf16.msra.mxu0 %v1251
      %1518 = vmatprep.subr.bf16.mxu0 0
      %1519 = vmatpush1.bf16.msra.mxu0 %v1252
      %1520 = vmatprep.subr.bf16.mxu0 0
      %1521 = vmatpush1.bf16.msra.mxu0 %v1253
      %1522 = vmatprep.subr.bf16.mxu0 0
      %1523 = vmatpush1.bf16.msra.mxu0 %v1254
      %1524 = vmatprep.subr.bf16.mxu0 0
      %1525 = vmatpush1.bf16.msra.mxu0 %v1255
      %1526 = vmatprep.subr.bf16.mxu0 0
      %1527 = vmatpush1.bf16.msra.mxu0 %v1256
      %1528 = vmatprep.subr.bf16.mxu0 0
      %1529 = vmatpush1.bf16.msra.mxu0 %v1257
      %1530 = vmatprep.subr.bf16.mxu0 0
      %1531 = vmatpush1.bf16.msra.mxu0 %v1258
      %1532 = vmatprep.subr.bf16.mxu0 0
      %1533 = vmatpush1.bf16.msra.mxu0 %v1259
      %1534 = vmatprep.subr.bf16.mxu0 0
      %1535 = vmatpush1.bf16.msra.mxu0 %v1260
      %1536 = vmatprep.subr.bf16.mxu0 0
      %1537 = vmatpush1.bf16.msra.mxu0 %v1261
      %1538 = vmatprep.subr.bf16.mxu0 0
      %1539 = vmatpush1.bf16.msra.mxu0 %v1262
      %1540 = vmatprep.subr.bf16.mxu0 0
      %1541 = vmatpush1.bf16.msra.mxu0 %v1263
      %1542 = vmatprep.subr.bf16.mxu0 0
      %1543 = vmatpush1.bf16.msra.mxu0 %v1264
      %1544 = vmatprep.subr.bf16.mxu0 0
      %1545 = vmatpush1.bf16.msra.mxu0 %v1265
      %1546 = vmatprep.subr.bf16.mxu0 0
      %1547 = vmatpush1.bf16.msra.mxu0 %v1266
      %1548 = vmatprep.mubr.bf16.mxu0 %v693
      %1549 = vmatmul.mubr.bf16.gmra.mrb[0].mxu0 %v692
      %v1550 = vpop.f32.mrb[0].mxu0
      %v1551 = vadd.f32 %v1511, %v1550
      %v1552 = vpop.f32.mrb[0].mxu0
      %v1553 = vpop.f32.mrb[0].mxu0
      %v1554 = vpop.f32.mrb[0].mxu0
      %1555 = vdwg.mxu0
      %1556 = vmatprep.subr.bf16.mxu0 0
      %1557 = vmatpush1.bf16.msra.mxu0 %v1354
      %1558 = vmatprep.subr.bf16.mxu0 0
      %1559 = vmatpush1.bf16.msra.mxu0 0
      %1560 = vmatprep.subr.bf16.mxu0 0
      %1561 = vmatpush1.bf16.msra.mxu0 0
      %1562 = vmatprep.subr.bf16.mxu0 0
      %1563 = vmatpush1.bf16.msra.mxu0 0
      %1564 = vmatprep.subr.bf16.mxu0 0
      %1565 = vmatpush1.bf16.msra.mxu0 0
      %1566 = vmatprep.subr.bf16.mxu0 0
      %1567 = vmatpush1.bf16.msra.mxu0 0
      %1568 = vmatprep.subr.bf16.mxu0 0
      %1569 = vmatpush1.bf16.msra.mxu0 0
      %1570 = vmatprep.subr.bf16.mxu0 0
      %1571 = vmatpush1.bf16.msra.mxu0 0
      %1572 = vmatprep.subr.bf16.mxu0 0
      %1573 = vmatpush1.bf16.msra.mxu0 0
      %1574 = vmatprep.subr.bf16.mxu0 0
      %1575 = vmatpush1.bf16.msra.mxu0 0
      %1576 = vmatprep.subr.bf16.mxu0 0
      %1577 = vmatpush1.bf16.msra.mxu0 0
      %1578 = vmatprep.subr.bf16.mxu0 0
      %1579 = vmatpush1.bf16.msra.mxu0 0
      %1580 = vmatprep.subr.bf16.mxu0 0
      %1581 = vmatpush1.bf16.msra.mxu0 0
      %1582 = vmatprep.subr.bf16.mxu0 0
      %1583 = vmatpush1.bf16.msra.mxu0 0
      %1584 = vmatprep.subr.bf16.mxu0 0
      %1585 = vmatpush1.bf16.msra.mxu0 0
      %1586 = vmatprep.subr.bf16.mxu0 0
      %1587 = vmatpush1.bf16.msra.mxu0 0
      %1588 = vmatprep.mubr.bf16.mxu0 0
      %1589 = vmatmul.mubr.bf16.gmra.mrb[0].mxu0 %v1350
      %v1590 = vpop.f32.mrb[0].mxu0
      %v1591 = vadd.f32 %v1551, %v1590
      %v1592 = vpop.f32.mrb[0].mxu0
      %v1593 = vpop.f32.mrb[0].mxu0
      %v1594 = vpop.f32.mrb[0].mxu0
      %1595 = vdwg.mxu0
      %v1596 = vpack.c.bf16 %v1591, %v1591
      %v1597 = vld [vmem:[%s4] sm:$0xf]
      %v1598 = vld [vmem:[%s4 + $0x4] sm:$0xf]
      %v1599 = vld [vmem:[%s4 + $0x8] sm:$0xf]
      %v1600 = vld [vmem:[%s4 + $0xc] sm:$0xf]
      %v1601 = vld [vmem:[%s5] sm:$0xf]
      %v1602 = vld [vmem:[%s5 + $0x4] sm:$0xf]
      %v1603 = vld [vmem:[%s5 + $0x8] sm:$0xf]
      %v1604 = vld [vmem:[%s5 + $0xc] sm:$0xf]
      %v1609 = vunpack.c.l.b16 %v1601
      %v1610 = vunpack.c.l.b16 %v1602
      %v1611 = vunpack.c.l.b16 %v1603
      %v1612 = vunpack.c.l.b16 %v1604
      %v1613 = vpack.c.b16 %v1610, %v1609
      %v1614 = vpack.c.b16 %v1612, %v1611
      %vm1617 = vcmask 261120
      %v1619 = vsel %vm1617, %v696, 0
      %1621 = vmatprep.subr.bf16.mxu0 0
      %1622 = vmatpush1.bf16.msra.mxu0 %v1613
      %1623 = vmatprep.subr.bf16.mxu0 0
      %1624 = vmatpush1.bf16.msra.mxu0 %v1614
      %1625 = vmatprep.subr.bf16.mxu0 0
      %1626 = vmatpush1.bf16.msra.mxu0 0
      %1627 = vmatprep.subr.bf16.mxu0 0
      %1628 = vmatpush1.bf16.msra.mxu0 0
      %1629 = vmatprep.subr.bf16.mxu0 0
      %1630 = vmatpush1.bf16.msra.mxu0 0
      %1631 = vmatprep.subr.bf16.mxu0 0
      %1632 = vmatpush1.bf16.msra.mxu0 0
      %1633 = vmatprep.subr.bf16.mxu0 0
      %1634 = vmatpush1.bf16.msra.mxu0 0
      %1635 = vmatprep.subr.bf16.mxu0 0
      %1636 = vmatpush1.bf16.msra.mxu0 0
      %1637 = vmatprep.subr.bf16.mxu0 0
      %1638 = vmatpush1.bf16.msra.mxu0 0
      %1639 = vmatprep.subr.bf16.mxu0 0
      %1640 = vmatpush1.bf16.msra.mxu0 0
      %1641 = vmatprep.subr.bf16.mxu0 0
      %1642 = vmatpush1.bf16.msra.mxu0 0
      %1643 = vmatprep.subr.bf16.mxu0 0
      %1644 = vmatpush1.bf16.msra.mxu0 0
      %1645 = vmatprep.subr.bf16.mxu0 0
      %1646 = vmatpush1.bf16.msra.mxu0 0
      %1647 = vmatprep.subr.bf16.mxu0 0
      %1648 = vmatpush1.bf16.msra.mxu0 0
      %1649 = vmatprep.subr.bf16.mxu0 0
      %1650 = vmatpush1.bf16.msra.mxu0 0
      %1651 = vmatprep.subr.bf16.mxu0 0
      %1652 = vmatpush1.bf16.msra.mxu0 0
      %1653 = vmatprep.mubr.bf16.mxu0 0
      %1654 = vmatmul.mubr.bf16.gmra.mrb[0].mxu0 %v1619
      %v1655 = vpop.f32.mrb[0].mxu0
      %v1656 = vadd.f32 0.0, %v1655
      %v1657 = vpop.f32.mrb[0].mxu0
      %v1658 = vpop.f32.mrb[0].mxu0
      %v1659 = vpop.f32.mrb[0].mxu0
      %1660 = vdwg.mxu0
      %v1665 = vunpack.c.l.b16 %v1597
      %v1666 = vunpack.c.l.b16 %v1598
      %v1667 = vunpack.c.l.b16 %v1599
      %v1668 = vunpack.c.l.b16 %v1600
      %v1669 = vpack.c.b16 %v1666, %v1665
      %v1670 = vpack.c.b16 %v1668, %v1667
      %v1674 = vsel %vm1617, %v1596, 0
      %1676 = vmatprep.subr.bf16.mxu0 0
      %1677 = vmatpush1.bf16.msra.mxu0 %v1669
      %1678 = vmatprep.subr.bf16.mxu0 0
      %1679 = vmatpush1.bf16.msra.mxu0 %v1670
      %1680 = vmatprep.subr.bf16.mxu0 0
      %1681 = vmatpush1.bf16.msra.mxu0 0
      %1682 = vmatprep.subr.bf16.mxu0 0
      %1683 = vmatpush1.bf16.msra.mxu0 0
      %1684 = vmatprep.subr.bf16.mxu0 0
      %1685 = vmatpush1.bf16.msra.mxu0 0
      %1686 = vmatprep.subr.bf16.mxu0 0
      %1687 = vmatpush1.bf16.msra.mxu0 0
      %1688 = vmatprep.subr.bf16.mxu0 0
      %1689 = vmatpush1.bf16.msra.mxu0 0
      %1690 = vmatprep.subr.bf16.mxu0 0
      %1691 = vmatpush1.bf16.msra.mxu0 0
      %1692 = vmatprep.subr.bf16.mxu0 0
      %1693 = vmatpush1.bf16.msra.mxu0 0
      %1694 = vmatprep.subr.bf16.mxu0 0
      %1695 = vmatpush1.bf16.msra.mxu0 0
      %1696 = vmatprep.subr.bf16.mxu0 0
      %1697 = vmatpush1.bf16.msra.mxu0 0
      %1698 = vmatprep.subr.bf16.mxu0 0
      %1699 = vmatpush1.bf16.msra.mxu0 0
      %1700 = vmatprep.subr.bf16.mxu0 0
      %1701 = vmatpush1.bf16.msra.mxu0 0
      %1702 = vmatprep.subr.bf16.mxu0 0
      %1703 = vmatpush1.bf16.msra.mxu0 0
      %1704 = vmatprep.subr.bf16.mxu0 0
      %1705 = vmatpush1.bf16.msra.mxu0 0
      %1706 = vmatprep.subr.bf16.mxu0 0
      %1707 = vmatpush1.bf16.msra.mxu0 0
      %1708 = vmatprep.mubr.bf16.mxu0 0
      %1709 = vmatmul.mubr.bf16.gmra.mrb[0].mxu0 %v1674
      %v1710 = vpop.f32.mrb[0].mxu0
      %v1711 = vadd.f32 %v1656, %v1710
      %v1712 = vpop.f32.mrb[0].mxu0
      %v1713 = vpop.f32.mrb[0].mxu0
      %v1714 = vpop.f32.mrb[0].mxu0
      %1715 = vdwg.mxu0
      %v1716 = vld [vmem:[%s6] sm:$0x1]
      %v1718 = vlaneseq
      %v1719 = vshrl.u32 %v1718, 7
      %v1720 = vsub.s32 0, %v1719
      %v1721 = vrot.slane %v1716, %v1720
      %v1723 = vadd.f32 %v1711, %v1721
      %v1724 = vpack.c.bf16 %v1723, %v1723
      %v1725 = vld [vmem:[%s7] sm:$0xf]
      %v1726 = vld [vmem:[%s7 + $0x4] sm:$0xf]
      %v1727 = vld [vmem:[%s7 + $0x8] sm:$0xf]
      %v1728 = vld [vmem:[%s7 + $0xc] sm:$0xf]
      %v1729 = vld [vmem:[%s8] sm:$0x1]
      %v1731 = vlaneseq
      %v1732 = vshrl.u32 %v1731, 7
      %v1733 = vsub.s32 0, %v1732
      %v1734 = vrot.slane %v1729, %v1733
      %v1740 = vunpack.c.l.b16 %v1725
      %v1741 = vunpack.c.l.b16 %v1726
      %v1742 = vunpack.c.l.b16 %v1727
      %v1743 = vunpack.c.l.b16 %v1728
      %v1744 = vpack.c.b16 %v1741, %v1740
      %v1745 = vpack.c.b16 %v1743, %v1742
      %v1749 = vsel %vm1617, %v1724, 0
      %1751 = vmatprep.subr.bf16.mxu0 0
      %1752 = vmatpush1.bf16.msra.mxu0 %v1744
      %1753 = vmatprep.subr.bf16.mxu0 0
      %1754 = vmatpush1.bf16.msra.mxu0 %v1745
      %1755 = vmatprep.subr.bf16.mxu0 0
      %1756 = vmatpush1.bf16.msra.mxu0 0
      %1757 = vmatprep.subr.bf16.mxu0 0
      %1758 = vmatpush1.bf16.msra.mxu0 0
      %1759 = vmatprep.subr.bf16.mxu0 0
      %1760 = vmatpush1.bf16.msra.mxu0 0
      %1761 = vmatprep.subr.bf16.mxu0 0
      %1762 = vmatpush1.bf16.msra.mxu0 0
      %1763 = vmatprep.subr.bf16.mxu0 0
      %1764 = vmatpush1.bf16.msra.mxu0 0
      %1765 = vmatprep.subr.bf16.mxu0 0
      %1766 = vmatpush1.bf16.msra.mxu0 0
      %1767 = vmatprep.subr.bf16.mxu0 0
      %1768 = vmatpush1.bf16.msra.mxu0 0
      %1769 = vmatprep.subr.bf16.mxu0 0
      %1770 = vmatpush1.bf16.msra.mxu0 0
      %1771 = vmatprep.subr.bf16.mxu0 0
      %1772 = vmatpush1.bf16.msra.mxu0 0
      %1773 = vmatprep.subr.bf16.mxu0 0
      %1774 = vmatpush1.bf16.msra.mxu0 0
      %1775 = vmatprep.subr.bf16.mxu0 0
      %1776 = vmatpush1.bf16.msra.mxu0 0
      %1777 = vmatprep.subr.bf16.mxu0 0
      %1778 = vmatpush1.bf16.msra.mxu0 0
      %1779 = vmatprep.subr.bf16.mxu0 0
      %1780 = vmatpush1.bf16.msra.mxu0 0
      %1781 = vmatprep.subr.bf16.mxu0 0
      %1782 = vmatpush1.bf16.msra.mxu0 0
      %1783 = vmatprep.mubr.bf16.mxu0 0
      %1784 = vmatmul.mubr.bf16.gmra.mrb[0].mxu0 %v1749
      %v1785 = vpop.f32.mrb[0].mxu0
      %v1786 = vadd.f32 %v1734, %v1785
      %v1787 = vpop.f32.mrb[0].mxu0
      %v1788 = vpop.f32.mrb[0].mxu0
      %v1789 = vpop.f32.mrb[0].mxu0
      %1790 = vdwg.mxu0
      %v1791 = vpack.c.bf16 %v1786, %v1786
      %v1792 = vld [vmem:[%s9] sm:$0xf]
      %v1793 = vld [vmem:[%s9 + $0x4] sm:$0xf]
      %v1794 = vld [vmem:[%s9 + $0x8] sm:$0xf]
      %v1795 = vld [vmem:[%s9 + $0xc] sm:$0xf]
      %1797 = vrot.lane.b32.xlu0 %v1791, 96
      %v1798 = vpop.permute.xlu0 %1797
      %vm1799 = vcmask 64512
      %v1801 = vsel %vm1799, %v1791, 0
      %v1804 = vsel %vm1799, %v1798, 0
      %1806 = vmatprep.subr.bf16.mxu0 0
      %1807 = vmatpush1.bf16.xpose.msra.mxu0 %v1804
      %1808 = vmatprep.subr.bf16.mxu0 0
      %1809 = vmatpush1.bf16.xpose.msra.mxu0 0
      %1810 = vmatprep.subr.bf16.mxu0 0
      %1811 = vmatpush1.bf16.xpose.msra.mxu0 0
      %1812 = vmatprep.subr.bf16.mxu0 0
      %1813 = vmatpush1.bf16.xpose.msra.mxu0 0
      %1814 = vmatprep.subr.bf16.mxu0 0
      %1815 = vmatpush1.bf16.xpose.msra.mxu0 0
      %1816 = vmatprep.subr.bf16.mxu0 0
      %1817 = vmatpush1.bf16.xpose.msra.mxu0 0
      %1818 = vmatprep.subr.bf16.mxu0 0
      %1819 = vmatpush1.bf16.xpose.msra.mxu0 0
      %1820 = vmatprep.subr.bf16.mxu0 0
      %1821 = vmatpush1.bf16.xpose.msra.mxu0 0
      %1822 = vmatprep.subr.bf16.mxu0 0
      %1823 = vmatpush1.bf16.xpose.msra.mxu0 0
      %1824 = vmatprep.subr.bf16.mxu0 0
      %1825 = vmatpush1.bf16.xpose.msra.mxu0 0
      %1826 = vmatprep.subr.bf16.mxu0 0
      %1827 = vmatpush1.bf16.xpose.msra.mxu0 0
      %1828 = vmatprep.subr.bf16.mxu0 0
      %1829 = vmatpush1.bf16.xpose.msra.mxu0 0
      %1830 = vmatprep.subr.bf16.mxu0 0
      %1831 = vmatpush1.bf16.xpose.msra.mxu0 0
      %1832 = vmatprep.subr.bf16.mxu0 0
      %1833 = vmatpush1.bf16.xpose.msra.mxu0 0
      %1834 = vmatprep.subr.bf16.mxu0 0
      %1835 = vmatpush1.bf16.xpose.msra.mxu0 0
      %1836 = vmatprep.subr.bf16.mxu0 0
      %1837 = vmatpush1.bf16.xpose.msra.mxu0 0
      %1838 = vmatprep.mubr.bf16.mxu0 0
      %1839 = vmatmul.mubr.bf16.gmra.mrb[0].mxu0 %v1801
      %v1840 = vpop.f32.mrb[0].mxu0
      %v1841 = vadd.f32 0.0, %v1840
      %v1842 = vpop.f32.mrb[0].mxu0
      %v1843 = vpop.f32.mrb[0].mxu0
      %v1844 = vpop.f32.mrb[0].mxu0
      %1845 = vdwg.mxu0
      %v1846 = vsel %vm1799, %v1841, -inf
      %1847 = vmax.xlane.f32.xlu0 %v1846
      %v1848 = vpop.xlane.xlu0 %1847
      %v1849 = vsub.f32 %v1841, %v1848
      %v1850 = vmul.f32 %v1849, 1.442695
      %v1851 = vpow.pop %v1850
      %v1852 = vsel %vm1799, %v1851, 0.0
      %1853 = vadd.xlane.f32.xlu0 %v1852
      %v1854 = vpop.xlane.xlu0 %1853
      %v1855 = vrcp.pop %v1854
      %v1856 = vmul.f32 %v1851, %v1855
      %v1857 = vpack.c.bf16 %v1856, %v1856
      %1858 = vrot.lane.b32.xlu0 %v1791, 64
      %v1859 = vpop.permute.xlu0 %1858
      %v1861 = vsel %vm1799, %v1857, 0
      %vm1863 = vcmask 1043456
      %v1865 = vsel %vm1863, %v1859, 0
      %1867 = vmatprep.subr.bf16.mxu0 0
      %1868 = vmatpush1.bf16.msra.mxu0 %v1865
      %1869 = vmatprep.subr.bf16.mxu0 0
      %1870 = vmatpush1.bf16.msra.mxu0 0
      %1871 = vmatprep.subr.bf16.mxu0 0
      %1872 = vmatpush1.bf16.msra.mxu0 0
      %1873 = vmatprep.subr.bf16.mxu0 0
      %1874 = vmatpush1.bf16.msra.mxu0 0
      %1875 = vmatprep.subr.bf16.mxu0 0
      %1876 = vmatpush1.bf16.msra.mxu0 0
      %1877 = vmatprep.subr.bf16.mxu0 0
      %1878 = vmatpush1.bf16.msra.mxu0 0
      %1879 = vmatprep.subr.bf16.mxu0 0
      %1880 = vmatpush1.bf16.msra.mxu0 0
      %1881 = vmatprep.subr.bf16.mxu0 0
      %1882 = vmatpush1.bf16.msra.mxu0 0
      %1883 = vmatprep.subr.bf16.mxu0 0
      %1884 = vmatpush1.bf16.msra.mxu0 0
      %1885 = vmatprep.subr.bf16.mxu0 0
      %1886 = vmatpush1.bf16.msra.mxu0 0
      %1887 = vmatprep.subr.bf16.mxu0 0
      %1888 = vmatpush1.bf16.msra.mxu0 0
      %1889 = vmatprep.subr.bf16.mxu0 0
      %1890 = vmatpush1.bf16.msra.mxu0 0
      %1891 = vmatprep.subr.bf16.mxu0 0
      %1892 = vmatpush1.bf16.msra.mxu0 0
      %1893 = vmatprep.subr.bf16.mxu0 0
      %1894 = vmatpush1.bf16.msra.mxu0 0
      %1895 = vmatprep.subr.bf16.mxu0 0
      %1896 = vmatpush1.bf16.msra.mxu0 0
      %1897 = vmatprep.subr.bf16.mxu0 0
      %1898 = vmatpush1.bf16.msra.mxu0 0
      %1899 = vmatprep.mubr.bf16.mxu0 0
      %1900 = vmatmul.mubr.bf16.gmra.mrb[0].mxu0 %v1861
      %v1901 = vpop.f32.mrb[0].mxu0
      %v1902 = vadd.f32 0.0, %v1901
      %v1903 = vpop.f32.mrb[0].mxu0
      %v1904 = vpop.f32.mrb[0].mxu0
      %v1905 = vpop.f32.mrb[0].mxu0
      %1906 = vdwg.mxu0
      %v1907 = vpack.c.bf16 %v1902, %v1902
      %1908 = vrot.lane.b32.xlu0 %v1791, 120
      %v1909 = vpop.permute.xlu0 %1908
      %1910 = vrot.lane.b32.xlu0 %v1791, 88
      %v1911 = vpop.permute.xlu0 %1910
      %v1913 = vsel %vm1799, %v1909, 0
      %v1916 = vsel %vm1799, %v1911, 0
      %1918 = vmatprep.subr.bf16.mxu0 0
      %1919 = vmatpush1.bf16.xpose.msra.mxu0 %v1916
      %1920 = vmatprep.subr.bf16.mxu0 0
      %1921 = vmatpush1.bf16.xpose.msra.mxu0 0
      %1922 = vmatprep.subr.bf16.mxu0 0
      %1923 = vmatpush1.bf16.xpose.msra.mxu0 0
      %1924 = vmatprep.subr.bf16.mxu0 0
      %1925 = vmatpush1.bf16.xpose.msra.mxu0 0
      %1926 = vmatprep.subr.bf16.mxu0 0
      %1927 = vmatpush1.bf16.xpose.msra.mxu0 0
      %1928 = vmatprep.subr.bf16.mxu0 0
      %1929 = vmatpush1.bf16.xpose.msra.mxu0 0
      %1930 = vmatprep.subr.bf16.mxu0 0
      %1931 = vmatpush1.bf16.xpose.msra.mxu0 0
      %1932 = vmatprep.subr.bf16.mxu0 0
      %1933 = vmatpush1.bf16.xpose.msra.mxu0 0
      %1934 = vmatprep.subr.bf16.mxu0 0
      %1935 = vmatpush1.bf16.xpose.msra.mxu0 0
      %1936 = vmatprep.subr.bf16.mxu0 0
      %1937 = vmatpush1.bf16.xpose.msra.mxu0 0
      %1938 = vmatprep.subr.bf16.mxu0 0
      %1939 = vmatpush1.bf16.xpose.msra.mxu0 0
      %1940 = vmatprep.subr.bf16.mxu0 0
      %1941 = vmatpush1.bf16.xpose.msra.mxu0 0
      %1942 = vmatprep.subr.bf16.mxu0 0
      %1943 = vmatpush1.bf16.xpose.msra.mxu0 0
      %1944 = vmatprep.subr.bf16.mxu0 0
      %1945 = vmatpush1.bf16.xpose.msra.mxu0 0
      %1946 = vmatprep.subr.bf16.mxu0 0
      %1947 = vmatpush1.bf16.xpose.msra.mxu0 0
      %1948 = vmatprep.subr.bf16.mxu0 0
      %1949 = vmatpush1.bf16.xpose.msra.mxu0 0
      %1950 = vmatprep.mubr.bf16.mxu0 0
      %1951 = vmatmul.mubr.bf16.gmra.mrb[0].mxu0 %v1913
      %v1952 = vpop.f32.mrb[0].mxu0
      %v1953 = vadd.f32 0.0, %v1952
      %v1954 = vpop.f32.mrb[0].mxu0
      %v1955 = vpop.f32.mrb[0].mxu0
      %v1956 = vpop.f32.mrb[0].mxu0
      %1957 = vdwg.mxu0
      %v1958 = vsel %vm1799, %v1953, -inf
      %1959 = vmax.xlane.f32.xlu0 %v1958
      %v1960 = vpop.xlane.xlu0 %1959
      %v1961 = vsub.f32 %v1953, %v1960
      %v1962 = vmul.f32 %v1961, 1.442695
      %v1963 = vpow.pop %v1962
      %v1964 = vsel %vm1799, %v1963, 0.0
      %1965 = vadd.xlane.f32.xlu0 %v1964
      %v1966 = vpop.xlane.xlu0 %1965
      %v1967 = vrcp.pop %v1966
      %v1968 = vmul.f32 %v1963, %v1967
      %v1969 = vpack.c.bf16 %v1968, %v1968
      %1970 = vrot.lane.b32.xlu0 %v1791, 56
      %v1971 = vpop.permute.xlu0 %1970
      %v1973 = vsel %vm1799, %v1969, 0
      %v1976 = vsel %vm1863, %v1971, 0
      %1978 = vmatprep.subr.bf16.mxu0 0
      %1979 = vmatpush1.bf16.msra.mxu0 %v1976
      %1980 = vmatprep.subr.bf16.mxu0 0
      %1981 = vmatpush1.bf16.msra.mxu0 0
      %1982 = vmatprep.subr.bf16.mxu0 0
      %1983 = vmatpush1.bf16.msra.mxu0 0
      %1984 = vmatprep.subr.bf16.mxu0 0
      %1985 = vmatpush1.bf16.msra.mxu0 0
      %1986 = vmatprep.subr.bf16.mxu0 0
      %1987 = vmatpush1.bf16.msra.mxu0 0
      %1988 = vmatprep.subr.bf16.mxu0 0
      %1989 = vmatpush1.bf16.msra.mxu0 0
      %1990 = vmatprep.subr.bf16.mxu0 0
      %1991 = vmatpush1.bf16.msra.mxu0 0
      %1992 = vmatprep.subr.bf16.mxu0 0
      %1993 = vmatpush1.bf16.msra.mxu0 0
      %1994 = vmatprep.subr.bf16.mxu0 0
      %1995 = vmatpush1.bf16.msra.mxu0 0
      %1996 = vmatprep.subr.bf16.mxu0 0
      %1997 = vmatpush1.bf16.msra.mxu0 0
      %1998 = vmatprep.subr.bf16.mxu0 0
      %1999 = vmatpush1.bf16.msra.mxu0 0
      %2000 = vmatprep.subr.bf16.mxu0 0
      %2001 = vmatpush1.bf16.msra.mxu0 0
      %2002 = vmatprep.subr.bf16.mxu0 0
      %2003 = vmatpush1.bf16.msra.mxu0 0
      %2004 = vmatprep.subr.bf16.mxu0 0
      %2005 = vmatpush1.bf16.msra.mxu0 0
      %2006 = vmatprep.subr.bf16.mxu0 0
      %2007 = vmatpush1.bf16.msra.mxu0 0
      %2008 = vmatprep.subr.bf16.mxu0 0
      %2009 = vmatpush1.bf16.msra.mxu0 0
      %2010 = vmatprep.mubr.bf16.mxu0 0
      %2011 = vmatmul.mubr.bf16.gmra.mrb[0].mxu0 %v1973
      %v2012 = vpop.f32.mrb[0].mxu0
      %v2013 = vadd.f32 0.0, %v2012
      %v2014 = vpop.f32.mrb[0].mxu0
      %v2015 = vpop.f32.mrb[0].mxu0
      %v2016 = vpop.f32.mrb[0].mxu0
      %2017 = vdwg.mxu0
      %v2018 = vpack.c.bf16 %v2013, %v2013
      %v2020 = vsel %vm1799, %v2018, 0
      %v2023 = vsel %vm1863, %v1793, 0
      %2025 = vmatprep.subr.bf16.mxu0 0
      %2026 = vmatpush1.bf16.msra.mxu0 %v2023
      %2027 = vmatprep.subr.bf16.mxu0 0
      %2028 = vmatpush1.bf16.msra.mxu0 0
      %2029 = vmatprep.subr.bf16.mxu0 0
      %2030 = vmatpush1.bf16.msra.mxu0 0
      %2031 = vmatprep.subr.bf16.mxu0 0
      %2032 = vmatpush1.bf16.msra.mxu0 0
      %2033 = vmatprep.subr.bf16.mxu0 0
      %2034 = vmatpush1.bf16.msra.mxu0 0
      %2035 = vmatprep.subr.bf16.mxu0 0
      %2036 = vmatpush1.bf16.msra.mxu0 0
      %2037 = vmatprep.subr.bf16.mxu0 0
      %2038 = vmatpush1.bf16.msra.mxu0 0
      %2039 = vmatprep.subr.bf16.mxu0 0
      %2040 = vmatpush1.bf16.msra.mxu0 0
      %2041 = vmatprep.subr.bf16.mxu0 0
      %2042 = vmatpush1.bf16.msra.mxu0 0
      %2043 = vmatprep.subr.bf16.mxu0 0
      %2044 = vmatpush1.bf16.msra.mxu0 0
      %2045 = vmatprep.subr.bf16.mxu0 0
      %2046 = vmatpush1.bf16.msra.mxu0 0
      %2047 = vmatprep.subr.bf16.mxu0 0
      %2048 = vmatpush1.bf16.msra.mxu0 0
      %2049 = vmatprep.subr.bf16.mxu0 0
      %2050 = vmatpush1.bf16.msra.mxu0 0
      %2051 = vmatprep.subr.bf16.mxu0 0
      %2052 = vmatpush1.bf16.msra.mxu0 0
      %2053 = vmatprep.subr.bf16.mxu0 0
      %2054 = vmatpush1.bf16.msra.mxu0 0
      %2055 = vmatprep.subr.bf16.mxu0 0
      %2056 = vmatpush1.bf16.msra.mxu0 0
      %2057 = vmatprep.mubr.bf16.mxu0 0
      %2058 = vmatmul.mubr.bf16.gmra.mrb[0].mxu0 %v2020
      %v2059 = vpop.f32.mrb[0].mxu0
      %v2060 = vadd.f32 0.0, %v2059
      %v2061 = vpop.f32.mrb[0].mxu0
      %v2062 = vpop.f32.mrb[0].mxu0
      %v2063 = vpop.f32.mrb[0].mxu0
      %2064 = vdwg.mxu0
      %v2066 = vsel %vm1799, %v1907, 0
      %v2069 = vsel %vm1863, %v1792, 0
      %2071 = vmatprep.subr.bf16.mxu0 0
      %2072 = vmatpush1.bf16.msra.mxu0 %v2069
      %2073 = vmatprep.subr.bf16.mxu0 0
      %2074 = vmatpush1.bf16.msra.mxu0 0
      %2075 = vmatprep.subr.bf16.mxu0 0
      %2076 = vmatpush1.bf16.msra.mxu0 0
      %2077 = vmatprep.subr.bf16.mxu0 0
      %2078 = vmatpush1.bf16.msra.mxu0 0
      %2079 = vmatprep.subr.bf16.mxu0 0
      %2080 = vmatpush1.bf16.msra.mxu0 0
      %2081 = vmatprep.subr.bf16.mxu0 0
      %2082 = vmatpush1.bf16.msra.mxu0 0
      %2083 = vmatprep.subr.bf16.mxu0 0
      %2084 = vmatpush1.bf16.msra.mxu0 0
      %2085 = vmatprep.subr.bf16.mxu0 0
      %2086 = vmatpush1.bf16.msra.mxu0 0
      %2087 = vmatprep.subr.bf16.mxu0 0
      %2088 = vmatpush1.bf16.msra.mxu0 0
      %2089 = vmatprep.subr.bf16.mxu0 0
      %2090 = vmatpush1.bf16.msra.mxu0 0
      %2091 = vmatprep.subr.bf16.mxu0 0
      %2092 = vmatpush1.bf16.msra.mxu0 0
      %2093 = vmatprep.subr.bf16.mxu0 0
      %2094 = vmatpush1.bf16.msra.mxu0 0
      %2095 = vmatprep.subr.bf16.mxu0 0
      %2096 = vmatpush1.bf16.msra.mxu0 0
      %2097 = vmatprep.subr.bf16.mxu0 0
      %2098 = vmatpush1.bf16.msra.mxu0 0
      %2099 = vmatprep.subr.bf16.mxu0 0
      %2100 = vmatpush1.bf16.msra.mxu0 0
      %2101 = vmatprep.subr.bf16.mxu0 0
      %2102 = vmatpush1.bf16.msra.mxu0 0
      %2103 = vmatprep.mubr.bf16.mxu0 0
      %2104 = vmatmul.mubr.bf16.gmra.mrb[0].mxu0 %v2066
      %v2105 = vpop.f32.mrb[0].mxu0
      %v2106 = vadd.f32 %v2060, %v2105
      %v2107 = vpop.f32.mrb[0].mxu0
      %v2108 = vpop.f32.mrb[0].mxu0
      %v2109 = vpop.f32.mrb[0].mxu0
      %2110 = vdwg.mxu0
      %2111 = vrot.lane.b32.xlu0 %v1791, 112
      %v2112 = vpop.permute.xlu0 %2111
      %2113 = vrot.lane.b32.xlu0 %v1791, 80
      %v2114 = vpop.permute.xlu0 %2113
      %v2116 = vsel %vm1799, %v2112, 0
      %v2119 = vsel %vm1799, %v2114, 0
      %2121 = vmatprep.subr.bf16.mxu0 0
      %2122 = vmatpush1.bf16.xpose.msra.mxu0 %v2119
      %2123 = vmatprep.subr.bf16.mxu0 0
      %2124 = vmatpush1.bf16.xpose.msra.mxu0 0
      %2125 = vmatprep.subr.bf16.mxu0 0
      %2126 = vmatpush1.bf16.xpose.msra.mxu0 0
      %2127 = vmatprep.subr.bf16.mxu0 0
      %2128 = vmatpush1.bf16.xpose.msra.mxu0 0
      %2129 = vmatprep.subr.bf16.mxu0 0
      %2130 = vmatpush1.bf16.xpose.msra.mxu0 0
      %2131 = vmatprep.subr.bf16.mxu0 0
      %2132 = vmatpush1.bf16.xpose.msra.mxu0 0
      %2133 = vmatprep.subr.bf16.mxu0 0
      %2134 = vmatpush1.bf16.xpose.msra.mxu0 0
      %2135 = vmatprep.subr.bf16.mxu0 0
      %2136 = vmatpush1.bf16.xpose.msra.mxu0 0
      %2137 = vmatprep.subr.bf16.mxu0 0
      %2138 = vmatpush1.bf16.xpose.msra.mxu0 0
      %2139 = vmatprep.subr.bf16.mxu0 0
      %2140 = vmatpush1.bf16.xpose.msra.mxu0 0
      %2141 = vmatprep.subr.bf16.mxu0 0
      %2142 = vmatpush1.bf16.xpose.msra.mxu0 0
      %2143 = vmatprep.subr.bf16.mxu0 0
      %2144 = vmatpush1.bf16.xpose.msra.mxu0 0
      %2145 = vmatprep.subr.bf16.mxu0 0
      %2146 = vmatpush1.bf16.xpose.msra.mxu0 0
      %2147 = vmatprep.subr.bf16.mxu0 0
      %2148 = vmatpush1.bf16.xpose.msra.mxu0 0
      %2149 = vmatprep.subr.bf16.mxu0 0
      %2150 = vmatpush1.bf16.xpose.msra.mxu0 0
      %2151 = vmatprep.subr.bf16.mxu0 0
      %2152 = vmatpush1.bf16.xpose.msra.mxu0 0
      %2153 = vmatprep.mubr.bf16.mxu0 0
      %2154 = vmatmul.mubr.bf16.gmra.mrb[0].mxu0 %v2116
      %v2155 = vpop.f32.mrb[0].mxu0
      %v2156 = vadd.f32 0.0, %v2155
      %v2157 = vpop.f32.mrb[0].mxu0
      %v2158 = vpop.f32.mrb[0].mxu0
      %v2159 = vpop.f32.mrb[0].mxu0
      %2160 = vdwg.mxu0
      %v2161 = vsel %vm1799, %v2156, -inf
      %2162 = vmax.xlane.f32.xlu0 %v2161
      %v2163 = vpop.xlane.xlu0 %2162
      %v2164 = vsub.f32 %v2156, %v2163
      %v2165 = vmul.f32 %v2164, 1.442695
      %v2166 = vpow.pop %v2165
      %v2167 = vsel %vm1799, %v2166, 0.0
      %2168 = vadd.xlane.f32.xlu0 %v2167
      %v2169 = vpop.xlane.xlu0 %2168
      %v2170 = vrcp.pop %v2169
      %v2171 = vmul.f32 %v2166, %v2170
      %v2172 = vpack.c.bf16 %v2171, %v2171
      %2173 = vrot.lane.b32.xlu0 %v1791, 48
      %v2174 = vpop.permute.xlu0 %2173
      %v2176 = vsel %vm1799, %v2172, 0
      %v2179 = vsel %vm1863, %v2174, 0
      %2181 = vmatprep.subr.bf16.mxu0 0
      %2182 = vmatpush1.bf16.msra.mxu0 %v2179
      %2183 = vmatprep.subr.bf16.mxu0 0
      %2184 = vmatpush1.bf16.msra.mxu0 0
      %2185 = vmatprep.subr.bf16.mxu0 0
      %2186 = vmatpush1.bf16.msra.mxu0 0
      %2187 = vmatprep.subr.bf16.mxu0 0
      %2188 = vmatpush1.bf16.msra.mxu0 0
      %2189 = vmatprep.subr.bf16.mxu0 0
      %2190 = vmatpush1.bf16.msra.mxu0 0
      %2191 = vmatprep.subr.bf16.mxu0 0
      %2192 = vmatpush1.bf16.msra.mxu0 0
      %2193 = vmatprep.subr.bf16.mxu0 0
      %2194 = vmatpush1.bf16.msra.mxu0 0
      %2195 = vmatprep.subr.bf16.mxu0 0
      %2196 = vmatpush1.bf16.msra.mxu0 0
      %2197 = vmatprep.subr.bf16.mxu0 0
      %2198 = vmatpush1.bf16.msra.mxu0 0
      %2199 = vmatprep.subr.bf16.mxu0 0
      %2200 = vmatpush1.bf16.msra.mxu0 0
      %2201 = vmatprep.subr.bf16.mxu0 0
      %2202 = vmatpush1.bf16.msra.mxu0 0
      %2203 = vmatprep.subr.bf16.mxu0 0
      %2204 = vmatpush1.bf16.msra.mxu0 0
      %2205 = vmatprep.subr.bf16.mxu0 0
      %2206 = vmatpush1.bf16.msra.mxu0 0
      %2207 = vmatprep.subr.bf16.mxu0 0
      %2208 = vmatpush1.bf16.msra.mxu0 0
      %2209 = vmatprep.subr.bf16.mxu0 0
      %2210 = vmatpush1.bf16.msra.mxu0 0
      %2211 = vmatprep.subr.bf16.mxu0 0
      %2212 = vmatpush1.bf16.msra.mxu0 0
      %2213 = vmatprep.mubr.bf16.mxu0 0
      %2214 = vmatmul.mubr.bf16.gmra.mrb[0].mxu0 %v2176
      %v2215 = vpop.f32.mrb[0].mxu0
      %v2216 = vadd.f32 0.0, %v2215
      %v2217 = vpop.f32.mrb[0].mxu0
      %v2218 = vpop.f32.mrb[0].mxu0
      %v2219 = vpop.f32.mrb[0].mxu0
      %2220 = vdwg.mxu0
      %v2221 = vpack.c.bf16 %v2216, %v2216
      %v2223 = vsel %vm1799, %v2221, 0
      %v2226 = vsel %vm1863, %v1794, 0
      %2228 = vmatprep.subr.bf16.mxu0 0
      %2229 = vmatpush1.bf16.msra.mxu0 %v2226
      %2230 = vmatprep.subr.bf16.mxu0 0
      %2231 = vmatpush1.bf16.msra.mxu0 0
      %2232 = vmatprep.subr.bf16.mxu0 0
      %2233 = vmatpush1.bf16.msra.mxu0 0
      %2234 = vmatprep.subr.bf16.mxu0 0
      %2235 = vmatpush1.bf16.msra.mxu0 0
      %2236 = vmatprep.subr.bf16.mxu0 0
      %2237 = vmatpush1.bf16.msra.mxu0 0
      %2238 = vmatprep.subr.bf16.mxu0 0
      %2239 = vmatpush1.bf16.msra.mxu0 0
      %2240 = vmatprep.subr.bf16.mxu0 0
      %2241 = vmatpush1.bf16.msra.mxu0 0
      %2242 = vmatprep.subr.bf16.mxu0 0
      %2243 = vmatpush1.bf16.msra.mxu0 0
      %2244 = vmatprep.subr.bf16.mxu0 0
      %2245 = vmatpush1.bf16.msra.mxu0 0
      %2246 = vmatprep.subr.bf16.mxu0 0
      %2247 = vmatpush1.bf16.msra.mxu0 0
      %2248 = vmatprep.subr.bf16.mxu0 0
      %2249 = vmatpush1.bf16.msra.mxu0 0
      %2250 = vmatprep.subr.bf16.mxu0 0
      %2251 = vmatpush1.bf16.msra.mxu0 0
      %2252 = vmatprep.subr.bf16.mxu0 0
      %2253 = vmatpush1.bf16.msra.mxu0 0
      %2254 = vmatprep.subr.bf16.mxu0 0
      %2255 = vmatpush1.bf16.msra.mxu0 0
      %2256 = vmatprep.subr.bf16.mxu0 0
      %2257 = vmatpush1.bf16.msra.mxu0 0
      %2258 = vmatprep.subr.bf16.mxu0 0
      %2259 = vmatpush1.bf16.msra.mxu0 0
      %2260 = vmatprep.mubr.bf16.mxu0 0
      %2261 = vmatmul.mubr.bf16.gmra.mrb[0].mxu0 %v2223
      %v2262 = vpop.f32.mrb[0].mxu0
      %v2263 = vadd.f32 0.0, %v2262
      %v2264 = vpop.f32.mrb[0].mxu0
      %v2265 = vpop.f32.mrb[0].mxu0
      %v2266 = vpop.f32.mrb[0].mxu0
      %2267 = vdwg.mxu0
      %v2268 = vadd.f32 %v2106, %v2263
      %2269 = vrot.lane.b32.xlu0 %v1791, 104
      %v2270 = vpop.permute.xlu0 %2269
      %2271 = vrot.lane.b32.xlu0 %v1791, 72
      %v2272 = vpop.permute.xlu0 %2271
      %v2274 = vsel %vm1799, %v2270, 0
      %v2277 = vsel %vm1799, %v2272, 0
      %2279 = vmatprep.subr.bf16.mxu0 0
      %2280 = vmatpush1.bf16.xpose.msra.mxu0 %v2277
      %2281 = vmatprep.subr.bf16.mxu0 0
      %2282 = vmatpush1.bf16.xpose.msra.mxu0 0
      %2283 = vmatprep.subr.bf16.mxu0 0
      %2284 = vmatpush1.bf16.xpose.msra.mxu0 0
      %2285 = vmatprep.subr.bf16.mxu0 0
      %2286 = vmatpush1.bf16.xpose.msra.mxu0 0
      %2287 = vmatprep.subr.bf16.mxu0 0
      %2288 = vmatpush1.bf16.xpose.msra.mxu0 0
      %2289 = vmatprep.subr.bf16.mxu0 0
      %2290 = vmatpush1.bf16.xpose.msra.mxu0 0
      %2291 = vmatprep.subr.bf16.mxu0 0
      %2292 = vmatpush1.bf16.xpose.msra.mxu0 0
      %2293 = vmatprep.subr.bf16.mxu0 0
      %2294 = vmatpush1.bf16.xpose.msra.mxu0 0
      %2295 = vmatprep.subr.bf16.mxu0 0
      %2296 = vmatpush1.bf16.xpose.msra.mxu0 0
      %2297 = vmatprep.subr.bf16.mxu0 0
      %2298 = vmatpush1.bf16.xpose.msra.mxu0 0
      %2299 = vmatprep.subr.bf16.mxu0 0
      %2300 = vmatpush1.bf16.xpose.msra.mxu0 0
      %2301 = vmatprep.subr.bf16.mxu0 0
      %2302 = vmatpush1.bf16.xpose.msra.mxu0 0
      %2303 = vmatprep.subr.bf16.mxu0 0
      %2304 = vmatpush1.bf16.xpose.msra.mxu0 0
      %2305 = vmatprep.subr.bf16.mxu0 0
      %2306 = vmatpush1.bf16.xpose.msra.mxu0 0
      %2307 = vmatprep.subr.bf16.mxu0 0
      %2308 = vmatpush1.bf16.xpose.msra.mxu0 0
      %2309 = vmatprep.subr.bf16.mxu0 0
      %2310 = vmatpush1.bf16.xpose.msra.mxu0 0
      %2311 = vmatprep.mubr.bf16.mxu0 0
      %2312 = vmatmul.mubr.bf16.gmra.mrb[0].mxu0 %v2274
      %v2313 = vpop.f32.mrb[0].mxu0
      %v2314 = vadd.f32 0.0, %v2313
      %v2315 = vpop.f32.mrb[0].mxu0
      %v2316 = vpop.f32.mrb[0].mxu0
      %v2317 = vpop.f32.mrb[0].mxu0
      %2318 = vdwg.mxu0
      %v2319 = vsel %vm1799, %v2314, -inf
      %2320 = vmax.xlane.f32.xlu0 %v2319
      %v2321 = vpop.xlane.xlu0 %2320
      %v2322 = vsub.f32 %v2314, %v2321
      %v2323 = vmul.f32 %v2322, 1.442695
      %v2324 = vpow.pop %v2323
      %v2325 = vsel %vm1799, %v2324, 0.0
      %2326 = vadd.xlane.f32.xlu0 %v2325
      %v2327 = vpop.xlane.xlu0 %2326
      %v2328 = vrcp.pop %v2327
      %v2329 = vmul.f32 %v2324, %v2328
      %v2330 = vpack.c.bf16 %v2329, %v2329
      %2331 = vrot.lane.b32.xlu0 %v1791, 40
      %v2332 = vpop.permute.xlu0 %2331
      %v2334 = vsel %vm1799, %v2330, 0
      %v2337 = vsel %vm1863, %v2332, 0
      %2339 = vmatprep.subr.bf16.mxu0 0
      %2340 = vmatpush1.bf16.msra.mxu0 %v2337
      %2341 = vmatprep.subr.bf16.mxu0 0
      %2342 = vmatpush1.bf16.msra.mxu0 0
      %2343 = vmatprep.subr.bf16.mxu0 0
      %2344 = vmatpush1.bf16.msra.mxu0 0
      %2345 = vmatprep.subr.bf16.mxu0 0
      %2346 = vmatpush1.bf16.msra.mxu0 0
      %2347 = vmatprep.subr.bf16.mxu0 0
      %2348 = vmatpush1.bf16.msra.mxu0 0
      %2349 = vmatprep.subr.bf16.mxu0 0
      %2350 = vmatpush1.bf16.msra.mxu0 0
      %2351 = vmatprep.subr.bf16.mxu0 0
      %2352 = vmatpush1.bf16.msra.mxu0 0
      %2353 = vmatprep.subr.bf16.mxu0 0
      %2354 = vmatpush1.bf16.msra.mxu0 0
      %2355 = vmatprep.subr.bf16.mxu0 0
      %2356 = vmatpush1.bf16.msra.mxu0 0
      %2357 = vmatprep.subr.bf16.mxu0 0
      %2358 = vmatpush1.bf16.msra.mxu0 0
      %2359 = vmatprep.subr.bf16.mxu0 0
      %2360 = vmatpush1.bf16.msra.mxu0 0
      %2361 = vmatprep.subr.bf16.mxu0 0
      %2362 = vmatpush1.bf16.msra.mxu0 0
      %2363 = vmatprep.subr.bf16.mxu0 0
      %2364 = vmatpush1.bf16.msra.mxu0 0
      %2365 = vmatprep.subr.bf16.mxu0 0
      %2366 = vmatpush1.bf16.msra.mxu0 0
      %2367 = vmatprep.subr.bf16.mxu0 0
      %2368 = vmatpush1.bf16.msra.mxu0 0
      %2369 = vmatprep.subr.bf16.mxu0 0
      %2370 = vmatpush1.bf16.msra.mxu0 0
      %2371 = vmatprep.mubr.bf16.mxu0 0
      %2372 = vmatmul.mubr.bf16.gmra.mrb[0].mxu0 %v2334
      %v2373 = vpop.f32.mrb[0].mxu0
      %v2374 = vadd.f32 0.0, %v2373
      %v2375 = vpop.f32.mrb[0].mxu0
      %v2376 = vpop.f32.mrb[0].mxu0
      %v2377 = vpop.f32.mrb[0].mxu0
      %2378 = vdwg.mxu0
      %v2379 = vpack.c.bf16 %v2374, %v2374
      %v2381 = vsel %vm1799, %v2379, 0
      %v2384 = vsel %vm1863, %v1795, 0
      %2386 = vmatprep.subr.bf16.mxu0 0
      %2387 = vmatpush1.bf16.msra.mxu0 %v2384
      %2388 = vmatprep.subr.bf16.mxu0 0
      %2389 = vmatpush1.bf16.msra.mxu0 0
      %2390 = vmatprep.subr.bf16.mxu0 0
      %2391 = vmatpush1.bf16.msra.mxu0 0
      %2392 = vmatprep.subr.bf16.mxu0 0
      %2393 = vmatpush1.bf16.msra.mxu0 0
      %2394 = vmatprep.subr.bf16.mxu0 0
      %2395 = vmatpush1.bf16.msra.mxu0 0
      %2396 = vmatprep.subr.bf16.mxu0 0
      %2397 = vmatpush1.bf16.msra.mxu0 0
      %2398 = vmatprep.subr.bf16.mxu0 0
      %2399 = vmatpush1.bf16.msra.mxu0 0
      %2400 = vmatprep.subr.bf16.mxu0 0
      %2401 = vmatpush1.bf16.msra.mxu0 0
      %2402 = vmatprep.subr.bf16.mxu0 0
      %2403 = vmatpush1.bf16.msra.mxu0 0
      %2404 = vmatprep.subr.bf16.mxu0 0
      %2405 = vmatpush1.bf16.msra.mxu0 0
      %2406 = vmatprep.subr.bf16.mxu0 0
      %2407 = vmatpush1.bf16.msra.mxu0 0
      %2408 = vmatprep.subr.bf16.mxu0 0
      %2409 = vmatpush1.bf16.msra.mxu0 0
      %2410 = vmatprep.subr.bf16.mxu0 0
      %2411 = vmatpush1.bf16.msra.mxu0 0
      %2412 = vmatprep.subr.bf16.mxu0 0
      %2413 = vmatpush1.bf16.msra.mxu0 0
      %2414 = vmatprep.subr.bf16.mxu0 0
      %2415 = vmatpush1.bf16.msra.mxu0 0
      %2416 = vmatprep.subr.bf16.mxu0 0
      %2417 = vmatpush1.bf16.msra.mxu0 0
      %2418 = vmatprep.mubr.bf16.mxu0 0
      %2419 = vmatmul.mubr.bf16.gmra.mrb[0].mxu0 %v2381
      %v2420 = vpop.f32.mrb[0].mxu0
      %v2421 = vadd.f32 0.0, %v2420
      %v2422 = vpop.f32.mrb[0].mxu0
      %v2423 = vpop.f32.mrb[0].mxu0
      %v2424 = vpop.f32.mrb[0].mxu0
      %2425 = vdwg.mxu0
      %v2426 = vadd.f32 %v2268, %v2421
      %v2427 = vld [vmem:[%s10] sm:$0x1]
      %v2429 = vlaneseq
      %v2430 = vshrl.u32 %v2429, 7
      %v2431 = vsub.s32 0, %v2430
      %v2432 = vrot.slane %v2427, %v2431
      %v2434 = vadd.f32 %v2426, %v2432
      %v2435 = vld [vmem:[%s11] sm:$0x1]
      %v2436 = vld [vmem:[%s12] sm:$0x1]
      %v2437 = vadd.f32 %v1723, %v2434
      %v2438 = vsel %vm1617, %v2437, 0.0
      %2439 = vadd.xlane.f32.xlu0 %v2438
      %v2440 = vpop.xlane.xlu0 %2439
      %v2441 = vrcp.pop 32.0
      %v2442 = vmul.f32 %v2440, %v2441
      %v2443 = vsub.f32 %v2437, %v2442
      %v2444 = vmul.f32 %v2443, %v2443
      %v2445 = vsel %vm1617, %v2444, 0.0
      %2446 = vadd.xlane.f32.xlu0 %v2445
      %v2447 = vpop.xlane.xlu0 %2446
      %v2448 = vmul.f32 %v2447, %v2441
      %v2449 = vadd.f32 %v2448, 1e-05
      %v2450 = vrsqrt.pop %v2449
      %v2451 = vmul.f32 %v2443, %v2450
      %v2453 = vlaneseq
      %v2454 = vshrl.u32 %v2453, 7
      %v2455 = vsub.s32 0, %v2454
      %v2456 = vrot.slane %v2435, %v2455
      %v2458 = vmul.f32 %v2451, %v2456
      %v2460 = vlaneseq
      %v2461 = vshrl.u32 %v2460, 7
      %v2462 = vsub.s32 0, %v2461
      %v2463 = vrot.slane %v2436, %v2462
      %v2465 = vadd.f32 %v2458, %v2463
      %v2466 = vpack.c.bf16 %v2465, %v2465
      %v2467 = vld [vmem:[%s13] sm:$0xf]
      %v2468 = vld [vmem:[%s13 + $0x4] sm:$0xf]
      %v2469 = vld [vmem:[%s13 + $0x8] sm:$0xf]
      %v2470 = vld [vmem:[%s13 + $0xc] sm:$0xf]
      %v2471 = vld [vmem:[%s14] sm:$0x1]
      %v2473 = vlaneseq
      %v2474 = vshrl.u32 %v2473, 7
      %v2475 = vsub.s32 0, %v2474
      %v2476 = vrot.slane %v2471, %v2475
      %v2482 = vunpack.c.l.b16 %v2467
      %v2483 = vunpack.c.l.b16 %v2468
      %v2484 = vunpack.c.l.b16 %v2469
      %v2485 = vunpack.c.l.b16 %v2470
      %v2486 = vpack.c.b16 %v2483, %v2482
      %v2487 = vpack.c.b16 %v2485, %v2484
      %v2491 = vsel %vm1617, %v2466, 0
      %2493 = vmatprep.subr.bf16.mxu0 0
      %2494 = vmatpush1.bf16.msra.mxu0 %v2486
      %2495 = vmatprep.subr.bf16.mxu0 0
      %2496 = vmatpush1.bf16.msra.mxu0 %v2487
      %2497 = vmatprep.subr.bf16.mxu0 0
      %2498 = vmatpush1.bf16.msra.mxu0 0
      %2499 = vmatprep.subr.bf16.mxu0 0
      %2500 = vmatpush1.bf16.msra.mxu0 0
      %2501 = vmatprep.subr.bf16.mxu0 0
      %2502 = vmatpush1.bf16.msra.mxu0 0
      %2503 = vmatprep.subr.bf16.mxu0 0
      %2504 = vmatpush1.bf16.msra.mxu0 0
      %2505 = vmatprep.subr.bf16.mxu0 0
      %2506 = vmatpush1.bf16.msra.mxu0 0
      %2507 = vmatprep.subr.bf16.mxu0 0
      %2508 = vmatpush1.bf16.msra.mxu0 0
      %2509 = vmatprep.subr.bf16.mxu0 0
      %2510 = vmatpush1.bf16.msra.mxu0 0
      %2511 = vmatprep.subr.bf16.mxu0 0
      %2512 = vmatpush1.bf16.msra.mxu0 0
      %2513 = vmatprep.subr.bf16.mxu0 0
      %2514 = vmatpush1.bf16.msra.mxu0 0
      %2515 = vmatprep.subr.bf16.mxu0 0
      %2516 = vmatpush1.bf16.msra.mxu0 0
      %2517 = vmatprep.subr.bf16.mxu0 0
      %2518 = vmatpush1.bf16.msra.mxu0 0
      %2519 = vmatprep.subr.bf16.mxu0 0
      %2520 = vmatpush1.bf16.msra.mxu0 0
      %2521 = vmatprep.subr.bf16.mxu0 0
      %2522 = vmatpush1.bf16.msra.mxu0 0
      %2523 = vmatprep.subr.bf16.mxu0 0
      %2524 = vmatpush1.bf16.msra.mxu0 0
      %2525 = vmatprep.mubr.bf16.mxu0 0
      %2526 = vmatmul.mubr.bf16.gmra.mrb[0].mxu0 %v2491
      %v2527 = vpop.f32.mrb[0].mxu0
      %v2528 = vadd.f32 %v2476, %v2527
      %v2529 = vpop.f32.mrb[0].mxu0
      %v2530 = vpop.f32.mrb[0].mxu0
      %v2531 = vpop.f32.mrb[0].mxu0
      %2532 = vdwg.mxu0
      %v2533 = vmax.f32 %v2528, 0.0
      %v2534 = vpack.c.bf16 %v2533, %v2533
      %v2535 = vld [vmem:[%s15] sm:$0xf]
      %v2536 = vld [vmem:[%s15 + $0x4] sm:$0xf]
      %v2537 = vld [vmem:[%s15 + $0x8] sm:$0xf]
      %v2538 = vld [vmem:[%s15 + $0xc] sm:$0xf]
      %v2539 = vld [vmem:[%s15 + $0x10] sm:$0xf]
      %v2540 = vld [vmem:[%s15 + $0x14] sm:$0xf]
      %v2541 = vld [vmem:[%s15 + $0x18] sm:$0xf]
      %v2542 = vld [vmem:[%s15 + $0x1c] sm:$0xf]
      %v2543 = vld [vmem:[%s16] sm:$0x1]
      %v2545 = vlaneseq
      %v2546 = vshrl.u32 %v2545, 7
      %v2547 = vsub.s32 0, %v2546
      %v2548 = vrot.slane %v2543, %v2547
      %v2558 = vunpack.c.l.b16 %v2535
      %v2559 = vunpack.c.l.b16 %v2536
      %v2560 = vunpack.c.l.b16 %v2537
      %v2561 = vunpack.c.l.b16 %v2538
      %v2562 = vunpack.c.l.b16 %v2539
      %v2563 = vunpack.c.l.b16 %v2540
      %v2564 = vunpack.c.l.b16 %v2541
      %v2565 = vunpack.c.l.b16 %v2542
      %v2566 = vpack.c.b16 %v2559, %v2558
      %v2567 = vpack.c.b16 %v2561, %v2560
      %v2568 = vpack.c.b16 %v2563, %v2562
      %v2569 = vpack.c.b16 %v2565, %v2564
      %vm2574 = vcmask 523264
      %v2576 = vsel %vm2574, %v2534, 0
      %2578 = vmatprep.subr.bf16.mxu0 0
      %2579 = vmatpush1.bf16.msra.mxu0 %v2566
      %2580 = vmatprep.subr.bf16.mxu0 0
      %2581 = vmatpush1.bf16.msra.mxu0 %v2567
      %2582 = vmatprep.subr.bf16.mxu0 0
      %2583 = vmatpush1.bf16.msra.mxu0 %v2568
      %2584 = vmatprep.subr.bf16.mxu0 0
      %2585 = vmatpush1.bf16.msra.mxu0 %v2569
      %2586 = vmatprep.subr.bf16.mxu0 0
      %2587 = vmatpush1.bf16.msra.mxu0 0
      %2588 = vmatprep.subr.bf16.mxu0 0
      %2589 = vmatpush1.bf16.msra.mxu0 0
      %2590 = vmatprep.subr.bf16.mxu0 0
      %2591 = vmatpush1.bf16.msra.mxu0 0
      %2592 = vmatprep.subr.bf16.mxu0 0
      %2593 = vmatpush1.bf16.msra.mxu0 0
      %2594 = vmatprep.subr.bf16.mxu0 0
      %2595 = vmatpush1.bf16.msra.mxu0 0
      %2596 = vmatprep.subr.bf16.mxu0 0
      %2597 = vmatpush1.bf16.msra.mxu0 0
      %2598 = vmatprep.subr.bf16.mxu0 0
      %2599 = vmatpush1.bf16.msra.mxu0 0
      %2600 = vmatprep.subr.bf16.mxu0 0
      %2601 = vmatpush1.bf16.msra.mxu0 0
      %2602 = vmatprep.subr.bf16.mxu0 0
      %2603 = vmatpush1.bf16.msra.mxu0 0
      %2604 = vmatprep.subr.bf16.mxu0 0
      %2605 = vmatpush1.bf16.msra.mxu0 0
      %2606 = vmatprep.subr.bf16.mxu0 0
      %2607 = vmatpush1.bf16.msra.mxu0 0
      %2608 = vmatprep.subr.bf16.mxu0 0
      %2609 = vmatpush1.bf16.msra.mxu0 0
      %2610 = vmatprep.mubr.bf16.mxu0 0
      %2611 = vmatmul.mubr.bf16.gmra.mrb[0].mxu0 %v2576
      %v2612 = vpop.f32.mrb[0].mxu0
      %v2613 = vadd.f32 %v2548, %v2612
      %v2614 = vpop.f32.mrb[0].mxu0
      %v2615 = vpop.f32.mrb[0].mxu0
      %v2616 = vpop.f32.mrb[0].mxu0
      %2617 = vdwg.mxu0
      %v2618 = vld [vmem:[%s17] sm:$0x1]
      %v2619 = vld [vmem:[%s18] sm:$0x1]
      %v2620 = vadd.f32 %v2465, %v2613
      %v2621 = vsel %vm1617, %v2620, 0.0
      %2622 = vadd.xlane.f32.xlu0 %v2621
      %v2623 = vpop.xlane.xlu0 %2622
      %v2624 = vmul.f32 %v2623, %v2441
      %v2625 = vsub.f32 %v2620, %v2624
      %v2626 = vmul.f32 %v2625, %v2625
      %v2627 = vsel %vm1617, %v2626, 0.0
      %2628 = vadd.xlane.f32.xlu0 %v2627
      %v2629 = vpop.xlane.xlu0 %2628
      %v2630 = vmul.f32 %v2629, %v2441
      %v2631 = vadd.f32 %v2630, 1e-05
      %v2632 = vrsqrt.pop %v2631
      %v2633 = vmul.f32 %v2625, %v2632
      %v2635 = vlaneseq
      %v2636 = vshrl.u32 %v2635, 7
      %v2637 = vsub.s32 0, %v2636
      %v2638 = vrot.slane %v2618, %v2637
      %v2640 = vmul.f32 %v2633, %v2638
      %v2642 = vlaneseq
      %v2643 = vshrl.u32 %v2642, 7
      %v2644 = vsub.s32 0, %v2643
      %v2645 = vrot.slane %v2619, %v2644
      %v2647 = vadd.f32 %v2640, %v2645
      %v2648 = vpack.c.bf16 %v2647, %v2647
      %s2649 = scalar_lea.vmem %s7, 16
      %v2650 = vld [vmem:[%s2649] sm:$0xf]
      %v2651 = vld [vmem:[%s2649 + $0x4] sm:$0xf]
      %v2652 = vld [vmem:[%s2649 + $0x8] sm:$0xf]
      %v2653 = vld [vmem:[%s2649 + $0xc] sm:$0xf]
      %s2654 = scalar_lea.vmem %s8, 1
      %v2655 = vld [vmem:[%s2654] sm:$0x1]
      %v2657 = vlaneseq
      %v2658 = vshrl.u32 %v2657, 7
      %v2659 = vsub.s32 0, %v2658
      %v2660 = vrot.slane %v2655, %v2659
      %v2666 = vunpack.c.l.b16 %v2650
      %v2667 = vunpack.c.l.b16 %v2651
      %v2668 = vunpack.c.l.b16 %v2652
      %v2669 = vunpack.c.l.b16 %v2653
      %v2670 = vpack.c.b16 %v2667, %v2666
      %v2671 = vpack.c.b16 %v2669, %v2668
      %v2675 = vsel %vm1617, %v2648, 0
      %2677 = vmatprep.subr.bf16.mxu0 0
      %2678 = vmatpush1.bf16.msra.mxu0 %v2670
      %2679 = vmatprep.subr.bf16.mxu0 0
      %2680 = vmatpush1.bf16.msra.mxu0 %v2671
      %2681 = vmatprep.subr.bf16.mxu0 0
      %2682 = vmatpush1.bf16.msra.mxu0 0
      %2683 = vmatprep.subr.bf16.mxu0 0
      %2684 = vmatpush1.bf16.msra.mxu0 0
      %2685 = vmatprep.subr.bf16.mxu0 0
      %2686 = vmatpush1.bf16.msra.mxu0 0
      %2687 = vmatprep.subr.bf16.mxu0 0
      %2688 = vmatpush1.bf16.msra.mxu0 0
      %2689 = vmatprep.subr.bf16.mxu0 0
      %2690 = vmatpush1.bf16.msra.mxu0 0
      %2691 = vmatprep.subr.bf16.mxu0 0
      %2692 = vmatpush1.bf16.msra.mxu0 0
      %2693 = vmatprep.subr.bf16.mxu0 0
      %2694 = vmatpush1.bf16.msra.mxu0 0
      %2695 = vmatprep.subr.bf16.mxu0 0
      %2696 = vmatpush1.bf16.msra.mxu0 0
      %2697 = vmatprep.subr.bf16.mxu0 0
      %2698 = vmatpush1.bf16.msra.mxu0 0
      %2699 = vmatprep.subr.bf16.mxu0 0
      %2700 = vmatpush1.bf16.msra.mxu0 0
      %2701 = vmatprep.subr.bf16.mxu0 0
      %2702 = vmatpush1.bf16.msra.mxu0 0
      %2703 = vmatprep.subr.bf16.mxu0 0
      %2704 = vmatpush1.bf16.msra.mxu0 0
      %2705 = vmatprep.subr.bf16.mxu0 0
      %2706 = vmatpush1.bf16.msra.mxu0 0
      %2707 = vmatprep.subr.bf16.mxu0 0
      %2708 = vmatpush1.bf16.msra.mxu0 0
      %2709 = vmatprep.mubr.bf16.mxu0 0
      %2710 = vmatmul.mubr.bf16.gmra.mrb[0].mxu0 %v2675
      %v2711 = vpop.f32.mrb[0].mxu0
      %v2712 = vadd.f32 %v2660, %v2711
      %v2713 = vpop.f32.mrb[0].mxu0
      %v2714 = vpop.f32.mrb[0].mxu0
      %v2715 = vpop.f32.mrb[0].mxu0
      %2716 = vdwg.mxu0
      %v2717 = vpack.c.bf16 %v2712, %v2712
      %s2718 = scalar_lea.vmem %s9, 16
      %v2719 = vld [vmem:[%s2718] sm:$0xf]
      %v2720 = vld [vmem:[%s2718 + $0x4] sm:$0xf]
      %v2721 = vld [vmem:[%s2718 + $0x8] sm:$0xf]
      %v2722 = vld [vmem:[%s2718 + $0xc] sm:$0xf]
      %2724 = vrot.lane.b32.xlu0 %v2717, 96
      %v2725 = vpop.permute.xlu0 %2724
      %v2727 = vsel %vm1799, %v2717, 0
      %v2730 = vsel %vm1799, %v2725, 0
      %2732 = vmatprep.subr.bf16.mxu0 0
      %2733 = vmatpush1.bf16.xpose.msra.mxu0 %v2730
      %2734 = vmatprep.subr.bf16.mxu0 0
      %2735 = vmatpush1.bf16.xpose.msra.mxu0 0
      %2736 = vmatprep.subr.bf16.mxu0 0
      %2737 = vmatpush1.bf16.xpose.msra.mxu0 0
      %2738 = vmatprep.subr.bf16.mxu0 0
      %2739 = vmatpush1.bf16.xpose.msra.mxu0 0
      %2740 = vmatprep.subr.bf16.mxu0 0
      %2741 = vmatpush1.bf16.xpose.msra.mxu0 0
      %2742 = vmatprep.subr.bf16.mxu0 0
      %2743 = vmatpush1.bf16.xpose.msra.mxu0 0
      %2744 = vmatprep.subr.bf16.mxu0 0
      %2745 = vmatpush1.bf16.xpose.msra.mxu0 0
      %2746 = vmatprep.subr.bf16.mxu0 0
      %2747 = vmatpush1.bf16.xpose.msra.mxu0 0
      %2748 = vmatprep.subr.bf16.mxu0 0
      %2749 = vmatpush1.bf16.xpose.msra.mxu0 0
      %2750 = vmatprep.subr.bf16.mxu0 0
      %2751 = vmatpush1.bf16.xpose.msra.mxu0 0
      %2752 = vmatprep.subr.bf16.mxu0 0
      %2753 = vmatpush1.bf16.xpose.msra.mxu0 0
      %2754 = vmatprep.subr.bf16.mxu0 0
      %2755 = vmatpush1.bf16.xpose.msra.mxu0 0
      %2756 = vmatprep.subr.bf16.mxu0 0
      %2757 = vmatpush1.bf16.xpose.msra.mxu0 0
      %2758 = vmatprep.subr.bf16.mxu0 0
      %2759 = vmatpush1.bf16.xpose.msra.mxu0 0
      %2760 = vmatprep.subr.bf16.mxu0 0
      %2761 = vmatpush1.bf16.xpose.msra.mxu0 0
      %2762 = vmatprep.subr.bf16.mxu0 0
      %2763 = vmatpush1.bf16.xpose.msra.mxu0 0
      %2764 = vmatprep.mubr.bf16.mxu0 0
      %2765 = vmatmul.mubr.bf16.gmra.mrb[0].mxu0 %v2727
      %v2766 = vpop.f32.mrb[0].mxu0
      %v2767 = vadd.f32 0.0, %v2766
      %v2768 = vpop.f32.mrb[0].mxu0
      %v2769 = vpop.f32.mrb[0].mxu0
      %v2770 = vpop.f32.mrb[0].mxu0
      %2771 = vdwg.mxu0
      %v2772 = vsel %vm1799, %v2767, -inf
      %2773 = vmax.xlane.f32.xlu0 %v2772
      %v2774 = vpop.xlane.xlu0 %2773
      %v2775 = vsub.f32 %v2767, %v2774
      %v2776 = vmul.f32 %v2775, 1.442695
      %v2777 = vpow.pop %v2776
      %v2778 = vsel %vm1799, %v2777, 0.0
      %2779 = vadd.xlane.f32.xlu0 %v2778
      %v2780 = vpop.xlane.xlu0 %2779
      %v2781 = vrcp.pop %v2780
      %v2782 = vmul.f32 %v2777, %v2781
      %v2783 = vpack.c.bf16 %v2782, %v2782
      %2784 = vrot.lane.b32.xlu0 %v2717, 64
      %v2785 = vpop.permute.xlu0 %2784
      %v2787 = vsel %vm1799, %v2783, 0
      %v2790 = vsel %vm1863, %v2785, 0
      %2792 = vmatprep.subr.bf16.mxu0 0
      %2793 = vmatpush1.bf16.msra.mxu0 %v2790
      %2794 = vmatprep.subr.bf16.mxu0 0
      %2795 = vmatpush1.bf16.msra.mxu0 0
      %2796 = vmatprep.subr.bf16.mxu0 0
      %2797 = vmatpush1.bf16.msra.mxu0 0
      %2798 = vmatprep.subr.bf16.mxu0 0
      %2799 = vmatpush1.bf16.msra.mxu0 0
      %2800 = vmatprep.subr.bf16.mxu0 0
      %2801 = vmatpush1.bf16.msra.mxu0 0
      %2802 = vmatprep.subr.bf16.mxu0 0
      %2803 = vmatpush1.bf16.msra.mxu0 0
      %2804 = vmatprep.subr.bf16.mxu0 0
      %2805 = vmatpush1.bf16.msra.mxu0 0
      %2806 = vmatprep.subr.bf16.mxu0 0
      %2807 = vmatpush1.bf16.msra.mxu0 0
      %2808 = vmatprep.subr.bf16.mxu0 0
      %2809 = vmatpush1.bf16.msra.mxu0 0
      %2810 = vmatprep.subr.bf16.mxu0 0
      %2811 = vmatpush1.bf16.msra.mxu0 0
      %2812 = vmatprep.subr.bf16.mxu0 0
      %2813 = vmatpush1.bf16.msra.mxu0 0
      %2814 = vmatprep.subr.bf16.mxu0 0
      %2815 = vmatpush1.bf16.msra.mxu0 0
      %2816 = vmatprep.subr.bf16.mxu0 0
      %2817 = vmatpush1.bf16.msra.mxu0 0
      %2818 = vmatprep.subr.bf16.mxu0 0
      %2819 = vmatpush1.bf16.msra.mxu0 0
      %2820 = vmatprep.subr.bf16.mxu0 0
      %2821 = vmatpush1.bf16.msra.mxu0 0
      %2822 = vmatprep.subr.bf16.mxu0 0
      %2823 = vmatpush1.bf16.msra.mxu0 0
      %2824 = vmatprep.mubr.bf16.mxu0 0
      %2825 = vmatmul.mubr.bf16.gmra.mrb[0].mxu0 %v2787
      %v2826 = vpop.f32.mrb[0].mxu0
      %v2827 = vadd.f32 0.0, %v2826
      %v2828 = vpop.f32.mrb[0].mxu0
      %v2829 = vpop.f32.mrb[0].mxu0
      %v2830 = vpop.f32.mrb[0].mxu0
      %2831 = vdwg.mxu0
      %v2832 = vpack.c.bf16 %v2827, %v2827
      %2833 = vrot.lane.b32.xlu0 %v2717, 120
      %v2834 = vpop.permute.xlu0 %2833
      %2835 = vrot.lane.b32.xlu0 %v2717, 88
      %v2836 = vpop.permute.xlu0 %2835
      %v2838 = vsel %vm1799, %v2834, 0
      %v2841 = vsel %vm1799, %v2836, 0
      %2843 = vmatprep.subr.bf16.mxu0 0
      %2844 = vmatpush1.bf16.xpose.msra.mxu0 %v2841
      %2845 = vmatprep.subr.bf16.mxu0 0
      %2846 = vmatpush1.bf16.xpose.msra.mxu0 0
      %2847 = vmatprep.subr.bf16.mxu0 0
      %2848 = vmatpush1.bf16.xpose.msra.mxu0 0
      %2849 = vmatprep.subr.bf16.mxu0 0
      %2850 = vmatpush1.bf16.xpose.msra.mxu0 0
      %2851 = vmatprep.subr.bf16.mxu0 0
      %2852 = vmatpush1.bf16.xpose.msra.mxu0 0
      %2853 = vmatprep.subr.bf16.mxu0 0
      %2854 = vmatpush1.bf16.xpose.msra.mxu0 0
      %2855 = vmatprep.subr.bf16.mxu0 0
      %2856 = vmatpush1.bf16.xpose.msra.mxu0 0
      %2857 = vmatprep.subr.bf16.mxu0 0
      %2858 = vmatpush1.bf16.xpose.msra.mxu0 0
      %2859 = vmatprep.subr.bf16.mxu0 0
      %2860 = vmatpush1.bf16.xpose.msra.mxu0 0
      %2861 = vmatprep.subr.bf16.mxu0 0
      %2862 = vmatpush1.bf16.xpose.msra.mxu0 0
      %2863 = vmatprep.subr.bf16.mxu0 0
      %2864 = vmatpush1.bf16.xpose.msra.mxu0 0
      %2865 = vmatprep.subr.bf16.mxu0 0
      %2866 = vmatpush1.bf16.xpose.msra.mxu0 0
      %2867 = vmatprep.subr.bf16.mxu0 0
      %2868 = vmatpush1.bf16.xpose.msra.mxu0 0
      %2869 = vmatprep.subr.bf16.mxu0 0
      %2870 = vmatpush1.bf16.xpose.msra.mxu0 0
      %2871 = vmatprep.subr.bf16.mxu0 0
      %2872 = vmatpush1.bf16.xpose.msra.mxu0 0
      %2873 = vmatprep.subr.bf16.mxu0 0
      %2874 = vmatpush1.bf16.xpose.msra.mxu0 0
      %2875 = vmatprep.mubr.bf16.mxu0 0
      %2876 = vmatmul.mubr.bf16.gmra.mrb[0].mxu0 %v2838
      %v2877 = vpop.f32.mrb[0].mxu0
      %v2878 = vadd.f32 0.0, %v2877
      %v2879 = vpop.f32.mrb[0].mxu0
      %v2880 = vpop.f32.mrb[0].mxu0
      %v2881 = vpop.f32.mrb[0].mxu0
      %2882 = vdwg.mxu0
      %v2883 = vsel %vm1799, %v2878, -inf
      %2884 = vmax.xlane.f32.xlu0 %v2883
      %v2885 = vpop.xlane.xlu0 %2884
      %v2886 = vsub.f32 %v2878, %v2885
      %v2887 = vmul.f32 %v2886, 1.442695
      %v2888 = vpow.pop %v2887
      %v2889 = vsel %vm1799, %v2888, 0.0
      %2890 = vadd.xlane.f32.xlu0 %v2889
      %v2891 = vpop.xlane.xlu0 %2890
      %v2892 = vrcp.pop %v2891
      %v2893 = vmul.f32 %v2888, %v2892
      %v2894 = vpack.c.bf16 %v2893, %v2893
      %2895 = vrot.lane.b32.xlu0 %v2717, 56
      %v2896 = vpop.permute.xlu0 %2895
      %v2898 = vsel %vm1799, %v2894, 0
      %v2901 = vsel %vm1863, %v2896, 0
      %2903 = vmatprep.subr.bf16.mxu0 0
      %2904 = vmatpush1.bf16.msra.mxu0 %v2901
      %2905 = vmatprep.subr.bf16.mxu0 0
      %2906 = vmatpush1.bf16.msra.mxu0 0
      %2907 = vmatprep.subr.bf16.mxu0 0
      %2908 = vmatpush1.bf16.msra.mxu0 0
      %2909 = vmatprep.subr.bf16.mxu0 0
      %2910 = vmatpush1.bf16.msra.mxu0 0
      %2911 = vmatprep.subr.bf16.mxu0 0
      %2912 = vmatpush1.bf16.msra.mxu0 0
      %2913 = vmatprep.subr.bf16.mxu0 0
      %2914 = vmatpush1.bf16.msra.mxu0 0
      %2915 = vmatprep.subr.bf16.mxu0 0
      %2916 = vmatpush1.bf16.msra.mxu0 0
      %2917 = vmatprep.subr.bf16.mxu0 0
      %2918 = vmatpush1.bf16.msra.mxu0 0
      %2919 = vmatprep.subr.bf16.mxu0 0
      %2920 = vmatpush1.bf16.msra.mxu0 0
      %2921 = vmatprep.subr.bf16.mxu0 0
      %2922 = vmatpush1.bf16.msra.mxu0 0
      %2923 = vmatprep.subr.bf16.mxu0 0
      %2924 = vmatpush1.bf16.msra.mxu0 0
      %2925 = vmatprep.subr.bf16.mxu0 0
      %2926 = vmatpush1.bf16.msra.mxu0 0
      %2927 = vmatprep.subr.bf16.mxu0 0
      %2928 = vmatpush1.bf16.msra.mxu0 0
      %2929 = vmatprep.subr.bf16.mxu0 0
      %2930 = vmatpush1.bf16.msra.mxu0 0
      %2931 = vmatprep.subr.bf16.mxu0 0
      %2932 = vmatpush1.bf16.msra.mxu0 0
      %2933 = vmatprep.subr.bf16.mxu0 0
      %2934 = vmatpush1.bf16.msra.mxu0 0
      %2935 = vmatprep.mubr.bf16.mxu0 0
      %2936 = vmatmul.mubr.bf16.gmra.mrb[0].mxu0 %v2898
      %v2937 = vpop.f32.mrb[0].mxu0
      %v2938 = vadd.f32 0.0, %v2937
      %v2939 = vpop.f32.mrb[0].mxu0
      %v2940 = vpop.f32.mrb[0].mxu0
      %v2941 = vpop.f32.mrb[0].mxu0
      %2942 = vdwg.mxu0
      %v2943 = vpack.c.bf16 %v2938, %v2938
      %v2945 = vsel %vm1799, %v2943, 0
      %v2948 = vsel %vm1863, %v2720, 0
      %2950 = vmatprep.subr.bf16.mxu0 0
      %2951 = vmatpush1.bf16.msra.mxu0 %v2948
      %2952 = vmatprep.subr.bf16.mxu0 0
      %2953 = vmatpush1.bf16.msra.mxu0 0
      %2954 = vmatprep.subr.bf16.mxu0 0
      %2955 = vmatpush1.bf16.msra.mxu0 0
      %2956 = vmatprep.subr.bf16.mxu0 0
      %2957 = vmatpush1.bf16.msra.mxu0 0
      %2958 = vmatprep.subr.bf16.mxu0 0
      %2959 = vmatpush1.bf16.msra.mxu0 0
      %2960 = vmatprep.subr.bf16.mxu0 0
      %2961 = vmatpush1.bf16.msra.mxu0 0
      %2962 = vmatprep.subr.bf16.mxu0 0
      %2963 = vmatpush1.bf16.msra.mxu0 0
      %2964 = vmatprep.subr.bf16.mxu0 0
      %2965 = vmatpush1.bf16.msra.mxu0 0
      %2966 = vmatprep.subr.bf16.mxu0 0
      %2967 = vmatpush1.bf16.msra.mxu0 0
      %2968 = vmatprep.subr.bf16.mxu0 0
      %2969 = vmatpush1.bf16.msra.mxu0 0
      %2970 = vmatprep.subr.bf16.mxu0 0
      %2971 = vmatpush1.bf16.msra.mxu0 0
      %2972 = vmatprep.subr.bf16.mxu0 0
      %2973 = vmatpush1.bf16.msra.mxu0 0
      %2974 = vmatprep.subr.bf16.mxu0 0
      %2975 = vmatpush1.bf16.msra.mxu0 0
      %2976 = vmatprep.subr.bf16.mxu0 0
      %2977 = vmatpush1.bf16.msra.mxu0 0
      %2978 = vmatprep.subr.bf16.mxu0 0
      %2979 = vmatpush1.bf16.msra.mxu0 0
      %2980 = vmatprep.subr.bf16.mxu0 0
      %2981 = vmatpush1.bf16.msra.mxu0 0
      %2982 = vmatprep.mubr.bf16.mxu0 0
      %2983 = vmatmul.mubr.bf16.gmra.mrb[0].mxu0 %v2945
      %v2984 = vpop.f32.mrb[0].mxu0
      %v2985 = vadd.f32 0.0, %v2984
      %v2986 = vpop.f32.mrb[0].mxu0
      %v2987 = vpop.f32.mrb[0].mxu0
      %v2988 = vpop.f32.mrb[0].mxu0
      %2989 = vdwg.mxu0
      %v2991 = vsel %vm1799, %v2832, 0
      %v2994 = vsel %vm1863, %v2719, 0
      %2996 = vmatprep.subr.bf16.mxu0 0
      %2997 = vmatpush1.bf16.msra.mxu0 %v2994
      %2998 = vmatprep.subr.bf16.mxu0 0
      %2999 = vmatpush1.bf16.msra.mxu0 0
      %3000 = vmatprep.subr.bf16.mxu0 0
      %3001 = vmatpush1.bf16.msra.mxu0 0
      %3002 = vmatprep.subr.bf16.mxu0 0
      %3003 = vmatpush1.bf16.msra.mxu0 0
      %3004 = vmatprep.subr.bf16.mxu0 0
      %3005 = vmatpush1.bf16.msra.mxu0 0
      %3006 = vmatprep.subr.bf16.mxu0 0
      %3007 = vmatpush1.bf16.msra.mxu0 0
      %3008 = vmatprep.subr.bf16.mxu0 0
      %3009 = vmatpush1.bf16.msra.mxu0 0
      %3010 = vmatprep.subr.bf16.mxu0 0
      %3011 = vmatpush1.bf16.msra.mxu0 0
      %3012 = vmatprep.subr.bf16.mxu0 0
      %3013 = vmatpush1.bf16.msra.mxu0 0
      %3014 = vmatprep.subr.bf16.mxu0 0
      %3015 = vmatpush1.bf16.msra.mxu0 0
      %3016 = vmatprep.subr.bf16.mxu0 0
      %3017 = vmatpush1.bf16.msra.mxu0 0
      %3018 = vmatprep.subr.bf16.mxu0 0
      %3019 = vmatpush1.bf16.msra.mxu0 0
      %3020 = vmatprep.subr.bf16.mxu0 0
      %3021 = vmatpush1.bf16.msra.mxu0 0
      %3022 = vmatprep.subr.bf16.mxu0 0
      %3023 = vmatpush1.bf16.msra.mxu0 0
      %3024 = vmatprep.subr.bf16.mxu0 0
      %3025 = vmatpush1.bf16.msra.mxu0 0
      %3026 = vmatprep.subr.bf16.mxu0 0
      %3027 = vmatpush1.bf16.msra.mxu0 0
      %3028 = vmatprep.mubr.bf16.mxu0 0
      %3029 = vmatmul.mubr.bf16.gmra.mrb[0].mxu0 %v2991
      %v3030 = vpop.f32.mrb[0].mxu0
      %v3031 = vadd.f32 %v2985, %v3030
      %v3032 = vpop.f32.mrb[0].mxu0
      %v3033 = vpop.f32.mrb[0].mxu0
      %v3034 = vpop.f32.mrb[0].mxu0
      %3035 = vdwg.mxu0
      %3036 = vrot.lane.b32.xlu0 %v2717, 112
      %v3037 = vpop.permute.xlu0 %3036
      %3038 = vrot.lane.b32.xlu0 %v2717, 80
      %v3039 = vpop.permute.xlu0 %3038
      %v3041 = vsel %vm1799, %v3037, 0
      %v3044 = vsel %vm1799, %v3039, 0
      %3046 = vmatprep.subr.bf16.mxu0 0
      %3047 = vmatpush1.bf16.xpose.msra.mxu0 %v3044
      %3048 = vmatprep.subr.bf16.mxu0 0
      %3049 = vmatpush1.bf16.xpose.msra.mxu0 0
      %3050 = vmatprep.subr.bf16.mxu0 0
      %3051 = vmatpush1.bf16.xpose.msra.mxu0 0
      %3052 = vmatprep.subr.bf16.mxu0 0
      %3053 = vmatpush1.bf16.xpose.msra.mxu0 0
      %3054 = vmatprep.subr.bf16.mxu0 0
      %3055 = vmatpush1.bf16.xpose.msra.mxu0 0
      %3056 = vmatprep.subr.bf16.mxu0 0
      %3057 = vmatpush1.bf16.xpose.msra.mxu0 0
      %3058 = vmatprep.subr.bf16.mxu0 0
      %3059 = vmatpush1.bf16.xpose.msra.mxu0 0
      %3060 = vmatprep.subr.bf16.mxu0 0
      %3061 = vmatpush1.bf16.xpose.msra.mxu0 0
      %3062 = vmatprep.subr.bf16.mxu0 0
      %3063 = vmatpush1.bf16.xpose.msra.mxu0 0
      %3064 = vmatprep.subr.bf16.mxu0 0
      %3065 = vmatpush1.bf16.xpose.msra.mxu0 0
      %3066 = vmatprep.subr.bf16.mxu0 0
      %3067 = vmatpush1.bf16.xpose.msra.mxu0 0
      %3068 = vmatprep.subr.bf16.mxu0 0
      %3069 = vmatpush1.bf16.xpose.msra.mxu0 0
      %3070 = vmatprep.subr.bf16.mxu0 0
      %3071 = vmatpush1.bf16.xpose.msra.mxu0 0
      %3072 = vmatprep.subr.bf16.mxu0 0
      %3073 = vmatpush1.bf16.xpose.msra.mxu0 0
      %3074 = vmatprep.subr.bf16.mxu0 0
      %3075 = vmatpush1.bf16.xpose.msra.mxu0 0
      %3076 = vmatprep.subr.bf16.mxu0 0
      %3077 = vmatpush1.bf16.xpose.msra.mxu0 0
      %3078 = vmatprep.mubr.bf16.mxu0 0
      %3079 = vmatmul.mubr.bf16.gmra.mrb[0].mxu0 %v3041
      %v3080 = vpop.f32.mrb[0].mxu0
      %v3081 = vadd.f32 0.0, %v3080
      %v3082 = vpop.f32.mrb[0].mxu0
      %v3083 = vpop.f32.mrb[0].mxu0
      %v3084 = vpop.f32.mrb[0].mxu0
      %3085 = vdwg.mxu0
      %v3086 = vsel %vm1799, %v3081, -inf
      %3087 = vmax.xlane.f32.xlu0 %v3086
      %v3088 = vpop.xlane.xlu0 %3087
      %v3089 = vsub.f32 %v3081, %v3088
      %v3090 = vmul.f32 %v3089, 1.442695
      %v3091 = vpow.pop %v3090
      %v3092 = vsel %vm1799, %v3091, 0.0
      %3093 = vadd.xlane.f32.xlu0 %v3092
      %v3094 = vpop.xlane.xlu0 %3093
      %v3095 = vrcp.pop %v3094
      %v3096 = vmul.f32 %v3091, %v3095
      %v3097 = vpack.c.bf16 %v3096, %v3096
      %3098 = vrot.lane.b32.xlu0 %v2717, 48
      %v3099 = vpop.permute.xlu0 %3098
      %v3101 = vsel %vm1799, %v3097, 0
      %v3104 = vsel %vm1863, %v3099, 0
      %3106 = vmatprep.subr.bf16.mxu0 0
      %3107 = vmatpush1.bf16.msra.mxu0 %v3104
      %3108 = vmatprep.subr.bf16.mxu0 0
      %3109 = vmatpush1.bf16.msra.mxu0 0
      %3110 = vmatprep.subr.bf16.mxu0 0
      %3111 = vmatpush1.bf16.msra.mxu0 0
      %3112 = vmatprep.subr.bf16.mxu0 0
      %3113 = vmatpush1.bf16.msra.mxu0 0
      %3114 = vmatprep.subr.bf16.mxu0 0
      %3115 = vmatpush1.bf16.msra.mxu0 0
      %3116 = vmatprep.subr.bf16.mxu0 0
      %3117 = vmatpush1.bf16.msra.mxu0 0
      %3118 = vmatprep.subr.bf16.mxu0 0
      %3119 = vmatpush1.bf16.msra.mxu0 0
      %3120 = vmatprep.subr.bf16.mxu0 0
      %3121 = vmatpush1.bf16.msra.mxu0 0
      %3122 = vmatprep.subr.bf16.mxu0 0
      %3123 = vmatpush1.bf16.msra.mxu0 0
      %3124 = vmatprep.subr.bf16.mxu0 0
      %3125 = vmatpush1.bf16.msra.mxu0 0
      %3126 = vmatprep.subr.bf16.mxu0 0
      %3127 = vmatpush1.bf16.msra.mxu0 0
      %3128 = vmatprep.subr.bf16.mxu0 0
      %3129 = vmatpush1.bf16.msra.mxu0 0
      %3130 = vmatprep.subr.bf16.mxu0 0
      %3131 = vmatpush1.bf16.msra.mxu0 0
      %3132 = vmatprep.subr.bf16.mxu0 0
      %3133 = vmatpush1.bf16.msra.mxu0 0
      %3134 = vmatprep.subr.bf16.mxu0 0
      %3135 = vmatpush1.bf16.msra.mxu0 0
      %3136 = vmatprep.subr.bf16.mxu0 0
      %3137 = vmatpush1.bf16.msra.mxu0 0
      %3138 = vmatprep.mubr.bf16.mxu0 0
      %3139 = vmatmul.mubr.bf16.gmra.mrb[0].mxu0 %v3101
      %v3140 = vpop.f32.mrb[0].mxu0
      %v3141 = vadd.f32 0.0, %v3140
      %v3142 = vpop.f32.mrb[0].mxu0
      %v3143 = vpop.f32.mrb[0].mxu0
      %v3144 = vpop.f32.mrb[0].mxu0
      %3145 = vdwg.mxu0
      %v3146 = vpack.c.bf16 %v3141, %v3141
      %v3148 = vsel %vm1799, %v3146, 0
      %v3151 = vsel %vm1863, %v2721, 0
      %3153 = vmatprep.subr.bf16.mxu0 0
      %3154 = vmatpush1.bf16.msra.mxu0 %v3151
      %3155 = vmatprep.subr.bf16.mxu0 0
      %3156 = vmatpush1.bf16.msra.mxu0 0
      %3157 = vmatprep.subr.bf16.mxu0 0
      %3158 = vmatpush1.bf16.msra.mxu0 0
      %3159 = vmatprep.subr.bf16.mxu0 0
      %3160 = vmatpush1.bf16.msra.mxu0 0
      %3161 = vmatprep.subr.bf16.mxu0 0
      %3162 = vmatpush1.bf16.msra.mxu0 0
      %3163 = vmatprep.subr.bf16.mxu0 0
      %3164 = vmatpush1.bf16.msra.mxu0 0
      %3165 = vmatprep.subr.bf16.mxu0 0
      %3166 = vmatpush1.bf16.msra.mxu0 0
      %3167 = vmatprep.subr.bf16.mxu0 0
      %3168 = vmatpush1.bf16.msra.mxu0 0
      %3169 = vmatprep.subr.bf16.mxu0 0
      %3170 = vmatpush1.bf16.msra.mxu0 0
      %3171 = vmatprep.subr.bf16.mxu0 0
      %3172 = vmatpush1.bf16.msra.mxu0 0
      %3173 = vmatprep.subr.bf16.mxu0 0
      %3174 = vmatpush1.bf16.msra.mxu0 0
      %3175 = vmatprep.subr.bf16.mxu0 0
      %3176 = vmatpush1.bf16.msra.mxu0 0
      %3177 = vmatprep.subr.bf16.mxu0 0
      %3178 = vmatpush1.bf16.msra.mxu0 0
      %3179 = vmatprep.subr.bf16.mxu0 0
      %3180 = vmatpush1.bf16.msra.mxu0 0
      %3181 = vmatprep.subr.bf16.mxu0 0
      %3182 = vmatpush1.bf16.msra.mxu0 0
      %3183 = vmatprep.subr.bf16.mxu0 0
      %3184 = vmatpush1.bf16.msra.mxu0 0
      %3185 = vmatprep.mubr.bf16.mxu0 0
      %3186 = vmatmul.mubr.bf16.gmra.mrb[0].mxu0 %v3148
      %v3187 = vpop.f32.mrb[0].mxu0
      %v3188 = vadd.f32 0.0, %v3187
      %v3189 = vpop.f32.mrb[0].mxu0
      %v3190 = vpop.f32.mrb[0].mxu0
      %v3191 = vpop.f32.mrb[0].mxu0
      %3192 = vdwg.mxu0
      %v3193 = vadd.f32 %v3031, %v3188
      %3194 = vrot.lane.b32.xlu0 %v2717, 104
      %v3195 = vpop.permute.xlu0 %3194
      %3196 = vrot.lane.b32.xlu0 %v2717, 72
      %v3197 = vpop.permute.xlu0 %3196
      %v3199 = vsel %vm1799, %v3195, 0
      %v3202 = vsel %vm1799, %v3197, 0
      %3204 = vmatprep.subr.bf16.mxu0 0
      %3205 = vmatpush1.bf16.xpose.msra.mxu0 %v3202
      %3206 = vmatprep.subr.bf16.mxu0 0
      %3207 = vmatpush1.bf16.xpose.msra.mxu0 0
      %3208 = vmatprep.subr.bf16.mxu0 0
      %3209 = vmatpush1.bf16.xpose.msra.mxu0 0
      %3210 = vmatprep.subr.bf16.mxu0 0
      %3211 = vmatpush1.bf16.xpose.msra.mxu0 0
      %3212 = vmatprep.subr.bf16.mxu0 0
      %3213 = vmatpush1.bf16.xpose.msra.mxu0 0
      %3214 = vmatprep.subr.bf16.mxu0 0
      %3215 = vmatpush1.bf16.xpose.msra.mxu0 0
      %3216 = vmatprep.subr.bf16.mxu0 0
      %3217 = vmatpush1.bf16.xpose.msra.mxu0 0
      %3218 = vmatprep.subr.bf16.mxu0 0
      %3219 = vmatpush1.bf16.xpose.msra.mxu0 0
      %3220 = vmatprep.subr.bf16.mxu0 0
      %3221 = vmatpush1.bf16.xpose.msra.mxu0 0
      %3222 = vmatprep.subr.bf16.mxu0 0
      %3223 = vmatpush1.bf16.xpose.msra.mxu0 0
      %3224 = vmatprep.subr.bf16.mxu0 0
      %3225 = vmatpush1.bf16.xpose.msra.mxu0 0
      %3226 = vmatprep.subr.bf16.mxu0 0
      %3227 = vmatpush1.bf16.xpose.msra.mxu0 0
      %3228 = vmatprep.subr.bf16.mxu0 0
      %3229 = vmatpush1.bf16.xpose.msra.mxu0 0
      %3230 = vmatprep.subr.bf16.mxu0 0
      %3231 = vmatpush1.bf16.xpose.msra.mxu0 0
      %3232 = vmatprep.subr.bf16.mxu0 0
      %3233 = vmatpush1.bf16.xpose.msra.mxu0 0
      %3234 = vmatprep.subr.bf16.mxu0 0
      %3235 = vmatpush1.bf16.xpose.msra.mxu0 0
      %3236 = vmatprep.mubr.bf16.mxu0 0
      %3237 = vmatmul.mubr.bf16.gmra.mrb[0].mxu0 %v3199
      %v3238 = vpop.f32.mrb[0].mxu0
      %v3239 = vadd.f32 0.0, %v3238
      %v3240 = vpop.f32.mrb[0].mxu0
      %v3241 = vpop.f32.mrb[0].mxu0
      %v3242 = vpop.f32.mrb[0].mxu0
      %3243 = vdwg.mxu0
      %v3244 = vsel %vm1799, %v3239, -inf
      %3245 = vmax.xlane.f32.xlu0 %v3244
      %v3246 = vpop.xlane.xlu0 %3245
      %v3247 = vsub.f32 %v3239, %v3246
      %v3248 = vmul.f32 %v3247, 1.442695
      %v3249 = vpow.pop %v3248
      %v3250 = vsel %vm1799, %v3249, 0.0
      %3251 = vadd.xlane.f32.xlu0 %v3250
      %v3252 = vpop.xlane.xlu0 %3251
      %v3253 = vrcp.pop %v3252
      %v3254 = vmul.f32 %v3249, %v3253
      %v3255 = vpack.c.bf16 %v3254, %v3254
      %3256 = vrot.lane.b32.xlu0 %v2717, 40
      %v3257 = vpop.permute.xlu0 %3256
      %v3259 = vsel %vm1799, %v3255, 0
      %v3262 = vsel %vm1863, %v3257, 0
      %3264 = vmatprep.subr.bf16.mxu0 0
      %3265 = vmatpush1.bf16.msra.mxu0 %v3262
      %3266 = vmatprep.subr.bf16.mxu0 0
      %3267 = vmatpush1.bf16.msra.mxu0 0
      %3268 = vmatprep.subr.bf16.mxu0 0
      %3269 = vmatpush1.bf16.msra.mxu0 0
      %3270 = vmatprep.subr.bf16.mxu0 0
      %3271 = vmatpush1.bf16.msra.mxu0 0
      %3272 = vmatprep.subr.bf16.mxu0 0
      %3273 = vmatpush1.bf16.msra.mxu0 0
      %3274 = vmatprep.subr.bf16.mxu0 0
      %3275 = vmatpush1.bf16.msra.mxu0 0
      %3276 = vmatprep.subr.bf16.mxu0 0
      %3277 = vmatpush1.bf16.msra.mxu0 0
      %3278 = vmatprep.subr.bf16.mxu0 0
      %3279 = vmatpush1.bf16.msra.mxu0 0
      %3280 = vmatprep.subr.bf16.mxu0 0
      %3281 = vmatpush1.bf16.msra.mxu0 0
      %3282 = vmatprep.subr.bf16.mxu0 0
      %3283 = vmatpush1.bf16.msra.mxu0 0
      %3284 = vmatprep.subr.bf16.mxu0 0
      %3285 = vmatpush1.bf16.msra.mxu0 0
      %3286 = vmatprep.subr.bf16.mxu0 0
      %3287 = vmatpush1.bf16.msra.mxu0 0
      %3288 = vmatprep.subr.bf16.mxu0 0
      %3289 = vmatpush1.bf16.msra.mxu0 0
      %3290 = vmatprep.subr.bf16.mxu0 0
      %3291 = vmatpush1.bf16.msra.mxu0 0
      %3292 = vmatprep.subr.bf16.mxu0 0
      %3293 = vmatpush1.bf16.msra.mxu0 0
      %3294 = vmatprep.subr.bf16.mxu0 0
      %3295 = vmatpush1.bf16.msra.mxu0 0
      %3296 = vmatprep.mubr.bf16.mxu0 0
      %3297 = vmatmul.mubr.bf16.gmra.mrb[0].mxu0 %v3259
      %v3298 = vpop.f32.mrb[0].mxu0
      %v3299 = vadd.f32 0.0, %v3298
      %v3300 = vpop.f32.mrb[0].mxu0
      %v3301 = vpop.f32.mrb[0].mxu0
      %v3302 = vpop.f32.mrb[0].mxu0
      %3303 = vdwg.mxu0
      %v3304 = vpack.c.bf16 %v3299, %v3299
      %v3306 = vsel %vm1799, %v3304, 0
      %v3309 = vsel %vm1863, %v2722, 0
      %3311 = vmatprep.subr.bf16.mxu0 0
      %3312 = vmatpush1.bf16.msra.mxu0 %v3309
      %3313 = vmatprep.subr.bf16.mxu0 0
      %3314 = vmatpush1.bf16.msra.mxu0 0
      %3315 = vmatprep.subr.bf16.mxu0 0
      %3316 = vmatpush1.bf16.msra.mxu0 0
      %3317 = vmatprep.subr.bf16.mxu0 0
      %3318 = vmatpush1.bf16.msra.mxu0 0
      %3319 = vmatprep.subr.bf16.mxu0 0
      %3320 = vmatpush1.bf16.msra.mxu0 0
      %3321 = vmatprep.subr.bf16.mxu0 0
      %3322 = vmatpush1.bf16.msra.mxu0 0
      %3323 = vmatprep.subr.bf16.mxu0 0
      %3324 = vmatpush1.bf16.msra.mxu0 0
      %3325 = vmatprep.subr.bf16.mxu0 0
      %3326 = vmatpush1.bf16.msra.mxu0 0
      %3327 = vmatprep.subr.bf16.mxu0 0
      %3328 = vmatpush1.bf16.msra.mxu0 0
      %3329 = vmatprep.subr.bf16.mxu0 0
      %3330 = vmatpush1.bf16.msra.mxu0 0
      %3331 = vmatprep.subr.bf16.mxu0 0
      %3332 = vmatpush1.bf16.msra.mxu0 0
      %3333 = vmatprep.subr.bf16.mxu0 0
      %3334 = vmatpush1.bf16.msra.mxu0 0
      %3335 = vmatprep.subr.bf16.mxu0 0
      %3336 = vmatpush1.bf16.msra.mxu0 0
      %3337 = vmatprep.subr.bf16.mxu0 0
      %3338 = vmatpush1.bf16.msra.mxu0 0
      %3339 = vmatprep.subr.bf16.mxu0 0
      %3340 = vmatpush1.bf16.msra.mxu0 0
      %3341 = vmatprep.subr.bf16.mxu0 0
      %3342 = vmatpush1.bf16.msra.mxu0 0
      %3343 = vmatprep.mubr.bf16.mxu0 0
      %3344 = vmatmul.mubr.bf16.gmra.mrb[0].mxu0 %v3306
      %v3345 = vpop.f32.mrb[0].mxu0
      %v3346 = vadd.f32 0.0, %v3345
      %v3347 = vpop.f32.mrb[0].mxu0
      %v3348 = vpop.f32.mrb[0].mxu0
      %v3349 = vpop.f32.mrb[0].mxu0
      %3350 = vdwg.mxu0
      %v3351 = vadd.f32 %v3193, %v3346
      %s3352 = scalar_lea.vmem %s10, 1
      %v3353 = vld [vmem:[%s3352] sm:$0x1]
      %v3355 = vlaneseq
      %v3356 = vshrl.u32 %v3355, 7
      %v3357 = vsub.s32 0, %v3356
      %v3358 = vrot.slane %v3353, %v3357
      %v3360 = vadd.f32 %v3351, %v3358
      %s3361 = scalar_lea.vmem %s11, 1
      %v3362 = vld [vmem:[%s3361] sm:$0x1]
      %s3363 = scalar_lea.vmem %s12, 1
      %v3364 = vld [vmem:[%s3363] sm:$0x1]
      %v3365 = vadd.f32 %v2647, %v3360
      %v3366 = vsel %vm1617, %v3365, 0.0
      %3367 = vadd.xlane.f32.xlu0 %v3366
      %v3368 = vpop.xlane.xlu0 %3367
      %v3369 = vmul.f32 %v3368, %v2441
      %v3370 = vsub.f32 %v3365, %v3369
      %v3371 = vmul.f32 %v3370, %v3370
      %v3372 = vsel %vm1617, %v3371, 0.0
      %3373 = vadd.xlane.f32.xlu0 %v3372
      %v3374 = vpop.xlane.xlu0 %3373
      %v3375 = vmul.f32 %v3374, %v2441
      %v3376 = vadd.f32 %v3375, 1e-05
      %v3377 = vrsqrt.pop %v3376
      %v3378 = vmul.f32 %v3370, %v3377
      %v3380 = vlaneseq
      %v3381 = vshrl.u32 %v3380, 7
      %v3382 = vsub.s32 0, %v3381
      %v3383 = vrot.slane %v3362, %v3382
      %v3385 = vmul.f32 %v3378, %v3383
      %v3387 = vlaneseq
      %v3388 = vshrl.u32 %v3387, 7
      %v3389 = vsub.s32 0, %v3388
      %v3390 = vrot.slane %v3364, %v3389
      %v3392 = vadd.f32 %v3385, %v3390
      %v3393 = vpack.c.bf16 %v3392, %v3392
      %s3394 = scalar_lea.vmem %s13, 16
      %v3395 = vld [vmem:[%s3394] sm:$0xf]
      %v3396 = vld [vmem:[%s3394 + $0x4] sm:$0xf]
      %v3397 = vld [vmem:[%s3394 + $0x8] sm:$0xf]
      %v3398 = vld [vmem:[%s3394 + $0xc] sm:$0xf]
      %s3399 = scalar_lea.vmem %s14, 1
      %v3400 = vld [vmem:[%s3399] sm:$0x1]
      %v3402 = vlaneseq
      %v3403 = vshrl.u32 %v3402, 7
      %v3404 = vsub.s32 0, %v3403
      %v3405 = vrot.slane %v3400, %v3404
      %v3411 = vunpack.c.l.b16 %v3395
      %v3412 = vunpack.c.l.b16 %v3396
      %v3413 = vunpack.c.l.b16 %v3397
      %v3414 = vunpack.c.l.b16 %v3398
      %v3415 = vpack.c.b16 %v3412, %v3411
      %v3416 = vpack.c.b16 %v3414, %v3413
      %v3420 = vsel %vm1617, %v3393, 0
      %3422 = vmatprep.subr.bf16.mxu0 0
      %3423 = vmatpush1.bf16.msra.mxu0 %v3415
      %3424 = vmatprep.subr.bf16.mxu0 0
      %3425 = vmatpush1.bf16.msra.mxu0 %v3416
      %3426 = vmatprep.subr.bf16.mxu0 0
      %3427 = vmatpush1.bf16.msra.mxu0 0
      %3428 = vmatprep.subr.bf16.mxu0 0
      %3429 = vmatpush1.bf16.msra.mxu0 0
      %3430 = vmatprep.subr.bf16.mxu0 0
      %3431 = vmatpush1.bf16.msra.mxu0 0
      %3432 = vmatprep.subr.bf16.mxu0 0
      %3433 = vmatpush1.bf16.msra.mxu0 0
      %3434 = vmatprep.subr.bf16.mxu0 0
      %3435 = vmatpush1.bf16.msra.mxu0 0
      %3436 = vmatprep.subr.bf16.mxu0 0
      %3437 = vmatpush1.bf16.msra.mxu0 0
      %3438 = vmatprep.subr.bf16.mxu0 0
      %3439 = vmatpush1.bf16.msra.mxu0 0
      %3440 = vmatprep.subr.bf16.mxu0 0
      %3441 = vmatpush1.bf16.msra.mxu0 0
      %3442 = vmatprep.subr.bf16.mxu0 0
      %3443 = vmatpush1.bf16.msra.mxu0 0
      %3444 = vmatprep.subr.bf16.mxu0 0
      %3445 = vmatpush1.bf16.msra.mxu0 0
      %3446 = vmatprep.subr.bf16.mxu0 0
      %3447 = vmatpush1.bf16.msra.mxu0 0
      %3448 = vmatprep.subr.bf16.mxu0 0
      %3449 = vmatpush1.bf16.msra.mxu0 0
      %3450 = vmatprep.subr.bf16.mxu0 0
      %3451 = vmatpush1.bf16.msra.mxu0 0
      %3452 = vmatprep.subr.bf16.mxu0 0
      %3453 = vmatpush1.bf16.msra.mxu0 0
      %3454 = vmatprep.mubr.bf16.mxu0 0
      %3455 = vmatmul.mubr.bf16.gmra.mrb[0].mxu0 %v3420
      %v3456 = vpop.f32.mrb[0].mxu0
      %v3457 = vadd.f32 %v3405, %v3456
      %v3458 = vpop.f32.mrb[0].mxu0
      %v3459 = vpop.f32.mrb[0].mxu0
      %v3460 = vpop.f32.mrb[0].mxu0
      %3461 = vdwg.mxu0
      %v3462 = vmax.f32 %v3457, 0.0
      %v3463 = vpack.c.bf16 %v3462, %v3462
      %s3464 = scalar_lea.vmem %s15, 32
      %v3465 = vld [vmem:[%s3464] sm:$0xf]
      %v3466 = vld [vmem:[%s3464 + $0x4] sm:$0xf]
      %v3467 = vld [vmem:[%s3464 + $0x8] sm:$0xf]
      %v3468 = vld [vmem:[%s3464 + $0xc] sm:$0xf]
      %v3469 = vld [vmem:[%s3464 + $0x10] sm:$0xf]
      %v3470 = vld [vmem:[%s3464 + $0x14] sm:$0xf]
      %v3471 = vld [vmem:[%s3464 + $0x18] sm:$0xf]
      %v3472 = vld [vmem:[%s3464 + $0x1c] sm:$0xf]
      %s3473 = scalar_lea.vmem %s16, 1
      %v3474 = vld [vmem:[%s3473] sm:$0x1]
      %v3476 = vlaneseq
      %v3477 = vshrl.u32 %v3476, 7
      %v3478 = vsub.s32 0, %v3477
      %v3479 = vrot.slane %v3474, %v3478
      %v3489 = vunpack.c.l.b16 %v3465
      %v3490 = vunpack.c.l.b16 %v3466
      %v3491 = vunpack.c.l.b16 %v3467
      %v3492 = vunpack.c.l.b16 %v3468
      %v3493 = vunpack.c.l.b16 %v3469
      %v3494 = vunpack.c.l.b16 %v3470
      %v3495 = vunpack.c.l.b16 %v3471
      %v3496 = vunpack.c.l.b16 %v3472
      %v3497 = vpack.c.b16 %v3490, %v3489
      %v3498 = vpack.c.b16 %v3492, %v3491
      %v3499 = vpack.c.b16 %v3494, %v3493
      %v3500 = vpack.c.b16 %v3496, %v3495
      %v3506 = vsel %vm2574, %v3463, 0
      %3508 = vmatprep.subr.bf16.mxu0 0
      %3509 = vmatpush1.bf16.msra.mxu0 %v3497
      %3510 = vmatprep.subr.bf16.mxu0 0
      %3511 = vmatpush1.bf16.msra.mxu0 %v3498
      %3512 = vmatprep.subr.bf16.mxu0 0
      %3513 = vmatpush1.bf16.msra.mxu0 %v3499
      %3514 = vmatprep.subr.bf16.mxu0 0
      %3515 = vmatpush1.bf16.msra.mxu0 %v3500
      %3516 = vmatprep.subr.bf16.mxu0 0
      %3517 = vmatpush1.bf16.msra.mxu0 0
      %3518 = vmatprep.subr.bf16.mxu0 0
      %3519 = vmatpush1.bf16.msra.mxu0 0
      %3520 = vmatprep.subr.bf16.mxu0 0
      %3521 = vmatpush1.bf16.msra.mxu0 0
      %3522 = vmatprep.subr.bf16.mxu0 0
      %3523 = vmatpush1.bf16.msra.mxu0 0
      %3524 = vmatprep.subr.bf16.mxu0 0
      %3525 = vmatpush1.bf16.msra.mxu0 0
      %3526 = vmatprep.subr.bf16.mxu0 0
      %3527 = vmatpush1.bf16.msra.mxu0 0
      %3528 = vmatprep.subr.bf16.mxu0 0
      %3529 = vmatpush1.bf16.msra.mxu0 0
      %3530 = vmatprep.subr.bf16.mxu0 0
      %3531 = vmatpush1.bf16.msra.mxu0 0
      %3532 = vmatprep.subr.bf16.mxu0 0
      %3533 = vmatpush1.bf16.msra.mxu0 0
      %3534 = vmatprep.subr.bf16.mxu0 0
      %3535 = vmatpush1.bf16.msra.mxu0 0
      %3536 = vmatprep.subr.bf16.mxu0 0
      %3537 = vmatpush1.bf16.msra.mxu0 0
      %3538 = vmatprep.subr.bf16.mxu0 0
      %3539 = vmatpush1.bf16.msra.mxu0 0
      %3540 = vmatprep.mubr.bf16.mxu0 0
      %3541 = vmatmul.mubr.bf16.gmra.mrb[0].mxu0 %v3506
      %v3542 = vpop.f32.mrb[0].mxu0
      %v3543 = vadd.f32 %v3479, %v3542
      %v3544 = vpop.f32.mrb[0].mxu0
      %v3545 = vpop.f32.mrb[0].mxu0
      %v3546 = vpop.f32.mrb[0].mxu0
      %3547 = vdwg.mxu0
      %s3548 = scalar_lea.vmem %s17, 1
      %v3549 = vld [vmem:[%s3548] sm:$0x1]
      %s3550 = scalar_lea.vmem %s18, 1
      %v3551 = vld [vmem:[%s3550] sm:$0x1]
      %v3552 = vadd.f32 %v3392, %v3543
      %v3553 = vsel %vm1617, %v3552, 0.0
      %3554 = vadd.xlane.f32.xlu0 %v3553
      %v3555 = vpop.xlane.xlu0 %3554
      %v3556 = vmul.f32 %v3555, %v2441
      %v3557 = vsub.f32 %v3552, %v3556
      %v3558 = vmul.f32 %v3557, %v3557
      %v3559 = vsel %vm1617, %v3558, 0.0
      %3560 = vadd.xlane.f32.xlu0 %v3559
      %v3561 = vpop.xlane.xlu0 %3560
      %v3562 = vmul.f32 %v3561, %v2441
      %v3563 = vadd.f32 %v3562, 1e-05
      %v3564 = vrsqrt.pop %v3563
      %v3565 = vmul.f32 %v3557, %v3564
      %v3567 = vlaneseq
      %v3568 = vshrl.u32 %v3567, 7
      %v3569 = vsub.s32 0, %v3568
      %v3570 = vrot.slane %v3549, %v3569
      %v3572 = vmul.f32 %v3565, %v3570
      %v3574 = vlaneseq
      %v3575 = vshrl.u32 %v3574, 7
      %v3576 = vsub.s32 0, %v3575
      %v3577 = vrot.slane %v3551, %v3576
      %v3579 = vadd.f32 %v3572, %v3577
      %v3580 = vpack.c.bf16 %v3579, %v3579
      %v3581 = vld [vmem:[%s19] sm:$0xf]
      %v3582 = vld [vmem:[%s19 + $0x4] sm:$0xf]
      %v3583 = vld [vmem:[%s19 + $0x8] sm:$0xf]
      %v3584 = vld [vmem:[%s19 + $0xc] sm:$0xf]
      %v3585 = vld [vmem:[%s20] sm:$0x1]
      %v3587 = vlaneseq
      %v3588 = vshrl.u32 %v3587, 7
      %v3589 = vsub.s32 0, %v3588
      %v3590 = vrot.slane %v3585, %v3589
      %v3596 = vunpack.c.l.b16 %v3581
      %v3597 = vunpack.c.l.b16 %v3582
      %v3598 = vunpack.c.l.b16 %v3583
      %v3599 = vunpack.c.l.b16 %v3584
      %v3600 = vpack.c.b16 %v3597, %v3596
      %v3601 = vpack.c.b16 %v3599, %v3598
      %v3605 = vsel %vm1617, %v3580, 0
      %3607 = vmatprep.subr.bf16.mxu0 0
      %3608 = vmatpush1.bf16.msra.mxu0 %v3600
      %3609 = vmatprep.subr.bf16.mxu0 0
      %3610 = vmatpush1.bf16.msra.mxu0 %v3601
      %3611 = vmatprep.subr.bf16.mxu0 0
      %3612 = vmatpush1.bf16.msra.mxu0 0
      %3613 = vmatprep.subr.bf16.mxu0 0
      %3614 = vmatpush1.bf16.msra.mxu0 0
      %3615 = vmatprep.subr.bf16.mxu0 0
      %3616 = vmatpush1.bf16.msra.mxu0 0
      %3617 = vmatprep.subr.bf16.mxu0 0
      %3618 = vmatpush1.bf16.msra.mxu0 0
      %3619 = vmatprep.subr.bf16.mxu0 0
      %3620 = vmatpush1.bf16.msra.mxu0 0
      %3621 = vmatprep.subr.bf16.mxu0 0
      %3622 = vmatpush1.bf16.msra.mxu0 0
      %3623 = vmatprep.subr.bf16.mxu0 0
      %3624 = vmatpush1.bf16.msra.mxu0 0
      %3625 = vmatprep.subr.bf16.mxu0 0
      %3626 = vmatpush1.bf16.msra.mxu0 0
      %3627 = vmatprep.subr.bf16.mxu0 0
      %3628 = vmatpush1.bf16.msra.mxu0 0
      %3629 = vmatprep.subr.bf16.mxu0 0
      %3630 = vmatpush1.bf16.msra.mxu0 0
      %3631 = vmatprep.subr.bf16.mxu0 0
      %3632 = vmatpush1.bf16.msra.mxu0 0
      %3633 = vmatprep.subr.bf16.mxu0 0
      %3634 = vmatpush1.bf16.msra.mxu0 0
      %3635 = vmatprep.subr.bf16.mxu0 0
      %3636 = vmatpush1.bf16.msra.mxu0 0
      %3637 = vmatprep.subr.bf16.mxu0 0
      %3638 = vmatpush1.bf16.msra.mxu0 0
      %3639 = vmatprep.mubr.bf16.mxu0 0
      %3640 = vmatmul.mubr.bf16.gmra.mrb[0].mxu0 %v3605
      %v3641 = vpop.f32.mrb[0].mxu0
      %v3642 = vadd.f32 %v3590, %v3641
      %v3643 = vpop.f32.mrb[0].mxu0
      %v3644 = vpop.f32.mrb[0].mxu0
      %v3645 = vpop.f32.mrb[0].mxu0
      %3646 = vdwg.mxu0
      %3647 = vmax.xlane.f32.xlu0 %v3642
      %v3648 = vpop.xlane.xlu0 %3647
      %v3649 = vsub.f32 %v3642, %v3648
      %v3650 = vmul.f32 %v3649, 1.442695
      %v3651 = vpow.pop %v3650
      %3652 = vadd.xlane.f32.xlu0 %v3651
      %v3653 = vpop.xlane.xlu0 %3652
      %v3654 = vlog2.pop %v3653
      %v3655 = vmul.f32 %v3654, 0.6931472
      %v3656 = vsub.f32 %v3649, %v3655
      %3657 = vst [vmem:[%s671] sm:$0xff] %v3656
      %p3658 = scmp.lt.s32.totalorder %s32, 1
      %s3659 = scalar_select %p3658, %s32, 1
      %s3660 = smul.addr %s3659, 8
      %s3661 = scalar_lea.vmem %s21, %s3660
      // Predicated region
      $region105: #{cnn_transformer_forward.1} parent=103 // pred_check
        %p3662 = pneg %p501
      $region106: #{cnn_transformer_forward.1} parent=103 // pred_check_branch
        %3664 = sbr.rel (%p3662) target = $region108
      $region107: #{cnn_transformer_forward.1} parent=103 // pred_region
        _
      $region108: #{cnn_transformer_forward.1} parent=103 // pred_fallthru
        _
    $region104: #{cnn_transformer_forward.1} parent=5 // pred_fallthru
      _
    %p3665 = scmp.le.s32.totalorder 2, %s27
    // Predicated region
    $region109: #{cnn_transformer_forward.1} parent=5 // pred_check
      %p3666 = pneg %p3665
    $region110: #{cnn_transformer_forward.1} parent=5 // pred_check_branch
      %3668 = sbr.rel (%p3666) target = $region112
    $region111: #{cnn_transformer_forward.1} parent=5 // pred_region
      %s3669 = ssub.s32 %s27, 2
      // Predicated region
      $region113: #{cnn_transformer_forward.1} parent=111 // pred_check
        %p3670 = pneg %p507
      $region114: #{cnn_transformer_forward.1} parent=111 // pred_check_branch
        %3672 = sbr.rel (%p3670) target = $region116
      $region115: #{cnn_transformer_forward.1} parent=111 // pred_region
        %p3673 = scmp.lt.s32.totalorder %s33, 1
        %s3674 = scalar_select %p3673, %s33, 1
        %s3675 = smul.addr %s3674, 8
        %s3676 = scalar_lea.vmem %s21, %s3675
      $region116: #{cnn_transformer_forward.1} parent=111 // pred_fallthru
        _
    $region112: #{cnn_transformer_forward.1} parent=5 // pred_fallthru
      _
  $region6: #{cnn_transformer_forward.1} parent=0 // loop_footer
    %s31 = sadd.s32 1, %s27
  $region7: #{cnn_transformer_forward.1} parent=0 // loop_footer_branch
    %26 = sbr.rel target = $region3
  $region8: #{cnn_transformer_forward.1} parent=0 // loop_exit
    _

</llo_original>
